<compile_context>
chip_gen: v5e
topology: v5e:2x2
jax: 0.10.0
libtpu: 0.0.40
codegen_flags: <defaults>
</compile_context>

<pallas_src>
from functools import partial

import jax
import jax.numpy as jnp
import numpy as np
from jax.experimental import pallas as pl
from jax.experimental.pallas import tpu as pltpu

INPUT = 4
HIDDEN = 64
LAYERS = 2
FC1 = 1024
FC2 = 256


# ----------------------------------------------------------------------------
# Fused Pallas kernel: both LSTM layers (both directions) + MLP head.
# ----------------------------------------------------------------------------
def bilstm_fused_kernel(
    T, B,                                         # static (bound via partial)
    x2_ref,                                       # (T*B, 2*INPUT): [x[t] | x[T-1-t]]
    w0in_ref, whh0_ref, b0_ref,                   # layer 0, fused fw/bw (permuted gates)
    wih1f_ref, whh1f_ref, b1f_ref,                # layer 1 forward
    wih1b_ref, b1b_ref,                           # layer 1 backward (1 step only)
    fc1w_hbm, fc1b_ref,                           # fc1 (weight stays in HBM, manual DMA)
    fc2w_hbm, fc2b_ref,                           # fc2 (weight stays in HBM, manual DMA)
    ow_ref, ob_ref,                               # out layer (row vector + bias)
    out_ref,                                      # (B, 1)
    fc1w_vmem, fc2w_vmem, dma_sem,                # scratch
):
    H = HIDDEN
    H2 = 2 * H
    f32 = jnp.float32

    # Kick off the MLP-head weight DMAs; they complete behind the recurrences.
    cp_fc1 = pltpu.make_async_copy(fc1w_hbm, fc1w_vmem, dma_sem.at[0])
    cp_fc2 = pltpu.make_async_copy(fc2w_hbm, fc2w_vmem, dma_sem.at[1])
    cp_fc1.start()
    cp_fc2.start()

    def mm(a, b):
        return jnp.dot(a, b, preferred_element_type=f32)

    def cell(gates, c_prev, hw):
        # gate layout along lanes: [i | f | g | o], each `hw` wide
        i = jax.nn.sigmoid(gates[:, 0 * hw:1 * hw])
        f = jax.nn.sigmoid(gates[:, 1 * hw:2 * hw])
        g = jnp.tanh(gates[:, 2 * hw:3 * hw])
        o = jax.nn.sigmoid(gates[:, 3 * hw:4 * hw])
        c_new = f * c_prev + i * g
        h_new = o * jnp.tanh(c_new)
        return h_new, c_new

    # ---- layer 0: batched input projection (hoisted out of the serial chain) --
    xg0 = mm(x2_ref[...], w0in_ref[...]) + b0_ref[...]       # (T*B, 8H)
    whh0 = whh0_ref[...]                                     # (2H, 8H) block-diagonal

    h = jnp.zeros((B, H2), f32)                              # fused [hf | hb]
    c = jnp.zeros((B, H2), f32)
    h_steps = [None] * T
    for t in range(T):
        g = xg0[t * B:(t + 1) * B, :]
        if t > 0:                                            # first step: h_prev == 0
            g = g + mm(h, whh0)                              # one matmul for both dirs
        h, c = cell(g, c, H2)
        h_steps[t] = h

    # Re-pair layer-0 outputs in original time order: seq[s] = [hf(s) | hb(s)].
    seq = [jnp.concatenate([h_steps[s][:, :H], h_steps[T - 1 - s][:, H:]], axis=-1)
           for s in range(T)]

    # ---- layer 1 forward: batched input projection; serial part is h@whh only --
    big = jnp.concatenate(seq, axis=0)                       # (T*B, 2H)
    xg1 = mm(big, wih1f_ref[...]) + b1f_ref[...]             # (T*B, 4H)
    whh1f = whh1f_ref[...]
    h1 = jnp.zeros((B, H), f32)
    c1 = jnp.zeros((B, H), f32)
    for t in range(T):
        g = xg1[t * B:(t + 1) * B, :]
        if t > 0:
            g = g + mm(h1, whh1f)
        h1, c1 = cell(g, c1, H)

    # ---- layer 1 backward: only its first step (original time T-1) reaches the
    #      head; it starts from the zero state so the h @ whh term vanishes. -----
    gb = mm(seq[T - 1], wih1b_ref[...]) + b1b_ref[...]
    h1b, _ = cell(gb, jnp.zeros((B, H), f32), H)

    # ---- MLP head (weights arrive via the overlapped DMAs) ---------------------
    x1 = jnp.maximum(jnp.concatenate([h1, h1b], axis=-1), 0.0)   # relu(h[:, -1, :])
    cp_fc1.wait()
    x2 = jnp.maximum(mm(x1, fc1w_vmem[...]) + fc1b_ref[...], 0.0)
    cp_fc2.wait()
    x3 = jnp.maximum(mm(x2, fc2w_vmem[...]) + fc2b_ref[...], 0.0)
    # out layer: N=1 matmul replaced by VPU multiply + lane reduction
    out_ref[...] = jnp.sum(x3 * ow_ref[...], axis=-1, keepdims=True) + ob_ref[...]


# ----------------------------------------------------------------------------
# One-time weight packing (NOT in the per-call jitted path)
# ----------------------------------------------------------------------------
def _fuse_dir_weights(wf, wb):
    """Build block matrix mapping [in_f | in_b] -> fused, gate-permuted columns
    [i_f i_b | f_f f_b | g_f g_b | o_f o_b]."""
    H = wf.shape[1] // 4
    df, db = wf.shape[0], wb.shape[0]
    zf = jnp.zeros((df, H), jnp.float32)
    zb = jnp.zeros((db, H), jnp.float32)
    blocks = []
    for g in range(4):
        top = jnp.concatenate([wf[:, g * H:(g + 1) * H], zf], axis=1)
        bot = jnp.concatenate([zb, wb[:, g * H:(g + 1) * H]], axis=1)
        blocks.append(jnp.concatenate([top, bot], axis=0))
    return jnp.concatenate(blocks, axis=1)


def _fuse_dir_bias(bf, bb):
    H = bf.shape[1] // 4
    parts = []
    for g in range(4):
        parts.append(bf[:, g * H:(g + 1) * H])
        parts.append(bb[:, g * H:(g + 1) * H])
    return jnp.concatenate(parts, axis=1)


def pack_params(params):
    wih0f, whh0f, b0f = params["lstm0_fw"]
    wih0b, whh0b, b0b = params["lstm0_bw"]
    wih1f, whh1f, b1f = params["lstm1_fw"]
    wih1b, _whh1b, b1b = params["lstm1_bw"]     # whh1b unused: bw layer-1 runs one step from zero state
    w1, bb1, w2, bb2, w3, bb3 = params["mlp"]

    return dict(
        w0in=_fuse_dir_weights(wih0f, wih0b),   # (2*INPUT, 8H)
        whh0=_fuse_dir_weights(whh0f, whh0b),   # (2H, 8H) block-diagonal per gate
        b0=_fuse_dir_bias(b0f, b0b),            # (1, 8H)
        wih1f=wih1f, whh1f=whh1f, b1f=b1f,
        wih1b=wih1b, b1b=b1b,
        fc1w=w1, fc1b=bb1,
        fc2w=w2, fc2b=bb2,
        ow_row=w3.reshape(1, FC2), ob=bb3,
    )


# ----------------------------------------------------------------------------
# Wrapper
# ----------------------------------------------------------------------------
@jax.jit
def bilstm_forward(x, packed):
    """x: (B, T, INPUT) float32 -> (B, 1) float32."""
    B, T, I = x.shape
    x_tbd = jnp.transpose(x, (1, 0, 2))                          # (T, B, I) — tiny relayout
    x2in = jnp.concatenate([x_tbd, x_tbd[::-1]], axis=-1)        # [x[t] | x[T-1-t]]
    x2in = x2in.reshape(T * B, 2 * I)

    args = (
        x2in,
        packed["w0in"], packed["whh0"], packed["b0"],
        packed["wih1f"], packed["whh1f"], packed["b1f"],
        packed["wih1b"], packed["b1b"],
        packed["fc1w"], packed["fc1b"],
        packed["fc2w"], packed["fc2b"],
        packed["ow_row"], packed["ob"],
    )

    vmem = pl.BlockSpec(memory_space=pltpu.MemorySpace.VMEM)
    hbm = pl.BlockSpec(memory_space=pl.ANY)
    in_specs = [vmem] * 9 + [hbm, vmem, hbm, vmem, vmem, vmem]

    return pl.pallas_call(
        partial(bilstm_fused_kernel, T, B),
        out_shape=jax.ShapeDtypeStruct((B, 1), jnp.float32),
        in_specs=in_specs,
        out_specs=vmem,
        scratch_shapes=[
            pltpu.VMEM((2 * HIDDEN, FC1), jnp.float32),
            pltpu.VMEM((FC1, FC2), jnp.float32),
            pltpu.SemaphoreType.DMA((2,)),
        ],
    )(*args)


# ----------------------------------------------------------------------------
# Deterministic parameter init (shapes match the PyTorch module)
# ----------------------------------------------------------------------------
def init_params(key):
    params = {}
    std = 1.0 / np.sqrt(HIDDEN)
    keys = jax.random.split(key, 32)
    k = iter(keys)

    for layer in range(LAYERS):
        d_in = INPUT if layer == 0 else 2 * HIDDEN
        for direction in ("fw", "bw"):
            wih = jax.random.uniform(next(k), (d_in, 4 * HIDDEN), jnp.float32, -std, std)
            whh = jax.random.uniform(next(k), (HIDDEN, 4 * HIDDEN), jnp.float32, -std, std)
            b_ih = jax.random.uniform(next(k), (1, 4 * HIDDEN), jnp.float32, -std, std)
            b_hh = jax.random.uniform(next(k), (1, 4 * HIDDEN), jnp.float32, -std, std)
            params[f"lstm{layer}_{direction}"] = (wih, whh, b_ih + b_hh)

    def linear(kk, fan_in, fan_out):
        s = 1.0 / np.sqrt(fan_in)
        k1, k2 = jax.random.split(kk)
        w = jax.random.uniform(k1, (fan_in, fan_out), jnp.float32, -s, s)
        b = jax.random.uniform(k2, (1, fan_out), jnp.float32, -s, s)
        return w, b

    w1, b1 = linear(next(k), 2 * HIDDEN, FC1)
    w2, b2 = linear(next(k), FC1, FC2)
    w3, b3 = linear(next(k), FC2, 1)
    params["mlp"] = (w1, b1, w2, b2, w3, b3)
    return params


# ----------------------------------------------------------------------------
# Pure-JAX reference (full bidirectional LSTM, for a correctness check)
# ----------------------------------------------------------------------------
def _ref_lstm_layer(x, wih, whh, b):
    B, T, _ = x.shape
    H = whh.shape[0]
    h = jnp.zeros((B, H), jnp.float32)
    c = jnp.zeros((B, H), jnp.float32)
    outs = []
    for t in range(T):
        g = x[:, t, :] @ wih + h @ whh + b
        i = jax.nn.sigmoid(g[:, :H])
        f = jax.nn.sigmoid(g[:, H:2 * H])
        gg = jnp.tanh(g[:, 2 * H:3 * H])
        o = jax.nn.sigmoid(g[:, 3 * H:])
        c = f * c + i * gg
        h = o * jnp.tanh(c)
        outs.append(h)
    return jnp.stack(outs, axis=1)


def _ref_forward(x, params):
    seq = x
    for layer in range(LAYERS):
        fw = _ref_lstm_layer(seq, *params[f"lstm{layer}_fw"])
        bw = _ref_lstm_layer(seq[:, ::-1, :], *params[f"lstm{layer}_bw"])[:, ::-1, :]
        seq = jnp.concatenate([fw, bw], axis=-1)
    x1 = jnp.maximum(seq[:, -1, :], 0.0)
    w1, b1, w2, b2, w3, b3 = params["mlp"]
    x2 = jnp.maximum(x1 @ w1 + b1, 0.0)
    x3 = jnp.maximum(x2 @ w2 + b2, 0.0)
    return x3 @ w3 + b3


# ----------------------------------------------------------------------------
if __name__ == "__main__":
    key = jax.random.PRNGKey(0)
    k_param, k_x = jax.random.split(key)

    params = init_params(k_param)
    packed = pack_params(params)          # one-time packing, outside the call path

    B, T = 2, 8
    x = jax.random.normal(k_x, (B, T, INPUT), jnp.float32)

    out = jax.block_until_ready(bilstm_forward(x, packed))
    assert out.shape == (B, 1)

    ref = _ref_forward(x, params)
    np.testing.assert_allclose(np.asarray(out), np.asarray(ref), rtol=1e-4, atol=1e-4)

    print("KERNEL_OK")
</pallas_src>

<mosaic_0001>
module attributes {stable_mosaic.version = 11 : i64} {
  func.func @bilstm_fused_kernel(%arg0: memref<16x8xf32, #tpu.memory_space<vmem>>, %arg1: memref<8x512xf32, #tpu.memory_space<vmem>>, %arg2: memref<128x512xf32, #tpu.memory_space<vmem>>, %arg3: memref<1x512xf32, #tpu.memory_space<vmem>>, %arg4: memref<128x256xf32, #tpu.memory_space<vmem>>, %arg5: memref<64x256xf32, #tpu.memory_space<vmem>>, %arg6: memref<1x256xf32, #tpu.memory_space<vmem>>, %arg7: memref<128x256xf32, #tpu.memory_space<vmem>>, %arg8: memref<1x256xf32, #tpu.memory_space<vmem>>, %arg9: memref<128x1024xf32, #tpu.memory_space<any>>, %arg10: memref<1x1024xf32, #tpu.memory_space<vmem>>, %arg11: memref<1024x256xf32, #tpu.memory_space<any>>, %arg12: memref<1x256xf32, #tpu.memory_space<vmem>>, %arg13: memref<1x256xf32, #tpu.memory_space<vmem>>, %arg14: memref<1x1xf32, #tpu.memory_space<vmem>>, %arg15: memref<2x1xf32, #tpu.memory_space<vmem>>, %arg16: memref<128x1024xf32, #tpu.memory_space<vmem>>, %arg17: memref<1024x256xf32, #tpu.memory_space<vmem>>, %arg18: memref<2x!tpu.dma_semaphore, #tpu.memory_space<semaphore_mem>>) attributes {dimension_semantics = [], scalar_prefetch = 0 : i64, scratch_operands = 3 : i64, tpu.core_type = #tpu.core_type<tc>} {
    %c0_i32 = arith.constant 0 : i32
    %0 = tpu.memref_slice %arg18[%c0_i32] : memref<2x!tpu.dma_semaphore, #tpu.memory_space<semaphore_mem>> -> memref<1x!tpu.dma_semaphore, #tpu.memory_space<semaphore_mem>>
    %1 = tpu.memref_squeeze %0 : memref<1x!tpu.dma_semaphore, #tpu.memory_space<semaphore_mem>> -> memref<!tpu.dma_semaphore, #tpu.memory_space<semaphore_mem>>
    tpu.enqueue_dma source(%arg9 : memref<128x1024xf32, #tpu.memory_space<any>>) target(%arg16 : memref<128x1024xf32, #tpu.memory_space<vmem>>) target_semaphore(%1 : memref<!tpu.dma_semaphore, #tpu.memory_space<semaphore_mem>>)
    %c1_i32 = arith.constant 1 : i32
    %2 = tpu.memref_slice %arg18[%c1_i32] : memref<2x!tpu.dma_semaphore, #tpu.memory_space<semaphore_mem>> -> memref<1x!tpu.dma_semaphore, #tpu.memory_space<semaphore_mem>>
    %3 = tpu.memref_squeeze %2 : memref<1x!tpu.dma_semaphore, #tpu.memory_space<semaphore_mem>> -> memref<!tpu.dma_semaphore, #tpu.memory_space<semaphore_mem>>
    tpu.enqueue_dma source(%arg11 : memref<1024x256xf32, #tpu.memory_space<any>>) target(%arg17 : memref<1024x256xf32, #tpu.memory_space<vmem>>) target_semaphore(%3 : memref<!tpu.dma_semaphore, #tpu.memory_space<semaphore_mem>>)
    %c0 = arith.constant 0 : index
    %c0_0 = arith.constant 0 : index
    %4 = vector.load %arg0[%c0, %c0_0] : memref<16x8xf32, #tpu.memory_space<vmem>>, vector<16x8xf32>
    %c0_1 = arith.constant 0 : index
    %c0_2 = arith.constant 0 : index
    %5 = vector.load %arg1[%c0_1, %c0_2] : memref<8x512xf32, #tpu.memory_space<vmem>>, vector<8x512xf32>
    %cst = arith.constant dense<0.000000e+00> : vector<16x512xf32>
    %6 = tpu.matmul %4, %5, %cst {dimension_numbers = #tpu.dot_dimension_numbers<[1], [0], [0], [1], [0, 0, 1, 1], [], []>} : vector<16x8xf32>, vector<8x512xf32>, vector<16x512xf32> -> vector<16x512xf32>
    %c0_3 = arith.constant 0 : index
    %c0_4 = arith.constant 0 : index
    %7 = vector.load %arg3[%c0_3, %c0_4] : memref<1x512xf32, #tpu.memory_space<vmem>>, vector<1x512xf32>
    %8 = vector.broadcast %7 : vector<1x512xf32> to vector<16x512xf32>
    %9 = arith.addf %6, %8 : vector<16x512xf32>
    %c0_5 = arith.constant 0 : index
    %c0_6 = arith.constant 0 : index
    %10 = vector.load %arg2[%c0_5, %c0_6] : memref<128x512xf32, #tpu.memory_space<vmem>>, vector<128x512xf32>
    %cst_7 = arith.constant 0.000000e+00 : f32
    %11 = vector.broadcast %cst_7 : f32 to vector<2x128xf32>
    %12 = vector.extract_strided_slice %9 {offsets = [0, 0], sizes = [2, 512], strides = [1, 1]} : vector<16x512xf32> to vector<2x512xf32>
    %13 = vector.extract_strided_slice %12 {offsets = [0, 0], sizes = [2, 128], strides = [1, 1]} : vector<2x512xf32> to vector<2x128xf32>
    %14 = arith.negf %13 : vector<2x128xf32>
    %15 = math.exp %14 : vector<2x128xf32>
    %cst_8 = arith.constant 1.000000e+00 : f32
    %16 = vector.broadcast %cst_8 : f32 to vector<2x128xf32>
    %17 = arith.addf %16, %15 : vector<2x128xf32>
    %18 = arith.divf %16, %17 : vector<2x128xf32>
    %19 = vector.extract_strided_slice %12 {offsets = [0, 128], sizes = [2, 128], strides = [1, 1]} : vector<2x512xf32> to vector<2x128xf32>
    %20 = arith.negf %19 : vector<2x128xf32>
    %21 = math.exp %20 : vector<2x128xf32>
    %cst_9 = arith.constant 1.000000e+00 : f32
    %22 = vector.broadcast %cst_9 : f32 to vector<2x128xf32>
    %23 = arith.addf %22, %21 : vector<2x128xf32>
    %24 = arith.divf %22, %23 : vector<2x128xf32>
    %25 = vector.extract_strided_slice %12 {offsets = [0, 256], sizes = [2, 128], strides = [1, 1]} : vector<2x512xf32> to vector<2x128xf32>
    %26 = math.tanh %25 : vector<2x128xf32>
    %27 = vector.extract_strided_slice %12 {offsets = [0, 384], sizes = [2, 128], strides = [1, 1]} : vector<2x512xf32> to vector<2x128xf32>
    %28 = arith.negf %27 : vector<2x128xf32>
    %29 = math.exp %28 : vector<2x128xf32>
    %cst_10 = arith.constant 1.000000e+00 : f32
    %30 = vector.broadcast %cst_10 : f32 to vector<2x128xf32>
    %31 = arith.addf %30, %29 : vector<2x128xf32>
    %32 = arith.divf %30, %31 : vector<2x128xf32>
    %33 = arith.mulf %24, %11 : vector<2x128xf32>
    %34 = arith.mulf %18, %26 : vector<2x128xf32>
    %35 = arith.addf %33, %34 : vector<2x128xf32>
    %36 = math.tanh %35 : vector<2x128xf32>
    %37 = arith.mulf %32, %36 : vector<2x128xf32>
    %38 = vector.extract_strided_slice %9 {offsets = [2, 0], sizes = [2, 512], strides = [1, 1]} : vector<16x512xf32> to vector<2x512xf32>
    %cst_11 = arith.constant dense<0.000000e+00> : vector<2x512xf32>
    %39 = tpu.matmul %37, %10, %cst_11 {dimension_numbers = #tpu.dot_dimension_numbers<[1], [0], [0], [1], [0, 0, 1, 1], [], []>} : vector<2x128xf32>, vector<128x512xf32>, vector<2x512xf32> -> vector<2x512xf32>
    %40 = arith.addf %38, %39 : vector<2x512xf32>
    %41 = vector.extract_strided_slice %40 {offsets = [0, 0], sizes = [2, 128], strides = [1, 1]} : vector<2x512xf32> to vector<2x128xf32>
    %42 = arith.negf %41 : vector<2x128xf32>
    %43 = math.exp %42 : vector<2x128xf32>
    %cst_12 = arith.constant 1.000000e+00 : f32
    %44 = vector.broadcast %cst_12 : f32 to vector<2x128xf32>
    %45 = arith.addf %44, %43 : vector<2x128xf32>
    %46 = arith.divf %44, %45 : vector<2x128xf32>
    %47 = vector.extract_strided_slice %40 {offsets = [0, 128], sizes = [2, 128], strides = [1, 1]} : vector<2x512xf32> to vector<2x128xf32>
    %48 = arith.negf %47 : vector<2x128xf32>
    %49 = math.exp %48 : vector<2x128xf32>
    %cst_13 = arith.constant 1.000000e+00 : f32
    %50 = vector.broadcast %cst_13 : f32 to vector<2x128xf32>
    %51 = arith.addf %50, %49 : vector<2x128xf32>
    %52 = arith.divf %50, %51 : vector<2x128xf32>
    %53 = vector.extract_strided_slice %40 {offsets = [0, 256], sizes = [2, 128], strides = [1, 1]} : vector<2x512xf32> to vector<2x128xf32>
    %54 = math.tanh %53 : vector<2x128xf32>
    %55 = vector.extract_strided_slice %40 {offsets = [0, 384], sizes = [2, 128], strides = [1, 1]} : vector<2x512xf32> to vector<2x128xf32>
    %56 = arith.negf %55 : vector<2x128xf32>
    %57 = math.exp %56 : vector<2x128xf32>
    %cst_14 = arith.constant 1.000000e+00 : f32
    %58 = vector.broadcast %cst_14 : f32 to vector<2x128xf32>
    %59 = arith.addf %58, %57 : vector<2x128xf32>
    %60 = arith.divf %58, %59 : vector<2x128xf32>
    %61 = arith.mulf %52, %35 : vector<2x128xf32>
    %62 = arith.mulf %46, %54 : vector<2x128xf32>
    %63 = arith.addf %61, %62 : vector<2x128xf32>
    %64 = math.tanh %63 : vector<2x128xf32>
    %65 = arith.mulf %60, %64 : vector<2x128xf32>
    %66 = vector.extract_strided_slice %9 {offsets = [4, 0], sizes = [2, 512], strides = [1, 1]} : vector<16x512xf32> to vector<2x512xf32>
    %cst_15 = arith.constant dense<0.000000e+00> : vector<2x512xf32>
    %67 = tpu.matmul %65, %10, %cst_15 {dimension_numbers = #tpu.dot_dimension_numbers<[1], [0], [0], [1], [0, 0, 1, 1], [], []>} : vector<2x128xf32>, vector<128x512xf32>, vector<2x512xf32> -> vector<2x512xf32>
    %68 = arith.addf %66, %67 : vector<2x512xf32>
    %69 = vector.extract_strided_slice %68 {offsets = [0, 0], sizes = [2, 128], strides = [1, 1]} : vector<2x512xf32> to vector<2x128xf32>
    %70 = arith.negf %69 : vector<2x128xf32>
    %71 = math.exp %70 : vector<2x128xf32>
    %cst_16 = arith.constant 1.000000e+00 : f32
    %72 = vector.broadcast %cst_16 : f32 to vector<2x128xf32>
    %73 = arith.addf %72, %71 : vector<2x128xf32>
    %74 = arith.divf %72, %73 : vector<2x128xf32>
    %75 = vector.extract_strided_slice %68 {offsets = [0, 128], sizes = [2, 128], strides = [1, 1]} : vector<2x512xf32> to vector<2x128xf32>
    %76 = arith.negf %75 : vector<2x128xf32>
    %77 = math.exp %76 : vector<2x128xf32>
    %cst_17 = arith.constant 1.000000e+00 : f32
    %78 = vector.broadcast %cst_17 : f32 to vector<2x128xf32>
    %79 = arith.addf %78, %77 : vector<2x128xf32>
    %80 = arith.divf %78, %79 : vector<2x128xf32>
    %81 = vector.extract_strided_slice %68 {offsets = [0, 256], sizes = [2, 128], strides = [1, 1]} : vector<2x512xf32> to vector<2x128xf32>
    %82 = math.tanh %81 : vector<2x128xf32>
    %83 = vector.extract_strided_slice %68 {offsets = [0, 384], sizes = [2, 128], strides = [1, 1]} : vector<2x512xf32> to vector<2x128xf32>
    %84 = arith.negf %83 : vector<2x128xf32>
    %85 = math.exp %84 : vector<2x128xf32>
    %cst_18 = arith.constant 1.000000e+00 : f32
    %86 = vector.broadcast %cst_18 : f32 to vector<2x128xf32>
    %87 = arith.addf %86, %85 : vector<2x128xf32>
    %88 = arith.divf %86, %87 : vector<2x128xf32>
    %89 = arith.mulf %80, %63 : vector<2x128xf32>
    %90 = arith.mulf %74, %82 : vector<2x128xf32>
    %91 = arith.addf %89, %90 : vector<2x128xf32>
    %92 = math.tanh %91 : vector<2x128xf32>
    %93 = arith.mulf %88, %92 : vector<2x128xf32>
    %94 = vector.extract_strided_slice %9 {offsets = [6, 0], sizes = [2, 512], strides = [1, 1]} : vector<16x512xf32> to vector<2x512xf32>
    %cst_19 = arith.constant dense<0.000000e+00> : vector<2x512xf32>
    %95 = tpu.matmul %93, %10, %cst_19 {dimension_numbers = #tpu.dot_dimension_numbers<[1], [0], [0], [1], [0, 0, 1, 1], [], []>} : vector<2x128xf32>, vector<128x512xf32>, vector<2x512xf32> -> vector<2x512xf32>
    %96 = arith.addf %94, %95 : vector<2x512xf32>
    %97 = vector.extract_strided_slice %96 {offsets = [0, 0], sizes = [2, 128], strides = [1, 1]} : vector<2x512xf32> to vector<2x128xf32>
    %98 = arith.negf %97 : vector<2x128xf32>
    %99 = math.exp %98 : vector<2x128xf32>
    %cst_20 = arith.constant 1.000000e+00 : f32
    %100 = vector.broadcast %cst_20 : f32 to vector<2x128xf32>
    %101 = arith.addf %100, %99 : vector<2x128xf32>
    %102 = arith.divf %100, %101 : vector<2x128xf32>
    %103 = vector.extract_strided_slice %96 {offsets = [0, 128], sizes = [2, 128], strides = [1, 1]} : vector<2x512xf32> to vector<2x128xf32>
    %104 = arith.negf %103 : vector<2x128xf32>
    %105 = math.exp %104 : vector<2x128xf32>
    %cst_21 = arith.constant 1.000000e+00 : f32
    %106 = vector.broadcast %cst_21 : f32 to vector<2x128xf32>
    %107 = arith.addf %106, %105 : vector<2x128xf32>
    %108 = arith.divf %106, %107 : vector<2x128xf32>
    %109 = vector.extract_strided_slice %96 {offsets = [0, 256], sizes = [2, 128], strides = [1, 1]} : vector<2x512xf32> to vector<2x128xf32>
    %110 = math.tanh %109 : vector<2x128xf32>
    %111 = vector.extract_strided_slice %96 {offsets = [0, 384], sizes = [2, 128], strides = [1, 1]} : vector<2x512xf32> to vector<2x128xf32>
    %112 = arith.negf %111 : vector<2x128xf32>
    %113 = math.exp %112 : vector<2x128xf32>
    %cst_22 = arith.constant 1.000000e+00 : f32
    %114 = vector.broadcast %cst_22 : f32 to vector<2x128xf32>
    %115 = arith.addf %114, %113 : vector<2x128xf32>
    %116 = arith.divf %114, %115 : vector<2x128xf32>
    %117 = arith.mulf %108, %91 : vector<2x128xf32>
    %118 = arith.mulf %102, %110 : vector<2x128xf32>
    %119 = arith.addf %117, %118 : vector<2x128xf32>
    %120 = math.tanh %119 : vector<2x128xf32>
    %121 = arith.mulf %116, %120 : vector<2x128xf32>
    %122 = vector.extract_strided_slice %9 {offsets = [8, 0], sizes = [2, 512], strides = [1, 1]} : vector<16x512xf32> to vector<2x512xf32>
    %cst_23 = arith.constant dense<0.000000e+00> : vector<2x512xf32>
    %123 = tpu.matmul %121, %10, %cst_23 {dimension_numbers = #tpu.dot_dimension_numbers<[1], [0], [0], [1], [0, 0, 1, 1], [], []>} : vector<2x128xf32>, vector<128x512xf32>, vector<2x512xf32> -> vector<2x512xf32>
    %124 = arith.addf %122, %123 : vector<2x512xf32>
    %125 = vector.extract_strided_slice %124 {offsets = [0, 0], sizes = [2, 128], strides = [1, 1]} : vector<2x512xf32> to vector<2x128xf32>
    %126 = arith.negf %125 : vector<2x128xf32>
    %127 = math.exp %126 : vector<2x128xf32>
    %cst_24 = arith.constant 1.000000e+00 : f32
    %128 = vector.broadcast %cst_24 : f32 to vector<2x128xf32>
    %129 = arith.addf %128, %127 : vector<2x128xf32>
    %130 = arith.divf %128, %129 : vector<2x128xf32>
    %131 = vector.extract_strided_slice %124 {offsets = [0, 128], sizes = [2, 128], strides = [1, 1]} : vector<2x512xf32> to vector<2x128xf32>
    %132 = arith.negf %131 : vector<2x128xf32>
    %133 = math.exp %132 : vector<2x128xf32>
    %cst_25 = arith.constant 1.000000e+00 : f32
    %134 = vector.broadcast %cst_25 : f32 to vector<2x128xf32>
    %135 = arith.addf %134, %133 : vector<2x128xf32>
    %136 = arith.divf %134, %135 : vector<2x128xf32>
    %137 = vector.extract_strided_slice %124 {offsets = [0, 256], sizes = [2, 128], strides = [1, 1]} : vector<2x512xf32> to vector<2x128xf32>
    %138 = math.tanh %137 : vector<2x128xf32>
    %139 = vector.extract_strided_slice %124 {offsets = [0, 384], sizes = [2, 128], strides = [1, 1]} : vector<2x512xf32> to vector<2x128xf32>
    %140 = arith.negf %139 : vector<2x128xf32>
    %141 = math.exp %140 : vector<2x128xf32>
    %cst_26 = arith.constant 1.000000e+00 : f32
    %142 = vector.broadcast %cst_26 : f32 to vector<2x128xf32>
    %143 = arith.addf %142, %141 : vector<2x128xf32>
    %144 = arith.divf %142, %143 : vector<2x128xf32>
    %145 = arith.mulf %136, %119 : vector<2x128xf32>
    %146 = arith.mulf %130, %138 : vector<2x128xf32>
    %147 = arith.addf %145, %146 : vector<2x128xf32>
    %148 = math.tanh %147 : vector<2x128xf32>
    %149 = arith.mulf %144, %148 : vector<2x128xf32>
    %150 = vector.extract_strided_slice %9 {offsets = [10, 0], sizes = [2, 512], strides = [1, 1]} : vector<16x512xf32> to vector<2x512xf32>
    %cst_27 = arith.constant dense<0.000000e+00> : vector<2x512xf32>
    %151 = tpu.matmul %149, %10, %cst_27 {dimension_numbers = #tpu.dot_dimension_numbers<[1], [0], [0], [1], [0, 0, 1, 1], [], []>} : vector<2x128xf32>, vector<128x512xf32>, vector<2x512xf32> -> vector<2x512xf32>
    %152 = arith.addf %150, %151 : vector<2x512xf32>
    %153 = vector.extract_strided_slice %152 {offsets = [0, 0], sizes = [2, 128], strides = [1, 1]} : vector<2x512xf32> to vector<2x128xf32>
    %154 = arith.negf %153 : vector<2x128xf32>
    %155 = math.exp %154 : vector<2x128xf32>
    %cst_28 = arith.constant 1.000000e+00 : f32
    %156 = vector.broadcast %cst_28 : f32 to vector<2x128xf32>
    %157 = arith.addf %156, %155 : vector<2x128xf32>
    %158 = arith.divf %156, %157 : vector<2x128xf32>
    %159 = vector.extract_strided_slice %152 {offsets = [0, 128], sizes = [2, 128], strides = [1, 1]} : vector<2x512xf32> to vector<2x128xf32>
    %160 = arith.negf %159 : vector<2x128xf32>
    %161 = math.exp %160 : vector<2x128xf32>
    %cst_29 = arith.constant 1.000000e+00 : f32
    %162 = vector.broadcast %cst_29 : f32 to vector<2x128xf32>
    %163 = arith.addf %162, %161 : vector<2x128xf32>
    %164 = arith.divf %162, %163 : vector<2x128xf32>
    %165 = vector.extract_strided_slice %152 {offsets = [0, 256], sizes = [2, 128], strides = [1, 1]} : vector<2x512xf32> to vector<2x128xf32>
    %166 = math.tanh %165 : vector<2x128xf32>
    %167 = vector.extract_strided_slice %152 {offsets = [0, 384], sizes = [2, 128], strides = [1, 1]} : vector<2x512xf32> to vector<2x128xf32>
    %168 = arith.negf %167 : vector<2x128xf32>
    %169 = math.exp %168 : vector<2x128xf32>
    %cst_30 = arith.constant 1.000000e+00 : f32
    %170 = vector.broadcast %cst_30 : f32 to vector<2x128xf32>
    %171 = arith.addf %170, %169 : vector<2x128xf32>
    %172 = arith.divf %170, %171 : vector<2x128xf32>
    %173 = arith.mulf %164, %147 : vector<2x128xf32>
    %174 = arith.mulf %158, %166 : vector<2x128xf32>
    %175 = arith.addf %173, %174 : vector<2x128xf32>
    %176 = math.tanh %175 : vector<2x128xf32>
    %177 = arith.mulf %172, %176 : vector<2x128xf32>
    %178 = vector.extract_strided_slice %9 {offsets = [12, 0], sizes = [2, 512], strides = [1, 1]} : vector<16x512xf32> to vector<2x512xf32>
    %cst_31 = arith.constant dense<0.000000e+00> : vector<2x512xf32>
    %179 = tpu.matmul %177, %10, %cst_31 {dimension_numbers = #tpu.dot_dimension_numbers<[1], [0], [0], [1], [0, 0, 1, 1], [], []>} : vector<2x128xf32>, vector<128x512xf32>, vector<2x512xf32> -> vector<2x512xf32>
    %180 = arith.addf %178, %179 : vector<2x512xf32>
    %181 = vector.extract_strided_slice %180 {offsets = [0, 0], sizes = [2, 128], strides = [1, 1]} : vector<2x512xf32> to vector<2x128xf32>
    %182 = arith.negf %181 : vector<2x128xf32>
    %183 = math.exp %182 : vector<2x128xf32>
    %cst_32 = arith.constant 1.000000e+00 : f32
    %184 = vector.broadcast %cst_32 : f32 to vector<2x128xf32>
    %185 = arith.addf %184, %183 : vector<2x128xf32>
    %186 = arith.divf %184, %185 : vector<2x128xf32>
    %187 = vector.extract_strided_slice %180 {offsets = [0, 128], sizes = [2, 128], strides = [1, 1]} : vector<2x512xf32> to vector<2x128xf32>
    %188 = arith.negf %187 : vector<2x128xf32>
    %189 = math.exp %188 : vector<2x128xf32>
    %cst_33 = arith.constant 1.000000e+00 : f32
    %190 = vector.broadcast %cst_33 : f32 to vector<2x128xf32>
    %191 = arith.addf %190, %189 : vector<2x128xf32>
    %192 = arith.divf %190, %191 : vector<2x128xf32>
    %193 = vector.extract_strided_slice %180 {offsets = [0, 256], sizes = [2, 128], strides = [1, 1]} : vector<2x512xf32> to vector<2x128xf32>
    %194 = math.tanh %193 : vector<2x128xf32>
    %195 = vector.extract_strided_slice %180 {offsets = [0, 384], sizes = [2, 128], strides = [1, 1]} : vector<2x512xf32> to vector<2x128xf32>
    %196 = arith.negf %195 : vector<2x128xf32>
    %197 = math.exp %196 : vector<2x128xf32>
    %cst_34 = arith.constant 1.000000e+00 : f32
    %198 = vector.broadcast %cst_34 : f32 to vector<2x128xf32>
    %199 = arith.addf %198, %197 : vector<2x128xf32>
    %200 = arith.divf %198, %199 : vector<2x128xf32>
    %201 = arith.mulf %192, %175 : vector<2x128xf32>
    %202 = arith.mulf %186, %194 : vector<2x128xf32>
    %203 = arith.addf %201, %202 : vector<2x128xf32>
    %204 = math.tanh %203 : vector<2x128xf32>
    %205 = arith.mulf %200, %204 : vector<2x128xf32>
    %206 = vector.extract_strided_slice %9 {offsets = [14, 0], sizes = [2, 512], strides = [1, 1]} : vector<16x512xf32> to vector<2x512xf32>
    %cst_35 = arith.constant dense<0.000000e+00> : vector<2x512xf32>
    %207 = tpu.matmul %205, %10, %cst_35 {dimension_numbers = #tpu.dot_dimension_numbers<[1], [0], [0], [1], [0, 0, 1, 1], [], []>} : vector<2x128xf32>, vector<128x512xf32>, vector<2x512xf32> -> vector<2x512xf32>
    %208 = arith.addf %206, %207 : vector<2x512xf32>
    %209 = vector.extract_strided_slice %208 {offsets = [0, 0], sizes = [2, 128], strides = [1, 1]} : vector<2x512xf32> to vector<2x128xf32>
    %210 = arith.negf %209 : vector<2x128xf32>
    %211 = math.exp %210 : vector<2x128xf32>
    %cst_36 = arith.constant 1.000000e+00 : f32
    %212 = vector.broadcast %cst_36 : f32 to vector<2x128xf32>
    %213 = arith.addf %212, %211 : vector<2x128xf32>
    %214 = arith.divf %212, %213 : vector<2x128xf32>
    %215 = vector.extract_strided_slice %208 {offsets = [0, 128], sizes = [2, 128], strides = [1, 1]} : vector<2x512xf32> to vector<2x128xf32>
    %216 = arith.negf %215 : vector<2x128xf32>
    %217 = math.exp %216 : vector<2x128xf32>
    %cst_37 = arith.constant 1.000000e+00 : f32
    %218 = vector.broadcast %cst_37 : f32 to vector<2x128xf32>
    %219 = arith.addf %218, %217 : vector<2x128xf32>
    %220 = arith.divf %218, %219 : vector<2x128xf32>
    %221 = vector.extract_strided_slice %208 {offsets = [0, 256], sizes = [2, 128], strides = [1, 1]} : vector<2x512xf32> to vector<2x128xf32>
    %222 = math.tanh %221 : vector<2x128xf32>
    %223 = vector.extract_strided_slice %208 {offsets = [0, 384], sizes = [2, 128], strides = [1, 1]} : vector<2x512xf32> to vector<2x128xf32>
    %224 = arith.negf %223 : vector<2x128xf32>
    %225 = math.exp %224 : vector<2x128xf32>
    %cst_38 = arith.constant 1.000000e+00 : f32
    %226 = vector.broadcast %cst_38 : f32 to vector<2x128xf32>
    %227 = arith.addf %226, %225 : vector<2x128xf32>
    %228 = arith.divf %226, %227 : vector<2x128xf32>
    %229 = arith.mulf %220, %203 : vector<2x128xf32>
    %230 = arith.mulf %214, %222 : vector<2x128xf32>
    %231 = arith.addf %229, %230 : vector<2x128xf32>
    %232 = math.tanh %231 : vector<2x128xf32>
    %233 = arith.mulf %228, %232 : vector<2x128xf32>
    %234 = vector.extract_strided_slice %37 {offsets = [0, 0], sizes = [2, 64], strides = [1, 1]} : vector<2x128xf32> to vector<2x64xf32>
    %235 = vector.extract_strided_slice %233 {offsets = [0, 64], sizes = [2, 64], strides = [1, 1]} : vector<2x128xf32> to vector<2x64xf32>
    %236 = tpu.concatenate %234, %235 in 1 : vector<2x64xf32>, vector<2x64xf32> -> vector<2x128xf32>
    %237 = vector.extract_strided_slice %65 {offsets = [0, 0], sizes = [2, 64], strides = [1, 1]} : vector<2x128xf32> to vector<2x64xf32>
    %238 = vector.extract_strided_slice %205 {offsets = [0, 64], sizes = [2, 64], strides = [1, 1]} : vector<2x128xf32> to vector<2x64xf32>
    %239 = tpu.concatenate %237, %238 in 1 : vector<2x64xf32>, vector<2x64xf32> -> vector<2x128xf32>
    %240 = vector.extract_strided_slice %93 {offsets = [0, 0], sizes = [2, 64], strides = [1, 1]} : vector<2x128xf32> to vector<2x64xf32>
    %241 = vector.extract_strided_slice %177 {offsets = [0, 64], sizes = [2, 64], strides = [1, 1]} : vector<2x128xf32> to vector<2x64xf32>
    %242 = tpu.concatenate %240, %241 in 1 : vector<2x64xf32>, vector<2x64xf32> -> vector<2x128xf32>
    %243 = vector.extract_strided_slice %121 {offsets = [0, 0], sizes = [2, 64], strides = [1, 1]} : vector<2x128xf32> to vector<2x64xf32>
    %244 = vector.extract_strided_slice %149 {offsets = [0, 64], sizes = [2, 64], strides = [1, 1]} : vector<2x128xf32> to vector<2x64xf32>
    %245 = tpu.concatenate %243, %244 in 1 : vector<2x64xf32>, vector<2x64xf32> -> vector<2x128xf32>
    %246 = vector.extract_strided_slice %149 {offsets = [0, 0], sizes = [2, 64], strides = [1, 1]} : vector<2x128xf32> to vector<2x64xf32>
    %247 = vector.extract_strided_slice %121 {offsets = [0, 64], sizes = [2, 64], strides = [1, 1]} : vector<2x128xf32> to vector<2x64xf32>
    %248 = tpu.concatenate %246, %247 in 1 : vector<2x64xf32>, vector<2x64xf32> -> vector<2x128xf32>
    %249 = vector.extract_strided_slice %177 {offsets = [0, 0], sizes = [2, 64], strides = [1, 1]} : vector<2x128xf32> to vector<2x64xf32>
    %250 = vector.extract_strided_slice %93 {offsets = [0, 64], sizes = [2, 64], strides = [1, 1]} : vector<2x128xf32> to vector<2x64xf32>
    %251 = tpu.concatenate %249, %250 in 1 : vector<2x64xf32>, vector<2x64xf32> -> vector<2x128xf32>
    %252 = vector.extract_strided_slice %205 {offsets = [0, 0], sizes = [2, 64], strides = [1, 1]} : vector<2x128xf32> to vector<2x64xf32>
    %253 = vector.extract_strided_slice %65 {offsets = [0, 64], sizes = [2, 64], strides = [1, 1]} : vector<2x128xf32> to vector<2x64xf32>
    %254 = tpu.concatenate %252, %253 in 1 : vector<2x64xf32>, vector<2x64xf32> -> vector<2x128xf32>
    %255 = vector.extract_strided_slice %233 {offsets = [0, 0], sizes = [2, 64], strides = [1, 1]} : vector<2x128xf32> to vector<2x64xf32>
    %256 = vector.extract_strided_slice %37 {offsets = [0, 64], sizes = [2, 64], strides = [1, 1]} : vector<2x128xf32> to vector<2x64xf32>
    %257 = tpu.concatenate %255, %256 in 1 : vector<2x64xf32>, vector<2x64xf32> -> vector<2x128xf32>
    %258 = tpu.concatenate %236, %239, %242, %245, %248, %251, %254, %257 in 0 : vector<2x128xf32>, vector<2x128xf32>, vector<2x128xf32>, vector<2x128xf32>, vector<2x128xf32>, vector<2x128xf32>, vector<2x128xf32>, vector<2x128xf32> -> vector<16x128xf32>
    %c0_39 = arith.constant 0 : index
    %c0_40 = arith.constant 0 : index
    %259 = vector.load %arg4[%c0_39, %c0_40] : memref<128x256xf32, #tpu.memory_space<vmem>>, vector<128x256xf32>
    %cst_41 = arith.constant dense<0.000000e+00> : vector<16x256xf32>
    %260 = tpu.matmul %258, %259, %cst_41 {dimension_numbers = #tpu.dot_dimension_numbers<[1], [0], [0], [1], [0, 0, 1, 1], [], []>} : vector<16x128xf32>, vector<128x256xf32>, vector<16x256xf32> -> vector<16x256xf32>
    %c0_42 = arith.constant 0 : index
    %c0_43 = arith.constant 0 : index
    %261 = vector.load %arg6[%c0_42, %c0_43] : memref<1x256xf32, #tpu.memory_space<vmem>>, vector<1x256xf32>
    %262 = vector.broadcast %261 : vector<1x256xf32> to vector<16x256xf32>
    %263 = arith.addf %260, %262 : vector<16x256xf32>
    %c0_44 = arith.constant 0 : index
    %c0_45 = arith.constant 0 : index
    %264 = vector.load %arg5[%c0_44, %c0_45] : memref<64x256xf32, #tpu.memory_space<vmem>>, vector<64x256xf32>
    %cst_46 = arith.constant 0.000000e+00 : f32
    %265 = vector.broadcast %cst_46 : f32 to vector<2x64xf32>
    %266 = vector.extract_strided_slice %263 {offsets = [0, 0], sizes = [2, 256], strides = [1, 1]} : vector<16x256xf32> to vector<2x256xf32>
    %267 = vector.extract_strided_slice %266 {offsets = [0, 0], sizes = [2, 64], strides = [1, 1]} : vector<2x256xf32> to vector<2x64xf32>
    %268 = arith.negf %267 : vector<2x64xf32>
    %269 = math.exp %268 : vector<2x64xf32>
    %cst_47 = arith.constant 1.000000e+00 : f32
    %270 = vector.broadcast %cst_47 : f32 to vector<2x64xf32>
    %271 = arith.addf %270, %269 : vector<2x64xf32>
    %272 = arith.divf %270, %271 : vector<2x64xf32>
    %273 = vector.extract_strided_slice %266 {offsets = [0, 64], sizes = [2, 64], strides = [1, 1]} : vector<2x256xf32> to vector<2x64xf32>
    %274 = arith.negf %273 : vector<2x64xf32>
    %275 = math.exp %274 : vector<2x64xf32>
    %cst_48 = arith.constant 1.000000e+00 : f32
    %276 = vector.broadcast %cst_48 : f32 to vector<2x64xf32>
    %277 = arith.addf %276, %275 : vector<2x64xf32>
    %278 = arith.divf %276, %277 : vector<2x64xf32>
    %279 = vector.extract_strided_slice %266 {offsets = [0, 128], sizes = [2, 64], strides = [1, 1]} : vector<2x256xf32> to vector<2x64xf32>
    %280 = math.tanh %279 : vector<2x64xf32>
    %281 = vector.extract_strided_slice %266 {offsets = [0, 192], sizes = [2, 64], strides = [1, 1]} : vector<2x256xf32> to vector<2x64xf32>
    %282 = arith.negf %281 : vector<2x64xf32>
    %283 = math.exp %282 : vector<2x64xf32>
    %cst_49 = arith.constant 1.000000e+00 : f32
    %284 = vector.broadcast %cst_49 : f32 to vector<2x64xf32>
    %285 = arith.addf %284, %283 : vector<2x64xf32>
    %286 = arith.divf %284, %285 : vector<2x64xf32>
    %287 = arith.mulf %278, %265 : vector<2x64xf32>
    %288 = arith.mulf %272, %280 : vector<2x64xf32>
    %289 = arith.addf %287, %288 : vector<2x64xf32>
    %290 = math.tanh %289 : vector<2x64xf32>
    %291 = arith.mulf %286, %290 : vector<2x64xf32>
    %292 = vector.extract_strided_slice %263 {offsets = [2, 0], sizes = [2, 256], strides = [1, 1]} : vector<16x256xf32> to vector<2x256xf32>
    %cst_50 = arith.constant dense<0.000000e+00> : vector<2x256xf32>
    %293 = tpu.matmul %291, %264, %cst_50 {dimension_numbers = #tpu.dot_dimension_numbers<[1], [0], [0], [1], [0, 0, 1, 1], [], []>} : vector<2x64xf32>, vector<64x256xf32>, vector<2x256xf32> -> vector<2x256xf32>
    %294 = arith.addf %292, %293 : vector<2x256xf32>
    %295 = vector.extract_strided_slice %294 {offsets = [0, 0], sizes = [2, 64], strides = [1, 1]} : vector<2x256xf32> to vector<2x64xf32>
    %296 = arith.negf %295 : vector<2x64xf32>
    %297 = math.exp %296 : vector<2x64xf32>
    %cst_51 = arith.constant 1.000000e+00 : f32
    %298 = vector.broadcast %cst_51 : f32 to vector<2x64xf32>
    %299 = arith.addf %298, %297 : vector<2x64xf32>
    %300 = arith.divf %298, %299 : vector<2x64xf32>
    %301 = vector.extract_strided_slice %294 {offsets = [0, 64], sizes = [2, 64], strides = [1, 1]} : vector<2x256xf32> to vector<2x64xf32>
    %302 = arith.negf %301 : vector<2x64xf32>
    %303 = math.exp %302 : vector<2x64xf32>
    %cst_52 = arith.constant 1.000000e+00 : f32
    %304 = vector.broadcast %cst_52 : f32 to vector<2x64xf32>
    %305 = arith.addf %304, %303 : vector<2x64xf32>
    %306 = arith.divf %304, %305 : vector<2x64xf32>
    %307 = vector.extract_strided_slice %294 {offsets = [0, 128], sizes = [2, 64], strides = [1, 1]} : vector<2x256xf32> to vector<2x64xf32>
    %308 = math.tanh %307 : vector<2x64xf32>
    %309 = vector.extract_strided_slice %294 {offsets = [0, 192], sizes = [2, 64], strides = [1, 1]} : vector<2x256xf32> to vector<2x64xf32>
    %310 = arith.negf %309 : vector<2x64xf32>
    %311 = math.exp %310 : vector<2x64xf32>
    %cst_53 = arith.constant 1.000000e+00 : f32
    %312 = vector.broadcast %cst_53 : f32 to vector<2x64xf32>
    %313 = arith.addf %312, %311 : vector<2x64xf32>
    %314 = arith.divf %312, %313 : vector<2x64xf32>
    %315 = arith.mulf %306, %289 : vector<2x64xf32>
    %316 = arith.mulf %300, %308 : vector<2x64xf32>
    %317 = arith.addf %315, %316 : vector<2x64xf32>
    %318 = math.tanh %317 : vector<2x64xf32>
    %319 = arith.mulf %314, %318 : vector<2x64xf32>
    %320 = vector.extract_strided_slice %263 {offsets = [4, 0], sizes = [2, 256], strides = [1, 1]} : vector<16x256xf32> to vector<2x256xf32>
    %cst_54 = arith.constant dense<0.000000e+00> : vector<2x256xf32>
    %321 = tpu.matmul %319, %264, %cst_54 {dimension_numbers = #tpu.dot_dimension_numbers<[1], [0], [0], [1], [0, 0, 1, 1], [], []>} : vector<2x64xf32>, vector<64x256xf32>, vector<2x256xf32> -> vector<2x256xf32>
    %322 = arith.addf %320, %321 : vector<2x256xf32>
    %323 = vector.extract_strided_slice %322 {offsets = [0, 0], sizes = [2, 64], strides = [1, 1]} : vector<2x256xf32> to vector<2x64xf32>
    %324 = arith.negf %323 : vector<2x64xf32>
    %325 = math.exp %324 : vector<2x64xf32>
    %cst_55 = arith.constant 1.000000e+00 : f32
    %326 = vector.broadcast %cst_55 : f32 to vector<2x64xf32>
    %327 = arith.addf %326, %325 : vector<2x64xf32>
    %328 = arith.divf %326, %327 : vector<2x64xf32>
    %329 = vector.extract_strided_slice %322 {offsets = [0, 64], sizes = [2, 64], strides = [1, 1]} : vector<2x256xf32> to vector<2x64xf32>
    %330 = arith.negf %329 : vector<2x64xf32>
    %331 = math.exp %330 : vector<2x64xf32>
    %cst_56 = arith.constant 1.000000e+00 : f32
    %332 = vector.broadcast %cst_56 : f32 to vector<2x64xf32>
    %333 = arith.addf %332, %331 : vector<2x64xf32>
    %334 = arith.divf %332, %333 : vector<2x64xf32>
    %335 = vector.extract_strided_slice %322 {offsets = [0, 128], sizes = [2, 64], strides = [1, 1]} : vector<2x256xf32> to vector<2x64xf32>
    %336 = math.tanh %335 : vector<2x64xf32>
    %337 = vector.extract_strided_slice %322 {offsets = [0, 192], sizes = [2, 64], strides = [1, 1]} : vector<2x256xf32> to vector<2x64xf32>
    %338 = arith.negf %337 : vector<2x64xf32>
    %339 = math.exp %338 : vector<2x64xf32>
    %cst_57 = arith.constant 1.000000e+00 : f32
    %340 = vector.broadcast %cst_57 : f32 to vector<2x64xf32>
    %341 = arith.addf %340, %339 : vector<2x64xf32>
    %342 = arith.divf %340, %341 : vector<2x64xf32>
    %343 = arith.mulf %334, %317 : vector<2x64xf32>
    %344 = arith.mulf %328, %336 : vector<2x64xf32>
    %345 = arith.addf %343, %344 : vector<2x64xf32>
    %346 = math.tanh %345 : vector<2x64xf32>
    %347 = arith.mulf %342, %346 : vector<2x64xf32>
    %348 = vector.extract_strided_slice %263 {offsets = [6, 0], sizes = [2, 256], strides = [1, 1]} : vector<16x256xf32> to vector<2x256xf32>
    %cst_58 = arith.constant dense<0.000000e+00> : vector<2x256xf32>
    %349 = tpu.matmul %347, %264, %cst_58 {dimension_numbers = #tpu.dot_dimension_numbers<[1], [0], [0], [1], [0, 0, 1, 1], [], []>} : vector<2x64xf32>, vector<64x256xf32>, vector<2x256xf32> -> vector<2x256xf32>
    %350 = arith.addf %348, %349 : vector<2x256xf32>
    %351 = vector.extract_strided_slice %350 {offsets = [0, 0], sizes = [2, 64], strides = [1, 1]} : vector<2x256xf32> to vector<2x64xf32>
    %352 = arith.negf %351 : vector<2x64xf32>
    %353 = math.exp %352 : vector<2x64xf32>
    %cst_59 = arith.constant 1.000000e+00 : f32
    %354 = vector.broadcast %cst_59 : f32 to vector<2x64xf32>
    %355 = arith.addf %354, %353 : vector<2x64xf32>
    %356 = arith.divf %354, %355 : vector<2x64xf32>
    %357 = vector.extract_strided_slice %350 {offsets = [0, 64], sizes = [2, 64], strides = [1, 1]} : vector<2x256xf32> to vector<2x64xf32>
    %358 = arith.negf %357 : vector<2x64xf32>
    %359 = math.exp %358 : vector<2x64xf32>
    %cst_60 = arith.constant 1.000000e+00 : f32
    %360 = vector.broadcast %cst_60 : f32 to vector<2x64xf32>
    %361 = arith.addf %360, %359 : vector<2x64xf32>
    %362 = arith.divf %360, %361 : vector<2x64xf32>
    %363 = vector.extract_strided_slice %350 {offsets = [0, 128], sizes = [2, 64], strides = [1, 1]} : vector<2x256xf32> to vector<2x64xf32>
    %364 = math.tanh %363 : vector<2x64xf32>
    %365 = vector.extract_strided_slice %350 {offsets = [0, 192], sizes = [2, 64], strides = [1, 1]} : vector<2x256xf32> to vector<2x64xf32>
    %366 = arith.negf %365 : vector<2x64xf32>
    %367 = math.exp %366 : vector<2x64xf32>
    %cst_61 = arith.constant 1.000000e+00 : f32
    %368 = vector.broadcast %cst_61 : f32 to vector<2x64xf32>
    %369 = arith.addf %368, %367 : vector<2x64xf32>
    %370 = arith.divf %368, %369 : vector<2x64xf32>
    %371 = arith.mulf %362, %345 : vector<2x64xf32>
    %372 = arith.mulf %356, %364 : vector<2x64xf32>
    %373 = arith.addf %371, %372 : vector<2x64xf32>
    %374 = math.tanh %373 : vector<2x64xf32>
    %375 = arith.mulf %370, %374 : vector<2x64xf32>
    %376 = vector.extract_strided_slice %263 {offsets = [8, 0], sizes = [2, 256], strides = [1, 1]} : vector<16x256xf32> to vector<2x256xf32>
    %cst_62 = arith.constant dense<0.000000e+00> : vector<2x256xf32>
    %377 = tpu.matmul %375, %264, %cst_62 {dimension_numbers = #tpu.dot_dimension_numbers<[1], [0], [0], [1], [0, 0, 1, 1], [], []>} : vector<2x64xf32>, vector<64x256xf32>, vector<2x256xf32> -> vector<2x256xf32>
    %378 = arith.addf %376, %377 : vector<2x256xf32>
    %379 = vector.extract_strided_slice %378 {offsets = [0, 0], sizes = [2, 64], strides = [1, 1]} : vector<2x256xf32> to vector<2x64xf32>
    %380 = arith.negf %379 : vector<2x64xf32>
    %381 = math.exp %380 : vector<2x64xf32>
    %cst_63 = arith.constant 1.000000e+00 : f32
    %382 = vector.broadcast %cst_63 : f32 to vector<2x64xf32>
    %383 = arith.addf %382, %381 : vector<2x64xf32>
    %384 = arith.divf %382, %383 : vector<2x64xf32>
    %385 = vector.extract_strided_slice %378 {offsets = [0, 64], sizes = [2, 64], strides = [1, 1]} : vector<2x256xf32> to vector<2x64xf32>
    %386 = arith.negf %385 : vector<2x64xf32>
    %387 = math.exp %386 : vector<2x64xf32>
    %cst_64 = arith.constant 1.000000e+00 : f32
    %388 = vector.broadcast %cst_64 : f32 to vector<2x64xf32>
    %389 = arith.addf %388, %387 : vector<2x64xf32>
    %390 = arith.divf %388, %389 : vector<2x64xf32>
    %391 = vector.extract_strided_slice %378 {offsets = [0, 128], sizes = [2, 64], strides = [1, 1]} : vector<2x256xf32> to vector<2x64xf32>
    %392 = math.tanh %391 : vector<2x64xf32>
    %393 = vector.extract_strided_slice %378 {offsets = [0, 192], sizes = [2, 64], strides = [1, 1]} : vector<2x256xf32> to vector<2x64xf32>
    %394 = arith.negf %393 : vector<2x64xf32>
    %395 = math.exp %394 : vector<2x64xf32>
    %cst_65 = arith.constant 1.000000e+00 : f32
    %396 = vector.broadcast %cst_65 : f32 to vector<2x64xf32>
    %397 = arith.addf %396, %395 : vector<2x64xf32>
    %398 = arith.divf %396, %397 : vector<2x64xf32>
    %399 = arith.mulf %390, %373 : vector<2x64xf32>
    %400 = arith.mulf %384, %392 : vector<2x64xf32>
    %401 = arith.addf %399, %400 : vector<2x64xf32>
    %402 = math.tanh %401 : vector<2x64xf32>
    %403 = arith.mulf %398, %402 : vector<2x64xf32>
    %404 = vector.extract_strided_slice %263 {offsets = [10, 0], sizes = [2, 256], strides = [1, 1]} : vector<16x256xf32> to vector<2x256xf32>
    %cst_66 = arith.constant dense<0.000000e+00> : vector<2x256xf32>
    %405 = tpu.matmul %403, %264, %cst_66 {dimension_numbers = #tpu.dot_dimension_numbers<[1], [0], [0], [1], [0, 0, 1, 1], [], []>} : vector<2x64xf32>, vector<64x256xf32>, vector<2x256xf32> -> vector<2x256xf32>
    %406 = arith.addf %404, %405 : vector<2x256xf32>
    %407 = vector.extract_strided_slice %406 {offsets = [0, 0], sizes = [2, 64], strides = [1, 1]} : vector<2x256xf32> to vector<2x64xf32>
    %408 = arith.negf %407 : vector<2x64xf32>
    %409 = math.exp %408 : vector<2x64xf32>
    %cst_67 = arith.constant 1.000000e+00 : f32
    %410 = vector.broadcast %cst_67 : f32 to vector<2x64xf32>
    %411 = arith.addf %410, %409 : vector<2x64xf32>
    %412 = arith.divf %410, %411 : vector<2x64xf32>
    %413 = vector.extract_strided_slice %406 {offsets = [0, 64], sizes = [2, 64], strides = [1, 1]} : vector<2x256xf32> to vector<2x64xf32>
    %414 = arith.negf %413 : vector<2x64xf32>
    %415 = math.exp %414 : vector<2x64xf32>
    %cst_68 = arith.constant 1.000000e+00 : f32
    %416 = vector.broadcast %cst_68 : f32 to vector<2x64xf32>
    %417 = arith.addf %416, %415 : vector<2x64xf32>
    %418 = arith.divf %416, %417 : vector<2x64xf32>
    %419 = vector.extract_strided_slice %406 {offsets = [0, 128], sizes = [2, 64], strides = [1, 1]} : vector<2x256xf32> to vector<2x64xf32>
    %420 = math.tanh %419 : vector<2x64xf32>
    %421 = vector.extract_strided_slice %406 {offsets = [0, 192], sizes = [2, 64], strides = [1, 1]} : vector<2x256xf32> to vector<2x64xf32>
    %422 = arith.negf %421 : vector<2x64xf32>
    %423 = math.exp %422 : vector<2x64xf32>
    %cst_69 = arith.constant 1.000000e+00 : f32
    %424 = vector.broadcast %cst_69 : f32 to vector<2x64xf32>
    %425 = arith.addf %424, %423 : vector<2x64xf32>
    %426 = arith.divf %424, %425 : vector<2x64xf32>
    %427 = arith.mulf %418, %401 : vector<2x64xf32>
    %428 = arith.mulf %412, %420 : vector<2x64xf32>
    %429 = arith.addf %427, %428 : vector<2x64xf32>
    %430 = math.tanh %429 : vector<2x64xf32>
    %431 = arith.mulf %426, %430 : vector<2x64xf32>
    %432 = vector.extract_strided_slice %263 {offsets = [12, 0], sizes = [2, 256], strides = [1, 1]} : vector<16x256xf32> to vector<2x256xf32>
    %cst_70 = arith.constant dense<0.000000e+00> : vector<2x256xf32>
    %433 = tpu.matmul %431, %264, %cst_70 {dimension_numbers = #tpu.dot_dimension_numbers<[1], [0], [0], [1], [0, 0, 1, 1], [], []>} : vector<2x64xf32>, vector<64x256xf32>, vector<2x256xf32> -> vector<2x256xf32>
    %434 = arith.addf %432, %433 : vector<2x256xf32>
    %435 = vector.extract_strided_slice %434 {offsets = [0, 0], sizes = [2, 64], strides = [1, 1]} : vector<2x256xf32> to vector<2x64xf32>
    %436 = arith.negf %435 : vector<2x64xf32>
    %437 = math.exp %436 : vector<2x64xf32>
    %cst_71 = arith.constant 1.000000e+00 : f32
    %438 = vector.broadcast %cst_71 : f32 to vector<2x64xf32>
    %439 = arith.addf %438, %437 : vector<2x64xf32>
    %440 = arith.divf %438, %439 : vector<2x64xf32>
    %441 = vector.extract_strided_slice %434 {offsets = [0, 64], sizes = [2, 64], strides = [1, 1]} : vector<2x256xf32> to vector<2x64xf32>
    %442 = arith.negf %441 : vector<2x64xf32>
    %443 = math.exp %442 : vector<2x64xf32>
    %cst_72 = arith.constant 1.000000e+00 : f32
    %444 = vector.broadcast %cst_72 : f32 to vector<2x64xf32>
    %445 = arith.addf %444, %443 : vector<2x64xf32>
    %446 = arith.divf %444, %445 : vector<2x64xf32>
    %447 = vector.extract_strided_slice %434 {offsets = [0, 128], sizes = [2, 64], strides = [1, 1]} : vector<2x256xf32> to vector<2x64xf32>
    %448 = math.tanh %447 : vector<2x64xf32>
    %449 = vector.extract_strided_slice %434 {offsets = [0, 192], sizes = [2, 64], strides = [1, 1]} : vector<2x256xf32> to vector<2x64xf32>
    %450 = arith.negf %449 : vector<2x64xf32>
    %451 = math.exp %450 : vector<2x64xf32>
    %cst_73 = arith.constant 1.000000e+00 : f32
    %452 = vector.broadcast %cst_73 : f32 to vector<2x64xf32>
    %453 = arith.addf %452, %451 : vector<2x64xf32>
    %454 = arith.divf %452, %453 : vector<2x64xf32>
    %455 = arith.mulf %446, %429 : vector<2x64xf32>
    %456 = arith.mulf %440, %448 : vector<2x64xf32>
    %457 = arith.addf %455, %456 : vector<2x64xf32>
    %458 = math.tanh %457 : vector<2x64xf32>
    %459 = arith.mulf %454, %458 : vector<2x64xf32>
    %460 = vector.extract_strided_slice %263 {offsets = [14, 0], sizes = [2, 256], strides = [1, 1]} : vector<16x256xf32> to vector<2x256xf32>
    %cst_74 = arith.constant dense<0.000000e+00> : vector<2x256xf32>
    %461 = tpu.matmul %459, %264, %cst_74 {dimension_numbers = #tpu.dot_dimension_numbers<[1], [0], [0], [1], [0, 0, 1, 1], [], []>} : vector<2x64xf32>, vector<64x256xf32>, vector<2x256xf32> -> vector<2x256xf32>
    %462 = arith.addf %460, %461 : vector<2x256xf32>
    %463 = vector.extract_strided_slice %462 {offsets = [0, 0], sizes = [2, 64], strides = [1, 1]} : vector<2x256xf32> to vector<2x64xf32>
    %464 = arith.negf %463 : vector<2x64xf32>
    %465 = math.exp %464 : vector<2x64xf32>
    %cst_75 = arith.constant 1.000000e+00 : f32
    %466 = vector.broadcast %cst_75 : f32 to vector<2x64xf32>
    %467 = arith.addf %466, %465 : vector<2x64xf32>
    %468 = arith.divf %466, %467 : vector<2x64xf32>
    %469 = vector.extract_strided_slice %462 {offsets = [0, 64], sizes = [2, 64], strides = [1, 1]} : vector<2x256xf32> to vector<2x64xf32>
    %470 = arith.negf %469 : vector<2x64xf32>
    %471 = math.exp %470 : vector<2x64xf32>
    %cst_76 = arith.constant 1.000000e+00 : f32
    %472 = vector.broadcast %cst_76 : f32 to vector<2x64xf32>
    %473 = arith.addf %472, %471 : vector<2x64xf32>
    %474 = arith.divf %472, %473 : vector<2x64xf32>
    %475 = vector.extract_strided_slice %462 {offsets = [0, 128], sizes = [2, 64], strides = [1, 1]} : vector<2x256xf32> to vector<2x64xf32>
    %476 = math.tanh %475 : vector<2x64xf32>
    %477 = vector.extract_strided_slice %462 {offsets = [0, 192], sizes = [2, 64], strides = [1, 1]} : vector<2x256xf32> to vector<2x64xf32>
    %478 = arith.negf %477 : vector<2x64xf32>
    %479 = math.exp %478 : vector<2x64xf32>
    %cst_77 = arith.constant 1.000000e+00 : f32
    %480 = vector.broadcast %cst_77 : f32 to vector<2x64xf32>
    %481 = arith.addf %480, %479 : vector<2x64xf32>
    %482 = arith.divf %480, %481 : vector<2x64xf32>
    %483 = arith.mulf %474, %457 : vector<2x64xf32>
    %484 = arith.mulf %468, %476 : vector<2x64xf32>
    %485 = arith.addf %483, %484 : vector<2x64xf32>
    %486 = math.tanh %485 : vector<2x64xf32>
    %487 = arith.mulf %482, %486 : vector<2x64xf32>
    %c0_78 = arith.constant 0 : index
    %c0_79 = arith.constant 0 : index
    %488 = vector.load %arg7[%c0_78, %c0_79] : memref<128x256xf32, #tpu.memory_space<vmem>>, vector<128x256xf32>
    %cst_80 = arith.constant dense<0.000000e+00> : vector<2x256xf32>
    %489 = tpu.matmul %257, %488, %cst_80 {dimension_numbers = #tpu.dot_dimension_numbers<[1], [0], [0], [1], [0, 0, 1, 1], [], []>} : vector<2x128xf32>, vector<128x256xf32>, vector<2x256xf32> -> vector<2x256xf32>
    %c0_81 = arith.constant 0 : index
    %c0_82 = arith.constant 0 : index
    %490 = vector.load %arg8[%c0_81, %c0_82] : memref<1x256xf32, #tpu.memory_space<vmem>>, vector<1x256xf32>
    %491 = vector.broadcast %490 : vector<1x256xf32> to vector<2x256xf32>
    %492 = arith.addf %489, %491 : vector<2x256xf32>
    %cst_83 = arith.constant 0.000000e+00 : f32
    %493 = vector.broadcast %cst_83 : f32 to vector<2x64xf32>
    %494 = vector.extract_strided_slice %492 {offsets = [0, 0], sizes = [2, 64], strides = [1, 1]} : vector<2x256xf32> to vector<2x64xf32>
    %495 = arith.negf %494 : vector<2x64xf32>
    %496 = math.exp %495 : vector<2x64xf32>
    %cst_84 = arith.constant 1.000000e+00 : f32
    %497 = vector.broadcast %cst_84 : f32 to vector<2x64xf32>
    %498 = arith.addf %497, %496 : vector<2x64xf32>
    %499 = arith.divf %497, %498 : vector<2x64xf32>
    %500 = vector.extract_strided_slice %492 {offsets = [0, 64], sizes = [2, 64], strides = [1, 1]} : vector<2x256xf32> to vector<2x64xf32>
    %501 = arith.negf %500 : vector<2x64xf32>
    %502 = math.exp %501 : vector<2x64xf32>
    %cst_85 = arith.constant 1.000000e+00 : f32
    %503 = vector.broadcast %cst_85 : f32 to vector<2x64xf32>
    %504 = arith.addf %503, %502 : vector<2x64xf32>
    %505 = arith.divf %503, %504 : vector<2x64xf32>
    %506 = vector.extract_strided_slice %492 {offsets = [0, 128], sizes = [2, 64], strides = [1, 1]} : vector<2x256xf32> to vector<2x64xf32>
    %507 = math.tanh %506 : vector<2x64xf32>
    %508 = vector.extract_strided_slice %492 {offsets = [0, 192], sizes = [2, 64], strides = [1, 1]} : vector<2x256xf32> to vector<2x64xf32>
    %509 = arith.negf %508 : vector<2x64xf32>
    %510 = math.exp %509 : vector<2x64xf32>
    %cst_86 = arith.constant 1.000000e+00 : f32
    %511 = vector.broadcast %cst_86 : f32 to vector<2x64xf32>
    %512 = arith.addf %511, %510 : vector<2x64xf32>
    %513 = arith.divf %511, %512 : vector<2x64xf32>
    %514 = arith.mulf %505, %493 : vector<2x64xf32>
    %515 = arith.mulf %499, %507 : vector<2x64xf32>
    %516 = arith.addf %514, %515 : vector<2x64xf32>
    %517 = math.tanh %516 : vector<2x64xf32>
    %518 = arith.mulf %513, %517 : vector<2x64xf32>
    %519 = tpu.concatenate %487, %518 in 1 : vector<2x64xf32>, vector<2x64xf32> -> vector<2x128xf32>
    %cst_87 = arith.constant 0.000000e+00 : f32
    %520 = vector.broadcast %cst_87 : f32 to vector<2x128xf32>
    %521 = arith.maximumf %519, %520 : vector<2x128xf32>
    %c0_i32_88 = arith.constant 0 : i32
    %522 = tpu.memref_slice %arg18[%c0_i32_88] : memref<2x!tpu.dma_semaphore, #tpu.memory_space<semaphore_mem>> -> memref<1x!tpu.dma_semaphore, #tpu.memory_space<semaphore_mem>>
    %523 = tpu.memref_squeeze %522 : memref<1x!tpu.dma_semaphore, #tpu.memory_space<semaphore_mem>> -> memref<!tpu.dma_semaphore, #tpu.memory_space<semaphore_mem>>
    tpu.wait_dma2 semaphore(%523 : memref<!tpu.dma_semaphore, #tpu.memory_space<semaphore_mem>>) src(%arg9 : memref<128x1024xf32, #tpu.memory_space<any>>) dst(%arg16 : memref<128x1024xf32, #tpu.memory_space<vmem>>)
    %c0_89 = arith.constant 0 : index
    %c0_90 = arith.constant 0 : index
    %524 = vector.load %arg16[%c0_89, %c0_90] : memref<128x1024xf32, #tpu.memory_space<vmem>>, vector<128x1024xf32>
    %cst_91 = arith.constant dense<0.000000e+00> : vector<2x1024xf32>
    %525 = tpu.matmul %521, %524, %cst_91 {dimension_numbers = #tpu.dot_dimension_numbers<[1], [0], [0], [1], [0, 0, 1, 1], [], []>} : vector<2x128xf32>, vector<128x1024xf32>, vector<2x1024xf32> -> vector<2x1024xf32>
    %c0_92 = arith.constant 0 : index
    %c0_93 = arith.constant 0 : index
    %526 = vector.load %arg10[%c0_92, %c0_93] : memref<1x1024xf32, #tpu.memory_space<vmem>>, vector<1x1024xf32>
    %527 = vector.broadcast %526 : vector<1x1024xf32> to vector<2x1024xf32>
    %528 = arith.addf %525, %527 : vector<2x1024xf32>
    %cst_94 = arith.constant 0.000000e+00 : f32
    %529 = vector.broadcast %cst_94 : f32 to vector<2x1024xf32>
    %530 = arith.maximumf %528, %529 : vector<2x1024xf32>
    %c1_i32_95 = arith.constant 1 : i32
    %531 = tpu.memref_slice %arg18[%c1_i32_95] : memref<2x!tpu.dma_semaphore, #tpu.memory_space<semaphore_mem>> -> memref<1x!tpu.dma_semaphore, #tpu.memory_space<semaphore_mem>>
    %532 = tpu.memref_squeeze %531 : memref<1x!tpu.dma_semaphore, #tpu.memory_space<semaphore_mem>> -> memref<!tpu.dma_semaphore, #tpu.memory_space<semaphore_mem>>
    tpu.wait_dma2 semaphore(%532 : memref<!tpu.dma_semaphore, #tpu.memory_space<semaphore_mem>>) src(%arg11 : memref<1024x256xf32, #tpu.memory_space<any>>) dst(%arg17 : memref<1024x256xf32, #tpu.memory_space<vmem>>)
    %c0_96 = arith.constant 0 : index
    %c0_97 = arith.constant 0 : index
    %533 = vector.load %arg17[%c0_96, %c0_97] : memref<1024x256xf32, #tpu.memory_space<vmem>>, vector<1024x256xf32>
    %cst_98 = arith.constant dense<0.000000e+00> : vector<2x256xf32>
    %534 = tpu.matmul %530, %533, %cst_98 {dimension_numbers = #tpu.dot_dimension_numbers<[1], [0], [0], [1], [0, 0, 1, 1], [], []>} : vector<2x1024xf32>, vector<1024x256xf32>, vector<2x256xf32> -> vector<2x256xf32>
    %c0_99 = arith.constant 0 : index
    %c0_100 = arith.constant 0 : index
    %535 = vector.load %arg12[%c0_99, %c0_100] : memref<1x256xf32, #tpu.memory_space<vmem>>, vector<1x256xf32>
    %536 = vector.broadcast %535 : vector<1x256xf32> to vector<2x256xf32>
    %537 = arith.addf %534, %536 : vector<2x256xf32>
    %cst_101 = arith.constant 0.000000e+00 : f32
    %538 = vector.broadcast %cst_101 : f32 to vector<2x256xf32>
    %539 = arith.maximumf %537, %538 : vector<2x256xf32>
    %c0_102 = arith.constant 0 : index
    %c0_103 = arith.constant 0 : index
    %540 = vector.load %arg13[%c0_102, %c0_103] : memref<1x256xf32, #tpu.memory_space<vmem>>, vector<1x256xf32>
    %541 = vector.broadcast %540 : vector<1x256xf32> to vector<2x256xf32>
    %542 = arith.mulf %539, %541 : vector<2x256xf32>
    %cst_104 = arith.constant dense<0.000000e+00> : vector<2xf32>
    %543 = vector.multi_reduction <add>, %542, %cst_104 [1] : vector<2x256xf32> to vector<2xf32>
    %544 = vector.shape_cast %543 : vector<2xf32> to vector<2x1xf32>
    %c0_105 = arith.constant 0 : index
    %c0_106 = arith.constant 0 : index
    %545 = vector.load %arg14[%c0_105, %c0_106] : memref<1x1xf32, #tpu.memory_space<vmem>>, vector<1x1xf32>
    %546 = vector.broadcast %545 : vector<1x1xf32> to vector<2x1xf32>
    %547 = arith.addf %544, %546 : vector<2x1xf32>
    %c0_107 = arith.constant 0 : index
    %c0_108 = arith.constant 0 : index
    %548 = vector.load %arg15[%c0_107, %c0_108] : memref<2x1xf32, #tpu.memory_space<vmem>>, vector<2x1xf32>
    tpu.vector_store %arg15[%c0_107, %c0_108], %547 {strides = array<i32>} : memref<2x1xf32, #tpu.memory_space<vmem>>, vector<2x1xf32>,
    return
  }
}

</mosaic_0001>

<llo_original>
// kernel: bilstm_forward.1
$region0: #{bilstm_forward.1}
  #allocation0 [shape = 'u32[]', space=smem, size = 0x4, offset = 0x4, fixed_abs, tag = 'smem constant byte address 0x4 - core index']
  #allocation1 [shape = 'u32[72,128]{1,0:T(1,128)}', space=vmem, size = 0x9000, scoped, tag = 'internal scratch']
  #allocation2 [shape = 'f32[128,1024]{1,0:T(8,128)}', space=vmem, size = 0x80000, scoped, tag = 'scratch operand']
  #allocation3 [shape = 'f32[1024,256]{1,0:T(8,128)}', space=vmem, size = 0x100000, scoped, tag = 'scratch operand']
  #allocation4 [shape = 's32[2]{0}', space=sflag, size = 0x8, scoped, tag = 'scratch operand']
  #allocation5 [shape = 'f32[1,1]{1,0:T(1,128)S(1)}', space=vmem, size = 0x200, scoped, tag = 'scoped memory for bilstm_forward.1']
  #allocation13 [shape = 's32[]', space=sflag, size = 0x4, offset = 0, fixed_abs, tag = 'sflag constant byte address 0x0 - dummy sync flag']
  #allocation14 [shape = 's32[]', space=sflag, size = 0x4, offset = 0, fixed_abs, tag = 'sflag constant byte address 0x0 - dummy sync flag']
  #allocation15 [shape = 'u32[]', space=smem, size = 0x4, offset = 0x44, fixed_abs, tag = 'smem constant byte address 0x44 - assertion arg 0']
  #allocation16 [shape = 'u32[]', space=smem, size = 0x4, offset = 0x48, fixed_abs, tag = 'smem constant byte address 0x48 - assertion arg 1']
  #allocation17 [shape = 's32[]', space=sflag, size = 0x4, offset = 0, fixed_abs, tag = 'sflag constant byte address 0x0 - dummy sync flag']
  #allocation18 [shape = 's32[]', space=sflag, size = 0x4, offset = 0, fixed_abs, tag = 'sflag constant byte address 0x0 - dummy sync flag']
  %s0 = inlined_call_operand.vmem [shape: f32[16,8], index: 0, kind: input, shape index: {}]
  %s1 = inlined_call_operand.vmem [shape: f32[8,512], index: 1, kind: input, shape index: {}]
  %s2 = inlined_call_operand.hbm [shape: f32[128,512], index: 2, kind: input, shape index: {}]
  %s3 = inlined_call_operand.vmem [shape: f32[1,512], index: 3, kind: input, shape index: {}]
  %s4 = inlined_call_operand.hbm [shape: f32[128,256], index: 4, kind: input, shape index: {}]
  %s5 = inlined_call_operand.hbm [shape: f32[64,256], index: 5, kind: input, shape index: {}]
  %s6 = inlined_call_operand.vmem [shape: f32[1,256], index: 6, kind: input, shape index: {}]
  %s7 = inlined_call_operand.hbm [shape: f32[128,256], index: 7, kind: input, shape index: {}]
  %s8 = inlined_call_operand.vmem [shape: f32[1,256], index: 8, kind: input, shape index: {}]
  %s9 = inlined_call_operand.hbm [shape: f32[128,1024], index: 9, kind: input, shape index: {}]
  %s10 = inlined_call_operand.vmem [shape: f32[1,1024], index: 10, kind: input, shape index: {}]
  %s11 = inlined_call_operand.hbm [shape: f32[1024,256], index: 11, kind: input, shape index: {}]
  %s12 = inlined_call_operand.vmem [shape: f32[1,256], index: 12, kind: input, shape index: {}]
  %s13 = inlined_call_operand.vmem [shape: f32[1,256], index: 13, kind: input, shape index: {}]
  %s14 = inlined_call_operand.<no memory space> [shape: f32[1,1], index: 14, kind: input, shape index: {}]
  %s15 = inlined_call_operand.vmem [shape: f32[2,1], index: 15, kind: output, shape index: {}]
  %s16 = sld [smem:[#allocation0]]
  $region86: #{bilstm_forward.1} parent=0
    _
  %s18 = ssub.s32 1, %s16
  %s19 = scalar_select 0, %s18, %s16
  %v20 = vstv %s14
  %21 = vst [vmem:[#allocation5] sm:$0x1] %v20
  $region1: #{bilstm_forward.1} parent=0
    #allocation6 [shape = 'u8[262144]{0}', space=vmem, size = 0x40000, scoped, tag = 'input window, operand 2, single buffered']
    #allocation7 [shape = 's32[1]{0}', space=sflag, size = 0x4, scoped, tag = 'scoped memory for bilstm_forward.1']
    #allocation8 [shape = 'u8[131072]{0}', space=vmem, size = 0x20000, scoped, tag = 'input window, operand 4, single buffered']
    #allocation9 [shape = 's32[1]{0}', space=sflag, size = 0x4, scoped, tag = 'scoped memory for bilstm_forward.1']
    #allocation10 [shape = 'u8[65536]{0}', space=vmem, size = 0x10000, scoped, tag = 'input window, operand 5, single buffered']
    #allocation11 [shape = 'u8[131072]{0}', space=vmem, size = 0x20000, scoped, tag = 'input window, operand 7, single buffered']
    #allocation12 [shape = 's32[1]{0}', space=sflag, size = 0x4, scoped, tag = 'scoped memory for bilstm_forward.1']
    %22 = vsyncpa [#allocation7], 0
    %23 = vsyncpa [#allocation9], 0
    %24 = vsyncpa [#allocation12], 0
    // Predicated region
    $region2: #{bilstm_forward.1} parent=1 // pred_check
      _
    $region3: #{bilstm_forward.1} parent=1 // pred_check_branch
      %26 = sbr.rel (0) target = $region5
    $region4: #{bilstm_forward.1} parent=1 // pred_region
      _
    $region5: #{bilstm_forward.1} parent=1 // pred_fallthru
      _
    // Predicated region
    $region6: #{bilstm_forward.1} parent=1 // pred_check
      _
    $region7: #{bilstm_forward.1} parent=1 // pred_check_branch
      %28 = sbr.rel (0) target = $region9
    $region8: #{bilstm_forward.1} parent=1 // pred_region
      _
    $region9: #{bilstm_forward.1} parent=1 // pred_fallthru
      _
    // Predicated region
    $region10: #{bilstm_forward.1} parent=1 // pred_check
      _
    $region11: #{bilstm_forward.1} parent=1 // pred_check_branch
      %30 = sbr.rel (0) target = $region13
    $region12: #{bilstm_forward.1} parent=1 // pred_region
      %32 = vsyncadd [#allocation7], 0
      %s33 = sshll.u32 %s2, 4
      %s34 = int_to_ptr.hbm [resolvable:$true] %s33
      %s35 = sshll.u32 [#allocation6], 4
      %s36 = int_to_ptr.vmem [resolvable:$true] %s35
      %41 = dma.hbm_to_vmem [thread:$0]  %s34, 8192, %s36, [#allocation7], 512, 512, 32
    $region13: #{bilstm_forward.1} parent=1 // pred_fallthru
      _
    // Predicated region
    $region14: #{bilstm_forward.1} parent=1 // pred_check
      _
    $region15: #{bilstm_forward.1} parent=1 // pred_check_branch
      %43 = sbr.rel (0) target = $region17
    $region16: #{bilstm_forward.1} parent=1 // pred_region
      _
    $region17: #{bilstm_forward.1} parent=1 // pred_fallthru
      _
    // Predicated region
    $region18: #{bilstm_forward.1} parent=1 // pred_check
      _
    $region19: #{bilstm_forward.1} parent=1 // pred_check_branch
      %45 = sbr.rel (0) target = $region21
    $region20: #{bilstm_forward.1} parent=1 // pred_region
      %47 = vsyncadd [#allocation9], 0
      %s48 = sshll.u32 %s4, 4
      %s49 = int_to_ptr.hbm [resolvable:$true] %s48
      %s50 = sshll.u32 [#allocation8], 4
      %s51 = int_to_ptr.vmem [resolvable:$true] %s50
      %56 = dma.hbm_to_vmem [thread:$0]  %s49, 4096, %s51, [#allocation9], 256, 256, 16
    $region21: #{bilstm_forward.1} parent=1 // pred_fallthru
      _
    // Predicated region
    $region22: #{bilstm_forward.1} parent=1 // pred_check
      _
    $region23: #{bilstm_forward.1} parent=1 // pred_check_branch
      %58 = sbr.rel (0) target = $region25
    $region24: #{bilstm_forward.1} parent=1 // pred_region
      %60 = vsyncadd [#allocation9], 0
      %s61 = sshll.u32 %s5, 4
      %s62 = int_to_ptr.hbm [resolvable:$true] %s61
      %s63 = sshll.u32 [#allocation10], 4
      %s64 = int_to_ptr.vmem [resolvable:$true] %s63
      %69 = dma.hbm_to_vmem [thread:$0]  %s62, 2048, %s64, [#allocation9], 256, 256, 16
    $region25: #{bilstm_forward.1} parent=1 // pred_fallthru
      _
    // Predicated region
    $region26: #{bilstm_forward.1} parent=1 // pred_check
      _
    $region27: #{bilstm_forward.1} parent=1 // pred_check_branch
      %71 = sbr.rel (0) target = $region29
    $region28: #{bilstm_forward.1} parent=1 // pred_region
      _
    $region29: #{bilstm_forward.1} parent=1 // pred_fallthru
      _
    // Predicated region
    $region30: #{bilstm_forward.1} parent=1 // pred_check
      _
    $region31: #{bilstm_forward.1} parent=1 // pred_check_branch
      %73 = sbr.rel (0) target = $region33
    $region32: #{bilstm_forward.1} parent=1 // pred_region
      %75 = vsyncadd [#allocation12], 0
      %s76 = sshll.u32 %s7, 4
      %s77 = int_to_ptr.hbm [resolvable:$true] %s76
      %s78 = sshll.u32 [#allocation11], 4
      %s79 = int_to_ptr.vmem [resolvable:$true] %s78
      %84 = dma.hbm_to_vmem [thread:$0]  %s77, 4096, %s79, [#allocation12], 256, 256, 16
    $region33: #{bilstm_forward.1} parent=1 // pred_fallthru
      _
    // Predicated region
    $region34: #{bilstm_forward.1} parent=1 // pred_check
      _
    $region35: #{bilstm_forward.1} parent=1 // pred_check_branch
      %86 = sbr.rel (0) target = $region37
    $region36: #{bilstm_forward.1} parent=1 // pred_region
      _
    $region37: #{bilstm_forward.1} parent=1 // pred_fallthru
      _
    // Predicated region
    $region38: #{bilstm_forward.1} parent=1 // pred_check
      _
    $region39: #{bilstm_forward.1} parent=1 // pred_check_branch
      %88 = sbr.rel (0) target = $region41
    $region40: #{bilstm_forward.1} parent=1 // pred_region
      _
    $region41: #{bilstm_forward.1} parent=1 // pred_fallthru
      _
    // Predicated region
    $region42: #{bilstm_forward.1} parent=1 // pred_check
      _
    $region43: #{bilstm_forward.1} parent=1 // pred_check_branch
      %90 = sbr.rel (0) target = $region45
    $region44: #{bilstm_forward.1} parent=1 // pred_region
      _
    $region45: #{bilstm_forward.1} parent=1 // pred_fallthru
      _
    // Predicated region
    $region46: #{bilstm_forward.1} parent=1 // pred_check
      _
    $region47: #{bilstm_forward.1} parent=1 // pred_check_branch
      %92 = sbr.rel (0) target = $region49
    $region48: #{bilstm_forward.1} parent=1 // pred_region
      _
    $region49: #{bilstm_forward.1} parent=1 // pred_fallthru
      _
    // Predicated region
    $region50: #{bilstm_forward.1} parent=1 // pred_check
      _
    $region51: #{bilstm_forward.1} parent=1 // pred_check_branch
      %94 = sbr.rel (0) target = $region53
    $region52: #{bilstm_forward.1} parent=1 // pred_region
      _
    $region53: #{bilstm_forward.1} parent=1 // pred_fallthru
      _
    // Predicated region
    $region54: #{bilstm_forward.1} parent=1 // pred_check
      _
    $region55: #{bilstm_forward.1} parent=1 // pred_check_branch
      %96 = sbr.rel (0) target = $region57
    $region56: #{bilstm_forward.1} parent=1 // pred_region
      %98 = dma.done [#allocation7], 8192
    $region57: #{bilstm_forward.1} parent=1 // pred_fallthru
      _
    // Predicated region
    $region58: #{bilstm_forward.1} parent=1 // pred_check
      _
    $region59: #{bilstm_forward.1} parent=1 // pred_check_branch
      %100 = sbr.rel (0) target = $region61
    $region60: #{bilstm_forward.1} parent=1 // pred_region
      %102 = dma.done [#allocation9], 4096
    $region61: #{bilstm_forward.1} parent=1 // pred_fallthru
      _
    // Predicated region
    $region62: #{bilstm_forward.1} parent=1 // pred_check
      _
    $region63: #{bilstm_forward.1} parent=1 // pred_check_branch
      %104 = sbr.rel (0) target = $region65
    $region64: #{bilstm_forward.1} parent=1 // pred_region
      %106 = dma.done [#allocation9], 2048
    $region65: #{bilstm_forward.1} parent=1 // pred_fallthru
      _
    // Predicated region
    $region66: #{bilstm_forward.1} parent=1 // pred_check
      _
    $region67: #{bilstm_forward.1} parent=1 // pred_check_branch
      %108 = sbr.rel (0) target = $region69
    $region68: #{bilstm_forward.1} parent=1 // pred_region
      %110 = dma.done [#allocation12], 4096
    $region69: #{bilstm_forward.1} parent=1 // pred_fallthru
      _
    // Predicated region
    $region70: #{bilstm_forward.1} parent=1 // pred_check
      _
    $region71: #{bilstm_forward.1} parent=1 // pred_check_branch
      %112 = sbr.rel target = $region73
    $region72: #{bilstm_forward.1} parent=1 // pred_region
      %113 = sst [smem:[#allocation15]] [#allocation14]
      %114 = sst [smem:[#allocation16]] [#allocation13]
    $region73: #{bilstm_forward.1} parent=1 // pred_fallthru
      _
    %116 = shalt.err (0)
    %s118 = sshll.u32 %s9, 4
    %s119 = int_to_ptr.hbm [resolvable:$true] %s118
    %s120 = sshll.u32 [#allocation2], 4
    %s121 = int_to_ptr.vmem [resolvable:$true] %s120
    %123 = dma.hbm_to_vmem [thread:$0]  %s119, 16384, %s121, [#allocation4]
    %s124 = scalar_lea.sflag [#allocation4], 1
    // Predicated region
    $region74: #{bilstm_forward.1} parent=1 // pred_check
      _
    $region75: #{bilstm_forward.1} parent=1 // pred_check_branch
      %126 = sbr.rel target = $region77
    $region76: #{bilstm_forward.1} parent=1 // pred_region
      %127 = sst [smem:[#allocation15]] [#allocation18]
      %128 = sst [smem:[#allocation16]] [#allocation17]
    $region77: #{bilstm_forward.1} parent=1 // pred_fallthru
      _
    %130 = shalt.err (0)
    %s132 = sshll.u32 %s11, 4
    %s133 = int_to_ptr.hbm [resolvable:$true] %s132
    %s134 = sshll.u32 [#allocation3], 4
    %s135 = int_to_ptr.vmem [resolvable:$true] %s134
    %137 = dma.hbm_to_vmem [thread:$0]  %s133, 32768, %s135, %s124
    %v138 = vld [vmem:[%s0] sm:$0xff]
    %v139 = vld [vmem:[%s0 + $0x8] sm:$0xff]
    %v140 = vld [vmem:[%s1] sm:$0xff]
    %v141 = vld [vmem:[%s1 + $0x8] sm:$0xff]
    %v142 = vld [vmem:[%s1 + $0x10] sm:$0xff]
    %v143 = vld [vmem:[%s1 + $0x18] sm:$0xff]
    %v144 = vld [vmem:[%s3] sm:$0xf]
    %v146 = vperm.slane %v144, 0
    %v147 = vperm.slane %v144, 1
    %v148 = vperm.slane %v144, 2
    %v149 = vperm.slane %v144, 3
    %vm154 = vcmask 64512
    %v156 = vsel %vm154, %v138, 0
    %v159 = vsel %vm154, %v139, 0
    %161 = vmatpush.msra.mxu0 0.0
    %162 = vmatpush.msra.mxu0 0.0
    %163 = vmatpush.msra.mxu0 0.0
    %164 = vmatpush.msra.mxu0 0.0
    %165 = vmatpush.msra.mxu0 0.0
    %166 = vmatpush.msra.mxu0 0.0
    %167 = vmatpush.msra.mxu0 0.0
    %168 = vmatpush.msra.mxu0 0.0
    %169 = vmatpush.msra.mxu0 0.0
    %170 = vmatpush.msra.mxu0 0.0
    %171 = vmatpush.msra.mxu0 0.0
    %172 = vmatpush.msra.mxu0 0.0
    %173 = vmatpush.msra.mxu0 0.0
    %174 = vmatpush.msra.mxu0 0.0
    %175 = vmatpush.msra.mxu0 0.0
    %176 = vmatpush.msra.mxu0 %v140
    %177 = vmatmul.f32.gmra.mxu0 %v156
    %v178 = vpop.f32.mrf.mxu0
    %v179 = vadd.f32 %v146, %v178
    %180 = vmatmul.f32.gmra.mxu0 %v159
    %v181 = vpop.f32.mrf.mxu0
    %v182 = vadd.f32 %v146, %v181
    %183 = vdwg.mxu0
    %184 = vmatpush.msra.mxu0 0.0
    %185 = vmatpush.msra.mxu0 0.0
    %186 = vmatpush.msra.mxu0 0.0
    %187 = vmatpush.msra.mxu0 0.0
    %188 = vmatpush.msra.mxu0 0.0
    %189 = vmatpush.msra.mxu0 0.0
    %190 = vmatpush.msra.mxu0 0.0
    %191 = vmatpush.msra.mxu0 0.0
    %192 = vmatpush.msra.mxu0 0.0
    %193 = vmatpush.msra.mxu0 0.0
    %194 = vmatpush.msra.mxu0 0.0
    %195 = vmatpush.msra.mxu0 0.0
    %196 = vmatpush.msra.mxu0 0.0
    %197 = vmatpush.msra.mxu0 0.0
    %198 = vmatpush.msra.mxu0 0.0
    %199 = vmatpush.msra.mxu0 %v141
    %200 = vmatmul.f32.gmra.mxu0 %v156
    %v201 = vpop.f32.mrf.mxu0
    %v202 = vadd.f32 %v147, %v201
    %203 = vmatmul.f32.gmra.mxu0 %v159
    %v204 = vpop.f32.mrf.mxu0
    %v205 = vadd.f32 %v147, %v204
    %206 = vdwg.mxu0
    %207 = vmatpush.msra.mxu0 0.0
    %208 = vmatpush.msra.mxu0 0.0
    %209 = vmatpush.msra.mxu0 0.0
    %210 = vmatpush.msra.mxu0 0.0
    %211 = vmatpush.msra.mxu0 0.0
    %212 = vmatpush.msra.mxu0 0.0
    %213 = vmatpush.msra.mxu0 0.0
    %214 = vmatpush.msra.mxu0 0.0
    %215 = vmatpush.msra.mxu0 0.0
    %216 = vmatpush.msra.mxu0 0.0
    %217 = vmatpush.msra.mxu0 0.0
    %218 = vmatpush.msra.mxu0 0.0
    %219 = vmatpush.msra.mxu0 0.0
    %220 = vmatpush.msra.mxu0 0.0
    %221 = vmatpush.msra.mxu0 0.0
    %222 = vmatpush.msra.mxu0 %v142
    %223 = vmatmul.f32.gmra.mxu0 %v156
    %v224 = vpop.f32.mrf.mxu0
    %v225 = vadd.f32 %v148, %v224
    %226 = vmatmul.f32.gmra.mxu0 %v159
    %v227 = vpop.f32.mrf.mxu0
    %v228 = vadd.f32 %v148, %v227
    %229 = vdwg.mxu0
    %230 = vmatpush.msra.mxu0 0.0
    %231 = vmatpush.msra.mxu0 0.0
    %232 = vmatpush.msra.mxu0 0.0
    %233 = vmatpush.msra.mxu0 0.0
    %234 = vmatpush.msra.mxu0 0.0
    %235 = vmatpush.msra.mxu0 0.0
    %236 = vmatpush.msra.mxu0 0.0
    %237 = vmatpush.msra.mxu0 0.0
    %238 = vmatpush.msra.mxu0 0.0
    %239 = vmatpush.msra.mxu0 0.0
    %240 = vmatpush.msra.mxu0 0.0
    %241 = vmatpush.msra.mxu0 0.0
    %242 = vmatpush.msra.mxu0 0.0
    %243 = vmatpush.msra.mxu0 0.0
    %244 = vmatpush.msra.mxu0 0.0
    %245 = vmatpush.msra.mxu0 %v143
    %246 = vmatmul.f32.gmra.mxu0 %v156
    %v247 = vpop.f32.mrf.mxu0
    %v248 = vadd.f32 %v149, %v247
    %249 = vmatmul.f32.gmra.mxu0 %v159
    %v250 = vpop.f32.mrf.mxu0
    %v251 = vadd.f32 %v149, %v250
    %252 = vdwg.mxu0
    %v253 = vld [vmem:[#allocation6] sm:$0xff]
    %v254 = vld [vmem:[#allocation6 + $0x8] sm:$0xff]
    %v255 = vld [vmem:[#allocation6 + $0x10] sm:$0xff]
    %v256 = vld [vmem:[#allocation6 + $0x18] sm:$0xff]
    %v257 = vld [vmem:[#allocation6 + $0x20] sm:$0xff]
    %v258 = vld [vmem:[#allocation6 + $0x28] sm:$0xff]
    %v259 = vld [vmem:[#allocation6 + $0x30] sm:$0xff]
    %v260 = vld [vmem:[#allocation6 + $0x38] sm:$0xff]
    %v261 = vld [vmem:[#allocation6 + $0x40] sm:$0xff]
    %v262 = vld [vmem:[#allocation6 + $0x48] sm:$0xff]
    %v263 = vld [vmem:[#allocation6 + $0x50] sm:$0xff]
    %v264 = vld [vmem:[#allocation6 + $0x58] sm:$0xff]
    %v265 = vld [vmem:[#allocation6 + $0x60] sm:$0xff]
    %v266 = vld [vmem:[#allocation6 + $0x68] sm:$0xff]
    %v267 = vld [vmem:[#allocation6 + $0x70] sm:$0xff]
    %v268 = vld [vmem:[#allocation6 + $0x78] sm:$0xff]
    %v269 = vld [vmem:[#allocation6 + $0x80] sm:$0xff]
    %v270 = vld [vmem:[#allocation6 + $0x88] sm:$0xff]
    %v271 = vld [vmem:[#allocation6 + $0x90] sm:$0xff]
    %v272 = vld [vmem:[#allocation6 + $0x98] sm:$0xff]
    %v273 = vld [vmem:[#allocation6 + $0xa0] sm:$0xff]
    %v274 = vld [vmem:[#allocation6 + $0xa8] sm:$0xff]
    %v275 = vld [vmem:[#allocation6 + $0xb0] sm:$0xff]
    %v276 = vld [vmem:[#allocation6 + $0xb8] sm:$0xff]
    %v277 = vld [vmem:[#allocation6 + $0xc0] sm:$0xff]
    %v278 = vld [vmem:[#allocation6 + $0xc8] sm:$0xff]
    %v279 = vld [vmem:[#allocation6 + $0xd0] sm:$0xff]
    %v280 = vld [vmem:[#allocation6 + $0xd8] sm:$0xff]
    %v281 = vld [vmem:[#allocation6 + $0xe0] sm:$0xff]
    %v282 = vld [vmem:[#allocation6 + $0xe8] sm:$0xff]
    %v283 = vld [vmem:[#allocation6 + $0xf0] sm:$0xff]
    %v284 = vld [vmem:[#allocation6 + $0xf8] sm:$0xff]
    %v285 = vld [vmem:[#allocation6 + $0x100] sm:$0xff]
    %v286 = vld [vmem:[#allocation6 + $0x108] sm:$0xff]
    %v287 = vld [vmem:[#allocation6 + $0x110] sm:$0xff]
    %v288 = vld [vmem:[#allocation6 + $0x118] sm:$0xff]
    %v289 = vld [vmem:[#allocation6 + $0x120] sm:$0xff]
    %v290 = vld [vmem:[#allocation6 + $0x128] sm:$0xff]
    %v291 = vld [vmem:[#allocation6 + $0x130] sm:$0xff]
    %v292 = vld [vmem:[#allocation6 + $0x138] sm:$0xff]
    %v293 = vld [vmem:[#allocation6 + $0x140] sm:$0xff]
    %v294 = vld [vmem:[#allocation6 + $0x148] sm:$0xff]
    %v295 = vld [vmem:[#allocation6 + $0x150] sm:$0xff]
    %v296 = vld [vmem:[#allocation6 + $0x158] sm:$0xff]
    %v297 = vld [vmem:[#allocation6 + $0x160] sm:$0xff]
    %v298 = vld [vmem:[#allocation6 + $0x168] sm:$0xff]
    %v299 = vld [vmem:[#allocation6 + $0x170] sm:$0xff]
    %v300 = vld [vmem:[#allocation6 + $0x178] sm:$0xff]
    %v301 = vld [vmem:[#allocation6 + $0x180] sm:$0xff]
    %v302 = vld [vmem:[#allocation6 + $0x188] sm:$0xff]
    %v303 = vld [vmem:[#allocation6 + $0x190] sm:$0xff]
    %v304 = vld [vmem:[#allocation6 + $0x198] sm:$0xff]
    %v305 = vld [vmem:[#allocation6 + $0x1a0] sm:$0xff]
    %v306 = vld [vmem:[#allocation6 + $0x1a8] sm:$0xff]
    %v307 = vld [vmem:[#allocation6 + $0x1b0] sm:$0xff]
    %v308 = vld [vmem:[#allocation6 + $0x1b8] sm:$0xff]
    %v309 = vld [vmem:[#allocation6 + $0x1c0] sm:$0xff]
    %v310 = vld [vmem:[#allocation6 + $0x1c8] sm:$0xff]
    %v311 = vld [vmem:[#allocation6 + $0x1d0] sm:$0xff]
    %v312 = vld [vmem:[#allocation6 + $0x1d8] sm:$0xff]
    %v313 = vld [vmem:[#allocation6 + $0x1e0] sm:$0xff]
    %v314 = vld [vmem:[#allocation6 + $0x1e8] sm:$0xff]
    %v315 = vld [vmem:[#allocation6 + $0x1f0] sm:$0xff]
    %v316 = vld [vmem:[#allocation6 + $0x1f8] sm:$0xff]
    %v317 = vxor.u32 %v179, 2147483648
    %v318 = vmul.f32 %v317, 1.442695
    %v319 = vpow.pop %v318
    %v320 = vadd.f32 %v319, 1.0
    %v321 = vrcp.pop %v320
    %v322 = vmul.f32 %v320, %v321
    %v323 = vsub.f32 1.0, %v322
    %v324 = vmul.f32 %v321, %v323
    %v325 = vadd.f32 %v321, %v324
    %vm326 = vweird.f32 %v320
    %vm327 = vweird.f32 %v321
    %vm328 = vmor %vm326, %vm327
    %v329 = vsel %vm328, %v321, %v325
    %v330 = vand.u32 2147483647, %v320
    %vm331 = vcmp.eq.f32.partialorder %v330, 8.507059e+37
    %v332 = vand.u32 %v320, 2147483648
    %v333 = vor.u32 1.1754944e-38, %v332
    %v334 = vsel %vm331, %v333, %v329
    %v335 = vmul.f32 1.0, %v334
    %v336 = vxor.u32 %v202, 2147483648
    %v337 = vmul.f32 %v336, 1.442695
    %v338 = vpow.pop %v337
    %v339 = vadd.f32 %v338, 1.0
    %v340 = vrcp.pop %v339
    %v341 = vmul.f32 %v339, %v340
    %v342 = vsub.f32 1.0, %v341
    %v343 = vmul.f32 %v340, %v342
    %v344 = vadd.f32 %v340, %v343
    %vm345 = vweird.f32 %v339
    %vm346 = vweird.f32 %v340
    %vm347 = vmor %vm345, %vm346
    %v348 = vsel %vm347, %v340, %v344
    %v349 = vand.u32 2147483647, %v339
    %vm350 = vcmp.eq.f32.partialorder %v349, 8.507059e+37
    %v351 = vand.u32 %v339, 2147483648
    %v352 = vor.u32 1.1754944e-38, %v351
    %v353 = vsel %vm350, %v352, %v348
    %v354 = vmul.f32 1.0, %v353
    %v355 = vtanh.pop %v225
    %v356 = vxor.u32 %v248, 2147483648
    %v357 = vmul.f32 %v356, 1.442695
    %v358 = vpow.pop %v357
    %v359 = vadd.f32 %v358, 1.0
    %v360 = vrcp.pop %v359
    %v361 = vmul.f32 %v359, %v360
    %v362 = vsub.f32 1.0, %v361
    %v363 = vmul.f32 %v360, %v362
    %v364 = vadd.f32 %v360, %v363
    %vm365 = vweird.f32 %v359
    %vm366 = vweird.f32 %v360
    %vm367 = vmor %vm365, %vm366
    %v368 = vsel %vm367, %v360, %v364
    %v369 = vand.u32 2147483647, %v359
    %vm370 = vcmp.eq.f32.partialorder %v369, 8.507059e+37
    %v371 = vand.u32 %v359, 2147483648
    %v372 = vor.u32 1.1754944e-38, %v371
    %v373 = vsel %vm370, %v372, %v368
    %v374 = vmul.f32 1.0, %v373
    %v375 = vmul.f32 %v354, 0.0
    %v376 = vmul.f32 %v335, %v355
    %v377 = vadd.f32 %v375, %v376
    %v378 = vtanh.pop %v377
    %v379 = vmul.f32 %v374, %v378
    %380 = vmatpush.msra.mxu0 %v313
    %381 = vmatpush.msra.mxu0 %v309
    %382 = vmatpush.msra.mxu0 %v305
    %383 = vmatpush.msra.mxu0 %v301
    %384 = vmatpush.msra.mxu0 %v297
    %385 = vmatpush.msra.mxu0 %v293
    %386 = vmatpush.msra.mxu0 %v289
    %387 = vmatpush.msra.mxu0 %v285
    %388 = vmatpush.msra.mxu0 %v281
    %389 = vmatpush.msra.mxu0 %v277
    %390 = vmatpush.msra.mxu0 %v273
    %391 = vmatpush.msra.mxu0 %v269
    %392 = vmatpush.msra.mxu0 %v265
    %393 = vmatpush.msra.mxu0 %v261
    %394 = vmatpush.msra.mxu0 %v257
    %395 = vmatpush.msra.mxu0 %v253
    %396 = vmatmul.f32.gmra.mxu0 %v379
    %v397 = vpop.f32.mrf.mxu0
    %v398 = vadd.f32 0.0, %v397
    %399 = vdwg.mxu0
    %400 = vmatpush.msra.mxu0 %v314
    %401 = vmatpush.msra.mxu0 %v310
    %402 = vmatpush.msra.mxu0 %v306
    %403 = vmatpush.msra.mxu0 %v302
    %404 = vmatpush.msra.mxu0 %v298
    %405 = vmatpush.msra.mxu0 %v294
    %406 = vmatpush.msra.mxu0 %v290
    %407 = vmatpush.msra.mxu0 %v286
    %408 = vmatpush.msra.mxu0 %v282
    %409 = vmatpush.msra.mxu0 %v278
    %410 = vmatpush.msra.mxu0 %v274
    %411 = vmatpush.msra.mxu0 %v270
    %412 = vmatpush.msra.mxu0 %v266
    %413 = vmatpush.msra.mxu0 %v262
    %414 = vmatpush.msra.mxu0 %v258
    %415 = vmatpush.msra.mxu0 %v254
    %416 = vmatmul.f32.gmra.mxu0 %v379
    %v417 = vpop.f32.mrf.mxu0
    %v418 = vadd.f32 0.0, %v417
    %419 = vdwg.mxu0
    %420 = vmatpush.msra.mxu0 %v315
    %421 = vmatpush.msra.mxu0 %v311
    %422 = vmatpush.msra.mxu0 %v307
    %423 = vmatpush.msra.mxu0 %v303
    %424 = vmatpush.msra.mxu0 %v299
    %425 = vmatpush.msra.mxu0 %v295
    %426 = vmatpush.msra.mxu0 %v291
    %427 = vmatpush.msra.mxu0 %v287
    %428 = vmatpush.msra.mxu0 %v283
    %429 = vmatpush.msra.mxu0 %v279
    %430 = vmatpush.msra.mxu0 %v275
    %431 = vmatpush.msra.mxu0 %v271
    %432 = vmatpush.msra.mxu0 %v267
    %433 = vmatpush.msra.mxu0 %v263
    %434 = vmatpush.msra.mxu0 %v259
    %435 = vmatpush.msra.mxu0 %v255
    %436 = vmatmul.f32.gmra.mxu0 %v379
    %v437 = vpop.f32.mrf.mxu0
    %v438 = vadd.f32 0.0, %v437
    %439 = vdwg.mxu0
    %440 = vmatpush.msra.mxu0 %v316
    %441 = vmatpush.msra.mxu0 %v312
    %442 = vmatpush.msra.mxu0 %v308
    %443 = vmatpush.msra.mxu0 %v304
    %444 = vmatpush.msra.mxu0 %v300
    %445 = vmatpush.msra.mxu0 %v296
    %446 = vmatpush.msra.mxu0 %v292
    %447 = vmatpush.msra.mxu0 %v288
    %448 = vmatpush.msra.mxu0 %v284
    %449 = vmatpush.msra.mxu0 %v280
    %450 = vmatpush.msra.mxu0 %v276
    %451 = vmatpush.msra.mxu0 %v272
    %452 = vmatpush.msra.mxu0 %v268
    %453 = vmatpush.msra.mxu0 %v264
    %454 = vmatpush.msra.mxu0 %v260
    %455 = vmatpush.msra.mxu0 %v256
    %456 = vmatmul.f32.gmra.mxu0 %v379
    %v457 = vpop.f32.mrf.mxu0
    %v458 = vadd.f32 0.0, %v457
    %459 = vdwg.mxu0
    %v464 = vrot.slane %v398, 6
    %v465 = vrot.slane %v418, 6
    %v466 = vrot.slane %v438, 6
    %v467 = vrot.slane %v458, 6
    %v472 = vadd.f32 %v179, %v464
    %v473 = vadd.f32 %v202, %v465
    %v474 = vadd.f32 %v225, %v466
    %v475 = vadd.f32 %v248, %v467
    %v476 = vxor.u32 %v472, 2147483648
    %v477 = vmul.f32 %v476, 1.442695
    %v478 = vpow.pop %v477
    %v479 = vadd.f32 %v478, 1.0
    %v480 = vrcp.pop %v479
    %v481 = vmul.f32 %v479, %v480
    %v482 = vsub.f32 1.0, %v481
    %v483 = vmul.f32 %v480, %v482
    %v484 = vadd.f32 %v480, %v483
    %vm485 = vweird.f32 %v479
    %vm486 = vweird.f32 %v480
    %vm487 = vmor %vm485, %vm486
    %v488 = vsel %vm487, %v480, %v484
    %v489 = vand.u32 2147483647, %v479
    %vm490 = vcmp.eq.f32.partialorder %v489, 8.507059e+37
    %v491 = vand.u32 %v479, 2147483648
    %v492 = vor.u32 1.1754944e-38, %v491
    %v493 = vsel %vm490, %v492, %v488
    %v494 = vmul.f32 1.0, %v493
    %v495 = vxor.u32 %v473, 2147483648
    %v496 = vmul.f32 %v495, 1.442695
    %v497 = vpow.pop %v496
    %v498 = vadd.f32 %v497, 1.0
    %v499 = vrcp.pop %v498
    %v500 = vmul.f32 %v498, %v499
    %v501 = vsub.f32 1.0, %v500
    %v502 = vmul.f32 %v499, %v501
    %v503 = vadd.f32 %v499, %v502
    %vm504 = vweird.f32 %v498
    %vm505 = vweird.f32 %v499
    %vm506 = vmor %vm504, %vm505
    %v507 = vsel %vm506, %v499, %v503
    %v508 = vand.u32 2147483647, %v498
    %vm509 = vcmp.eq.f32.partialorder %v508, 8.507059e+37
    %v510 = vand.u32 %v498, 2147483648
    %v511 = vor.u32 1.1754944e-38, %v510
    %v512 = vsel %vm509, %v511, %v507
    %v513 = vmul.f32 1.0, %v512
    %v514 = vtanh.pop %v474
    %v515 = vxor.u32 %v475, 2147483648
    %v516 = vmul.f32 %v515, 1.442695
    %v517 = vpow.pop %v516
    %v518 = vadd.f32 %v517, 1.0
    %v519 = vrcp.pop %v518
    %v520 = vmul.f32 %v518, %v519
    %v521 = vsub.f32 1.0, %v520
    %v522 = vmul.f32 %v519, %v521
    %v523 = vadd.f32 %v519, %v522
    %vm524 = vweird.f32 %v518
    %vm525 = vweird.f32 %v519
    %vm526 = vmor %vm524, %vm525
    %v527 = vsel %vm526, %v519, %v523
    %v528 = vand.u32 2147483647, %v518
    %vm529 = vcmp.eq.f32.partialorder %v528, 8.507059e+37
    %v530 = vand.u32 %v518, 2147483648
    %v531 = vor.u32 1.1754944e-38, %v530
    %v532 = vsel %vm529, %v531, %v527
    %v533 = vmul.f32 1.0, %v532
    %v535 = vrot.slane %v377, 6
    %v537 = vmul.f32 %v513, %v535
    %v538 = vmul.f32 %v494, %v514
    %v539 = vadd.f32 %v537, %v538
    %v540 = vtanh.pop %v539
    %v541 = vmul.f32 %v533, %v540
    %v543 = vrot.slane %v541, 2
    %545 = vmatpush.msra.mxu0 %v313
    %546 = vmatpush.msra.mxu0 %v309
    %547 = vmatpush.msra.mxu0 %v305
    %548 = vmatpush.msra.mxu0 %v301
    %549 = vmatpush.msra.mxu0 %v297
    %550 = vmatpush.msra.mxu0 %v293
    %551 = vmatpush.msra.mxu0 %v289
    %552 = vmatpush.msra.mxu0 %v285
    %553 = vmatpush.msra.mxu0 %v281
    %554 = vmatpush.msra.mxu0 %v277
    %555 = vmatpush.msra.mxu0 %v273
    %556 = vmatpush.msra.mxu0 %v269
    %557 = vmatpush.msra.mxu0 %v265
    %558 = vmatpush.msra.mxu0 %v261
    %559 = vmatpush.msra.mxu0 %v257
    %560 = vmatpush.msra.mxu0 %v253
    %561 = vmatmul.f32.gmra.mxu0 %v543
    %v562 = vpop.f32.mrf.mxu0
    %v563 = vadd.f32 0.0, %v562
    %564 = vdwg.mxu0
    %565 = vmatpush.msra.mxu0 %v314
    %566 = vmatpush.msra.mxu0 %v310
    %567 = vmatpush.msra.mxu0 %v306
    %568 = vmatpush.msra.mxu0 %v302
    %569 = vmatpush.msra.mxu0 %v298
    %570 = vmatpush.msra.mxu0 %v294
    %571 = vmatpush.msra.mxu0 %v290
    %572 = vmatpush.msra.mxu0 %v286
    %573 = vmatpush.msra.mxu0 %v282
    %574 = vmatpush.msra.mxu0 %v278
    %575 = vmatpush.msra.mxu0 %v274
    %576 = vmatpush.msra.mxu0 %v270
    %577 = vmatpush.msra.mxu0 %v266
    %578 = vmatpush.msra.mxu0 %v262
    %579 = vmatpush.msra.mxu0 %v258
    %580 = vmatpush.msra.mxu0 %v254
    %581 = vmatmul.f32.gmra.mxu0 %v543
    %v582 = vpop.f32.mrf.mxu0
    %v583 = vadd.f32 0.0, %v582
    %584 = vdwg.mxu0
    %585 = vmatpush.msra.mxu0 %v315
    %586 = vmatpush.msra.mxu0 %v311
    %587 = vmatpush.msra.mxu0 %v307
    %588 = vmatpush.msra.mxu0 %v303
    %589 = vmatpush.msra.mxu0 %v299
    %590 = vmatpush.msra.mxu0 %v295
    %591 = vmatpush.msra.mxu0 %v291
    %592 = vmatpush.msra.mxu0 %v287
    %593 = vmatpush.msra.mxu0 %v283
    %594 = vmatpush.msra.mxu0 %v279
    %595 = vmatpush.msra.mxu0 %v275
    %596 = vmatpush.msra.mxu0 %v271
    %597 = vmatpush.msra.mxu0 %v267
    %598 = vmatpush.msra.mxu0 %v263
    %599 = vmatpush.msra.mxu0 %v259
    %600 = vmatpush.msra.mxu0 %v255
    %601 = vmatmul.f32.gmra.mxu0 %v543
    %v602 = vpop.f32.mrf.mxu0
    %v603 = vadd.f32 0.0, %v602
    %604 = vdwg.mxu0
    %605 = vmatpush.msra.mxu0 %v316
    %606 = vmatpush.msra.mxu0 %v312
    %607 = vmatpush.msra.mxu0 %v308
    %608 = vmatpush.msra.mxu0 %v304
    %609 = vmatpush.msra.mxu0 %v300
    %610 = vmatpush.msra.mxu0 %v296
    %611 = vmatpush.msra.mxu0 %v292
    %612 = vmatpush.msra.mxu0 %v288
    %613 = vmatpush.msra.mxu0 %v284
    %614 = vmatpush.msra.mxu0 %v280
    %615 = vmatpush.msra.mxu0 %v276
    %616 = vmatpush.msra.mxu0 %v272
    %617 = vmatpush.msra.mxu0 %v268
    %618 = vmatpush.msra.mxu0 %v264
    %619 = vmatpush.msra.mxu0 %v260
    %620 = vmatpush.msra.mxu0 %v256
    %621 = vmatmul.f32.gmra.mxu0 %v543
    %v622 = vpop.f32.mrf.mxu0
    %v623 = vadd.f32 0.0, %v622
    %624 = vdwg.mxu0
    %v629 = vrot.slane %v563, 4
    %v630 = vrot.slane %v583, 4
    %v631 = vrot.slane %v603, 4
    %v632 = vrot.slane %v623, 4
    %v637 = vadd.f32 %v179, %v629
    %v638 = vadd.f32 %v202, %v630
    %v639 = vadd.f32 %v225, %v631
    %v640 = vadd.f32 %v248, %v632
    %v641 = vxor.u32 %v637, 2147483648
    %v642 = vmul.f32 %v641, 1.442695
    %v643 = vpow.pop %v642
    %v644 = vadd.f32 %v643, 1.0
    %v645 = vrcp.pop %v644
    %v646 = vmul.f32 %v644, %v645
    %v647 = vsub.f32 1.0, %v646
    %v648 = vmul.f32 %v645, %v647
    %v649 = vadd.f32 %v645, %v648
    %vm650 = vweird.f32 %v644
    %vm651 = vweird.f32 %v645
    %vm652 = vmor %vm650, %vm651
    %v653 = vsel %vm652, %v645, %v649
    %v654 = vand.u32 2147483647, %v644
    %vm655 = vcmp.eq.f32.partialorder %v654, 8.507059e+37
    %v656 = vand.u32 %v644, 2147483648
    %v657 = vor.u32 1.1754944e-38, %v656
    %v658 = vsel %vm655, %v657, %v653
    %v659 = vmul.f32 1.0, %v658
    %v660 = vxor.u32 %v638, 2147483648
    %v661 = vmul.f32 %v660, 1.442695
    %v662 = vpow.pop %v661
    %v663 = vadd.f32 %v662, 1.0
    %v664 = vrcp.pop %v663
    %v665 = vmul.f32 %v663, %v664
    %v666 = vsub.f32 1.0, %v665
    %v667 = vmul.f32 %v664, %v666
    %v668 = vadd.f32 %v664, %v667
    %vm669 = vweird.f32 %v663
    %vm670 = vweird.f32 %v664
    %vm671 = vmor %vm669, %vm670
    %v672 = vsel %vm671, %v664, %v668
    %v673 = vand.u32 2147483647, %v663
    %vm674 = vcmp.eq.f32.partialorder %v673, 8.507059e+37
    %v675 = vand.u32 %v663, 2147483648
    %v676 = vor.u32 1.1754944e-38, %v675
    %v677 = vsel %vm674, %v676, %v672
    %v678 = vmul.f32 1.0, %v677
    %v679 = vtanh.pop %v639
    %v680 = vxor.u32 %v640, 2147483648
    %v681 = vmul.f32 %v680, 1.442695
    %v682 = vpow.pop %v681
    %v683 = vadd.f32 %v682, 1.0
    %v684 = vrcp.pop %v683
    %v685 = vmul.f32 %v683, %v684
    %v686 = vsub.f32 1.0, %v685
    %v687 = vmul.f32 %v684, %v686
    %v688 = vadd.f32 %v684, %v687
    %vm689 = vweird.f32 %v683
    %vm690 = vweird.f32 %v684
    %vm691 = vmor %vm689, %vm690
    %v692 = vsel %vm691, %v684, %v688
    %v693 = vand.u32 2147483647, %v683
    %vm694 = vcmp.eq.f32.partialorder %v693, 8.507059e+37
    %v695 = vand.u32 %v683, 2147483648
    %v696 = vor.u32 1.1754944e-38, %v695
    %v697 = vsel %vm694, %v696, %v692
    %v698 = vmul.f32 1.0, %v697
    %v700 = vrot.slane %v539, 6
    %v702 = vmul.f32 %v678, %v700
    %v703 = vmul.f32 %v659, %v679
    %v704 = vadd.f32 %v702, %v703
    %v705 = vtanh.pop %v704
    %v706 = vmul.f32 %v698, %v705
    %v708 = vrot.slane %v706, 4
    %710 = vmatpush.msra.mxu0 %v313
    %711 = vmatpush.msra.mxu0 %v309
    %712 = vmatpush.msra.mxu0 %v305
    %713 = vmatpush.msra.mxu0 %v301
    %714 = vmatpush.msra.mxu0 %v297
    %715 = vmatpush.msra.mxu0 %v293
    %716 = vmatpush.msra.mxu0 %v289
    %717 = vmatpush.msra.mxu0 %v285
    %718 = vmatpush.msra.mxu0 %v281
    %719 = vmatpush.msra.mxu0 %v277
    %720 = vmatpush.msra.mxu0 %v273
    %721 = vmatpush.msra.mxu0 %v269
    %722 = vmatpush.msra.mxu0 %v265
    %723 = vmatpush.msra.mxu0 %v261
    %724 = vmatpush.msra.mxu0 %v257
    %725 = vmatpush.msra.mxu0 %v253
    %726 = vmatmul.f32.gmra.mxu0 %v708
    %v727 = vpop.f32.mrf.mxu0
    %v728 = vadd.f32 0.0, %v727
    %729 = vdwg.mxu0
    %730 = vmatpush.msra.mxu0 %v314
    %731 = vmatpush.msra.mxu0 %v310
    %732 = vmatpush.msra.mxu0 %v306
    %733 = vmatpush.msra.mxu0 %v302
    %734 = vmatpush.msra.mxu0 %v298
    %735 = vmatpush.msra.mxu0 %v294
    %736 = vmatpush.msra.mxu0 %v290
    %737 = vmatpush.msra.mxu0 %v286
    %738 = vmatpush.msra.mxu0 %v282
    %739 = vmatpush.msra.mxu0 %v278
    %740 = vmatpush.msra.mxu0 %v274
    %741 = vmatpush.msra.mxu0 %v270
    %742 = vmatpush.msra.mxu0 %v266
    %743 = vmatpush.msra.mxu0 %v262
    %744 = vmatpush.msra.mxu0 %v258
    %745 = vmatpush.msra.mxu0 %v254
    %746 = vmatmul.f32.gmra.mxu0 %v708
    %v747 = vpop.f32.mrf.mxu0
    %v748 = vadd.f32 0.0, %v747
    %749 = vdwg.mxu0
    %750 = vmatpush.msra.mxu0 %v315
    %751 = vmatpush.msra.mxu0 %v311
    %752 = vmatpush.msra.mxu0 %v307
    %753 = vmatpush.msra.mxu0 %v303
    %754 = vmatpush.msra.mxu0 %v299
    %755 = vmatpush.msra.mxu0 %v295
    %756 = vmatpush.msra.mxu0 %v291
    %757 = vmatpush.msra.mxu0 %v287
    %758 = vmatpush.msra.mxu0 %v283
    %759 = vmatpush.msra.mxu0 %v279
    %760 = vmatpush.msra.mxu0 %v275
    %761 = vmatpush.msra.mxu0 %v271
    %762 = vmatpush.msra.mxu0 %v267
    %763 = vmatpush.msra.mxu0 %v263
    %764 = vmatpush.msra.mxu0 %v259
    %765 = vmatpush.msra.mxu0 %v255
    %766 = vmatmul.f32.gmra.mxu0 %v708
    %v767 = vpop.f32.mrf.mxu0
    %v768 = vadd.f32 0.0, %v767
    %769 = vdwg.mxu0
    %770 = vmatpush.msra.mxu0 %v316
    %771 = vmatpush.msra.mxu0 %v312
    %772 = vmatpush.msra.mxu0 %v308
    %773 = vmatpush.msra.mxu0 %v304
    %774 = vmatpush.msra.mxu0 %v300
    %775 = vmatpush.msra.mxu0 %v296
    %776 = vmatpush.msra.mxu0 %v292
    %777 = vmatpush.msra.mxu0 %v288
    %778 = vmatpush.msra.mxu0 %v284
    %779 = vmatpush.msra.mxu0 %v280
    %780 = vmatpush.msra.mxu0 %v276
    %781 = vmatpush.msra.mxu0 %v272
    %782 = vmatpush.msra.mxu0 %v268
    %783 = vmatpush.msra.mxu0 %v264
    %784 = vmatpush.msra.mxu0 %v260
    %785 = vmatpush.msra.mxu0 %v256
    %786 = vmatmul.f32.gmra.mxu0 %v708
    %v787 = vpop.f32.mrf.mxu0
    %v788 = vadd.f32 0.0, %v787
    %789 = vdwg.mxu0
    %v794 = vrot.slane %v728, 2
    %v795 = vrot.slane %v748, 2
    %v796 = vrot.slane %v768, 2
    %v797 = vrot.slane %v788, 2
    %v802 = vadd.f32 %v179, %v794
    %v803 = vadd.f32 %v202, %v795
    %v804 = vadd.f32 %v225, %v796
    %v805 = vadd.f32 %v248, %v797
    %v806 = vxor.u32 %v802, 2147483648
    %v807 = vmul.f32 %v806, 1.442695
    %v808 = vpow.pop %v807
    %v809 = vadd.f32 %v808, 1.0
    %v810 = vrcp.pop %v809
    %v811 = vmul.f32 %v809, %v810
    %v812 = vsub.f32 1.0, %v811
    %v813 = vmul.f32 %v810, %v812
    %v814 = vadd.f32 %v810, %v813
    %vm815 = vweird.f32 %v809
    %vm816 = vweird.f32 %v810
    %vm817 = vmor %vm815, %vm816
    %v818 = vsel %vm817, %v810, %v814
    %v819 = vand.u32 2147483647, %v809
    %vm820 = vcmp.eq.f32.partialorder %v819, 8.507059e+37
    %v821 = vand.u32 %v809, 2147483648
    %v822 = vor.u32 1.1754944e-38, %v821
    %v823 = vsel %vm820, %v822, %v818
    %v824 = vmul.f32 1.0, %v823
    %v825 = vxor.u32 %v803, 2147483648
    %v826 = vmul.f32 %v825, 1.442695
    %v827 = vpow.pop %v826
    %v828 = vadd.f32 %v827, 1.0
    %v829 = vrcp.pop %v828
    %v830 = vmul.f32 %v828, %v829
    %v831 = vsub.f32 1.0, %v830
    %v832 = vmul.f32 %v829, %v831
    %v833 = vadd.f32 %v829, %v832
    %vm834 = vweird.f32 %v828
    %vm835 = vweird.f32 %v829
    %vm836 = vmor %vm834, %vm835
    %v837 = vsel %vm836, %v829, %v833
    %v838 = vand.u32 2147483647, %v828
    %vm839 = vcmp.eq.f32.partialorder %v838, 8.507059e+37
    %v840 = vand.u32 %v828, 2147483648
    %v841 = vor.u32 1.1754944e-38, %v840
    %v842 = vsel %vm839, %v841, %v837
    %v843 = vmul.f32 1.0, %v842
    %v844 = vtanh.pop %v804
    %v845 = vxor.u32 %v805, 2147483648
    %v846 = vmul.f32 %v845, 1.442695
    %v847 = vpow.pop %v846
    %v848 = vadd.f32 %v847, 1.0
    %v849 = vrcp.pop %v848
    %v850 = vmul.f32 %v848, %v849
    %v851 = vsub.f32 1.0, %v850
    %v852 = vmul.f32 %v849, %v851
    %v853 = vadd.f32 %v849, %v852
    %vm854 = vweird.f32 %v848
    %vm855 = vweird.f32 %v849
    %vm856 = vmor %vm854, %vm855
    %v857 = vsel %vm856, %v849, %v853
    %v858 = vand.u32 2147483647, %v848
    %vm859 = vcmp.eq.f32.partialorder %v858, 8.507059e+37
    %v860 = vand.u32 %v848, 2147483648
    %v861 = vor.u32 1.1754944e-38, %v860
    %v862 = vsel %vm859, %v861, %v857
    %v863 = vmul.f32 1.0, %v862
    %v865 = vrot.slane %v704, 6
    %v867 = vmul.f32 %v843, %v865
    %v868 = vmul.f32 %v824, %v844
    %v869 = vadd.f32 %v867, %v868
    %v870 = vtanh.pop %v869
    %v871 = vmul.f32 %v863, %v870
    %v873 = vrot.slane %v871, 6
    %875 = vmatpush.msra.mxu0 %v313
    %876 = vmatpush.msra.mxu0 %v309
    %877 = vmatpush.msra.mxu0 %v305
    %878 = vmatpush.msra.mxu0 %v301
    %879 = vmatpush.msra.mxu0 %v297
    %880 = vmatpush.msra.mxu0 %v293
    %881 = vmatpush.msra.mxu0 %v289
    %882 = vmatpush.msra.mxu0 %v285
    %883 = vmatpush.msra.mxu0 %v281
    %884 = vmatpush.msra.mxu0 %v277
    %885 = vmatpush.msra.mxu0 %v273
    %886 = vmatpush.msra.mxu0 %v269
    %887 = vmatpush.msra.mxu0 %v265
    %888 = vmatpush.msra.mxu0 %v261
    %889 = vmatpush.msra.mxu0 %v257
    %890 = vmatpush.msra.mxu0 %v253
    %891 = vmatmul.f32.gmra.mxu0 %v873
    %v892 = vpop.f32.mrf.mxu0
    %v893 = vadd.f32 0.0, %v892
    %894 = vdwg.mxu0
    %895 = vmatpush.msra.mxu0 %v314
    %896 = vmatpush.msra.mxu0 %v310
    %897 = vmatpush.msra.mxu0 %v306
    %898 = vmatpush.msra.mxu0 %v302
    %899 = vmatpush.msra.mxu0 %v298
    %900 = vmatpush.msra.mxu0 %v294
    %901 = vmatpush.msra.mxu0 %v290
    %902 = vmatpush.msra.mxu0 %v286
    %903 = vmatpush.msra.mxu0 %v282
    %904 = vmatpush.msra.mxu0 %v278
    %905 = vmatpush.msra.mxu0 %v274
    %906 = vmatpush.msra.mxu0 %v270
    %907 = vmatpush.msra.mxu0 %v266
    %908 = vmatpush.msra.mxu0 %v262
    %909 = vmatpush.msra.mxu0 %v258
    %910 = vmatpush.msra.mxu0 %v254
    %911 = vmatmul.f32.gmra.mxu0 %v873
    %v912 = vpop.f32.mrf.mxu0
    %v913 = vadd.f32 0.0, %v912
    %914 = vdwg.mxu0
    %915 = vmatpush.msra.mxu0 %v315
    %916 = vmatpush.msra.mxu0 %v311
    %917 = vmatpush.msra.mxu0 %v307
    %918 = vmatpush.msra.mxu0 %v303
    %919 = vmatpush.msra.mxu0 %v299
    %920 = vmatpush.msra.mxu0 %v295
    %921 = vmatpush.msra.mxu0 %v291
    %922 = vmatpush.msra.mxu0 %v287
    %923 = vmatpush.msra.mxu0 %v283
    %924 = vmatpush.msra.mxu0 %v279
    %925 = vmatpush.msra.mxu0 %v275
    %926 = vmatpush.msra.mxu0 %v271
    %927 = vmatpush.msra.mxu0 %v267
    %928 = vmatpush.msra.mxu0 %v263
    %929 = vmatpush.msra.mxu0 %v259
    %930 = vmatpush.msra.mxu0 %v255
    %931 = vmatmul.f32.gmra.mxu0 %v873
    %v932 = vpop.f32.mrf.mxu0
    %v933 = vadd.f32 0.0, %v932
    %934 = vdwg.mxu0
    %935 = vmatpush.msra.mxu0 %v316
    %936 = vmatpush.msra.mxu0 %v312
    %937 = vmatpush.msra.mxu0 %v308
    %938 = vmatpush.msra.mxu0 %v304
    %939 = vmatpush.msra.mxu0 %v300
    %940 = vmatpush.msra.mxu0 %v296
    %941 = vmatpush.msra.mxu0 %v292
    %942 = vmatpush.msra.mxu0 %v288
    %943 = vmatpush.msra.mxu0 %v284
    %944 = vmatpush.msra.mxu0 %v280
    %945 = vmatpush.msra.mxu0 %v276
    %946 = vmatpush.msra.mxu0 %v272
    %947 = vmatpush.msra.mxu0 %v268
    %948 = vmatpush.msra.mxu0 %v264
    %949 = vmatpush.msra.mxu0 %v260
    %950 = vmatpush.msra.mxu0 %v256
    %951 = vmatmul.f32.gmra.mxu0 %v873
    %v952 = vpop.f32.mrf.mxu0
    %v953 = vadd.f32 0.0, %v952
    %954 = vdwg.mxu0
    %v955 = vadd.f32 %v182, %v893
    %v956 = vadd.f32 %v205, %v913
    %v957 = vadd.f32 %v228, %v933
    %v958 = vadd.f32 %v251, %v953
    %v959 = vxor.u32 %v955, 2147483648
    %v960 = vmul.f32 %v959, 1.442695
    %v961 = vpow.pop %v960
    %v962 = vadd.f32 %v961, 1.0
    %v963 = vrcp.pop %v962
    %v964 = vmul.f32 %v962, %v963
    %v965 = vsub.f32 1.0, %v964
    %v966 = vmul.f32 %v963, %v965
    %v967 = vadd.f32 %v963, %v966
    %vm968 = vweird.f32 %v962
    %vm969 = vweird.f32 %v963
    %vm970 = vmor %vm968, %vm969
    %v971 = vsel %vm970, %v963, %v967
    %v972 = vand.u32 2147483647, %v962
    %vm973 = vcmp.eq.f32.partialorder %v972, 8.507059e+37
    %v974 = vand.u32 %v962, 2147483648
    %v975 = vor.u32 1.1754944e-38, %v974
    %v976 = vsel %vm973, %v975, %v971
    %v977 = vmul.f32 1.0, %v976
    %v978 = vxor.u32 %v956, 2147483648
    %v979 = vmul.f32 %v978, 1.442695
    %v980 = vpow.pop %v979
    %v981 = vadd.f32 %v980, 1.0
    %v982 = vrcp.pop %v981
    %v983 = vmul.f32 %v981, %v982
    %v984 = vsub.f32 1.0, %v983
    %v985 = vmul.f32 %v982, %v984
    %v986 = vadd.f32 %v982, %v985
    %vm987 = vweird.f32 %v981
    %vm988 = vweird.f32 %v982
    %vm989 = vmor %vm987, %vm988
    %v990 = vsel %vm989, %v982, %v986
    %v991 = vand.u32 2147483647, %v981
    %vm992 = vcmp.eq.f32.partialorder %v991, 8.507059e+37
    %v993 = vand.u32 %v981, 2147483648
    %v994 = vor.u32 1.1754944e-38, %v993
    %v995 = vsel %vm992, %v994, %v990
    %v996 = vmul.f32 1.0, %v995
    %v997 = vtanh.pop %v957
    %v998 = vxor.u32 %v958, 2147483648
    %v999 = vmul.f32 %v998, 1.442695
    %v1000 = vpow.pop %v999
    %v1001 = vadd.f32 %v1000, 1.0
    %v1002 = vrcp.pop %v1001
    %v1003 = vmul.f32 %v1001, %v1002
    %v1004 = vsub.f32 1.0, %v1003
    %v1005 = vmul.f32 %v1002, %v1004
    %v1006 = vadd.f32 %v1002, %v1005
    %vm1007 = vweird.f32 %v1001
    %vm1008 = vweird.f32 %v1002
    %vm1009 = vmor %vm1007, %vm1008
    %v1010 = vsel %vm1009, %v1002, %v1006
    %v1011 = vand.u32 2147483647, %v1001
    %vm1012 = vcmp.eq.f32.partialorder %v1011, 8.507059e+37
    %v1013 = vand.u32 %v1001, 2147483648
    %v1014 = vor.u32 1.1754944e-38, %v1013
    %v1015 = vsel %vm1012, %v1014, %v1010
    %v1016 = vmul.f32 1.0, %v1015
    %v1018 = vrot.slane %v869, 6
    %v1020 = vmul.f32 %v996, %v1018
    %v1021 = vmul.f32 %v977, %v997
    %v1022 = vadd.f32 %v1020, %v1021
    %v1023 = vtanh.pop %v1022
    %v1024 = vmul.f32 %v1016, %v1023
    %1025 = vmatpush.msra.mxu0 %v313
    %1026 = vmatpush.msra.mxu0 %v309
    %1027 = vmatpush.msra.mxu0 %v305
    %1028 = vmatpush.msra.mxu0 %v301
    %1029 = vmatpush.msra.mxu0 %v297
    %1030 = vmatpush.msra.mxu0 %v293
    %1031 = vmatpush.msra.mxu0 %v289
    %1032 = vmatpush.msra.mxu0 %v285
    %1033 = vmatpush.msra.mxu0 %v281
    %1034 = vmatpush.msra.mxu0 %v277
    %1035 = vmatpush.msra.mxu0 %v273
    %1036 = vmatpush.msra.mxu0 %v269
    %1037 = vmatpush.msra.mxu0 %v265
    %1038 = vmatpush.msra.mxu0 %v261
    %1039 = vmatpush.msra.mxu0 %v257
    %1040 = vmatpush.msra.mxu0 %v253
    %1041 = vmatmul.f32.gmra.mxu0 %v1024
    %v1042 = vpop.f32.mrf.mxu0
    %v1043 = vadd.f32 0.0, %v1042
    %1044 = vdwg.mxu0
    %1045 = vmatpush.msra.mxu0 %v314
    %1046 = vmatpush.msra.mxu0 %v310
    %1047 = vmatpush.msra.mxu0 %v306
    %1048 = vmatpush.msra.mxu0 %v302
    %1049 = vmatpush.msra.mxu0 %v298
    %1050 = vmatpush.msra.mxu0 %v294
    %1051 = vmatpush.msra.mxu0 %v290
    %1052 = vmatpush.msra.mxu0 %v286
    %1053 = vmatpush.msra.mxu0 %v282
    %1054 = vmatpush.msra.mxu0 %v278
    %1055 = vmatpush.msra.mxu0 %v274
    %1056 = vmatpush.msra.mxu0 %v270
    %1057 = vmatpush.msra.mxu0 %v266
    %1058 = vmatpush.msra.mxu0 %v262
    %1059 = vmatpush.msra.mxu0 %v258
    %1060 = vmatpush.msra.mxu0 %v254
    %1061 = vmatmul.f32.gmra.mxu0 %v1024
    %v1062 = vpop.f32.mrf.mxu0
    %v1063 = vadd.f32 0.0, %v1062
    %1064 = vdwg.mxu0
    %1065 = vmatpush.msra.mxu0 %v315
    %1066 = vmatpush.msra.mxu0 %v311
    %1067 = vmatpush.msra.mxu0 %v307
    %1068 = vmatpush.msra.mxu0 %v303
    %1069 = vmatpush.msra.mxu0 %v299
    %1070 = vmatpush.msra.mxu0 %v295
    %1071 = vmatpush.msra.mxu0 %v291
    %1072 = vmatpush.msra.mxu0 %v287
    %1073 = vmatpush.msra.mxu0 %v283
    %1074 = vmatpush.msra.mxu0 %v279
    %1075 = vmatpush.msra.mxu0 %v275
    %1076 = vmatpush.msra.mxu0 %v271
    %1077 = vmatpush.msra.mxu0 %v267
    %1078 = vmatpush.msra.mxu0 %v263
    %1079 = vmatpush.msra.mxu0 %v259
    %1080 = vmatpush.msra.mxu0 %v255
    %1081 = vmatmul.f32.gmra.mxu0 %v1024
    %v1082 = vpop.f32.mrf.mxu0
    %v1083 = vadd.f32 0.0, %v1082
    %1084 = vdwg.mxu0
    %1085 = vmatpush.msra.mxu0 %v316
    %1086 = vmatpush.msra.mxu0 %v312
    %1087 = vmatpush.msra.mxu0 %v308
    %1088 = vmatpush.msra.mxu0 %v304
    %1089 = vmatpush.msra.mxu0 %v300
    %1090 = vmatpush.msra.mxu0 %v296
    %1091 = vmatpush.msra.mxu0 %v292
    %1092 = vmatpush.msra.mxu0 %v288
    %1093 = vmatpush.msra.mxu0 %v284
    %1094 = vmatpush.msra.mxu0 %v280
    %1095 = vmatpush.msra.mxu0 %v276
    %1096 = vmatpush.msra.mxu0 %v272
    %1097 = vmatpush.msra.mxu0 %v268
    %1098 = vmatpush.msra.mxu0 %v264
    %1099 = vmatpush.msra.mxu0 %v260
    %1100 = vmatpush.msra.mxu0 %v256
    %1101 = vmatmul.f32.gmra.mxu0 %v1024
    %v1102 = vpop.f32.mrf.mxu0
    %v1103 = vadd.f32 0.0, %v1102
    %1104 = vdwg.mxu0
    %v1109 = vrot.slane %v1043, 6
    %v1110 = vrot.slane %v1063, 6
    %v1111 = vrot.slane %v1083, 6
    %v1112 = vrot.slane %v1103, 6
    %v1117 = vadd.f32 %v182, %v1109
    %v1118 = vadd.f32 %v205, %v1110
    %v1119 = vadd.f32 %v228, %v1111
    %v1120 = vadd.f32 %v251, %v1112
    %v1121 = vxor.u32 %v1117, 2147483648
    %v1122 = vmul.f32 %v1121, 1.442695
    %v1123 = vpow.pop %v1122
    %v1124 = vadd.f32 %v1123, 1.0
    %v1125 = vrcp.pop %v1124
    %v1126 = vmul.f32 %v1124, %v1125
    %v1127 = vsub.f32 1.0, %v1126
    %v1128 = vmul.f32 %v1125, %v1127
    %v1129 = vadd.f32 %v1125, %v1128
    %vm1130 = vweird.f32 %v1124
    %vm1131 = vweird.f32 %v1125
    %vm1132 = vmor %vm1130, %vm1131
    %v1133 = vsel %vm1132, %v1125, %v1129
    %v1134 = vand.u32 2147483647, %v1124
    %vm1135 = vcmp.eq.f32.partialorder %v1134, 8.507059e+37
    %v1136 = vand.u32 %v1124, 2147483648
    %v1137 = vor.u32 1.1754944e-38, %v1136
    %v1138 = vsel %vm1135, %v1137, %v1133
    %v1139 = vmul.f32 1.0, %v1138
    %v1140 = vxor.u32 %v1118, 2147483648
    %v1141 = vmul.f32 %v1140, 1.442695
    %v1142 = vpow.pop %v1141
    %v1143 = vadd.f32 %v1142, 1.0
    %v1144 = vrcp.pop %v1143
    %v1145 = vmul.f32 %v1143, %v1144
    %v1146 = vsub.f32 1.0, %v1145
    %v1147 = vmul.f32 %v1144, %v1146
    %v1148 = vadd.f32 %v1144, %v1147
    %vm1149 = vweird.f32 %v1143
    %vm1150 = vweird.f32 %v1144
    %vm1151 = vmor %vm1149, %vm1150
    %v1152 = vsel %vm1151, %v1144, %v1148
    %v1153 = vand.u32 2147483647, %v1143
    %vm1154 = vcmp.eq.f32.partialorder %v1153, 8.507059e+37
    %v1155 = vand.u32 %v1143, 2147483648
    %v1156 = vor.u32 1.1754944e-38, %v1155
    %v1157 = vsel %vm1154, %v1156, %v1152
    %v1158 = vmul.f32 1.0, %v1157
    %v1159 = vtanh.pop %v1119
    %v1160 = vxor.u32 %v1120, 2147483648
    %v1161 = vmul.f32 %v1160, 1.442695
    %v1162 = vpow.pop %v1161
    %v1163 = vadd.f32 %v1162, 1.0
    %v1164 = vrcp.pop %v1163
    %v1165 = vmul.f32 %v1163, %v1164
    %v1166 = vsub.f32 1.0, %v1165
    %v1167 = vmul.f32 %v1164, %v1166
    %v1168 = vadd.f32 %v1164, %v1167
    %vm1169 = vweird.f32 %v1163
    %vm1170 = vweird.f32 %v1164
    %vm1171 = vmor %vm1169, %vm1170
    %v1172 = vsel %vm1171, %v1164, %v1168
    %v1173 = vand.u32 2147483647, %v1163
    %vm1174 = vcmp.eq.f32.partialorder %v1173, 8.507059e+37
    %v1175 = vand.u32 %v1163, 2147483648
    %v1176 = vor.u32 1.1754944e-38, %v1175
    %v1177 = vsel %vm1174, %v1176, %v1172
    %v1178 = vmul.f32 1.0, %v1177
    %v1180 = vrot.slane %v1022, 6
    %v1182 = vmul.f32 %v1158, %v1180
    %v1183 = vmul.f32 %v1139, %v1159
    %v1184 = vadd.f32 %v1182, %v1183
    %v1185 = vtanh.pop %v1184
    %v1186 = vmul.f32 %v1178, %v1185
    %v1188 = vrot.slane %v1186, 2
    %1190 = vmatpush.msra.mxu0 %v313
    %1191 = vmatpush.msra.mxu0 %v309
    %1192 = vmatpush.msra.mxu0 %v305
    %1193 = vmatpush.msra.mxu0 %v301
    %1194 = vmatpush.msra.mxu0 %v297
    %1195 = vmatpush.msra.mxu0 %v293
    %1196 = vmatpush.msra.mxu0 %v289
    %1197 = vmatpush.msra.mxu0 %v285
    %1198 = vmatpush.msra.mxu0 %v281
    %1199 = vmatpush.msra.mxu0 %v277
    %1200 = vmatpush.msra.mxu0 %v273
    %1201 = vmatpush.msra.mxu0 %v269
    %1202 = vmatpush.msra.mxu0 %v265
    %1203 = vmatpush.msra.mxu0 %v261
    %1204 = vmatpush.msra.mxu0 %v257
    %1205 = vmatpush.msra.mxu0 %v253
    %1206 = vmatmul.f32.gmra.mxu0 %v1188
    %v1207 = vpop.f32.mrf.mxu0
    %v1208 = vadd.f32 0.0, %v1207
    %1209 = vdwg.mxu0
    %1210 = vmatpush.msra.mxu0 %v314
    %1211 = vmatpush.msra.mxu0 %v310
    %1212 = vmatpush.msra.mxu0 %v306
    %1213 = vmatpush.msra.mxu0 %v302
    %1214 = vmatpush.msra.mxu0 %v298
    %1215 = vmatpush.msra.mxu0 %v294
    %1216 = vmatpush.msra.mxu0 %v290
    %1217 = vmatpush.msra.mxu0 %v286
    %1218 = vmatpush.msra.mxu0 %v282
    %1219 = vmatpush.msra.mxu0 %v278
    %1220 = vmatpush.msra.mxu0 %v274
    %1221 = vmatpush.msra.mxu0 %v270
    %1222 = vmatpush.msra.mxu0 %v266
    %1223 = vmatpush.msra.mxu0 %v262
    %1224 = vmatpush.msra.mxu0 %v258
    %1225 = vmatpush.msra.mxu0 %v254
    %1226 = vmatmul.f32.gmra.mxu0 %v1188
    %v1227 = vpop.f32.mrf.mxu0
    %v1228 = vadd.f32 0.0, %v1227
    %1229 = vdwg.mxu0
    %1230 = vmatpush.msra.mxu0 %v315
    %1231 = vmatpush.msra.mxu0 %v311
    %1232 = vmatpush.msra.mxu0 %v307
    %1233 = vmatpush.msra.mxu0 %v303
    %1234 = vmatpush.msra.mxu0 %v299
    %1235 = vmatpush.msra.mxu0 %v295
    %1236 = vmatpush.msra.mxu0 %v291
    %1237 = vmatpush.msra.mxu0 %v287
    %1238 = vmatpush.msra.mxu0 %v283
    %1239 = vmatpush.msra.mxu0 %v279
    %1240 = vmatpush.msra.mxu0 %v275
    %1241 = vmatpush.msra.mxu0 %v271
    %1242 = vmatpush.msra.mxu0 %v267
    %1243 = vmatpush.msra.mxu0 %v263
    %1244 = vmatpush.msra.mxu0 %v259
    %1245 = vmatpush.msra.mxu0 %v255
    %1246 = vmatmul.f32.gmra.mxu0 %v1188
    %v1247 = vpop.f32.mrf.mxu0
    %v1248 = vadd.f32 0.0, %v1247
    %1249 = vdwg.mxu0
    %1250 = vmatpush.msra.mxu0 %v316
    %1251 = vmatpush.msra.mxu0 %v312
    %1252 = vmatpush.msra.mxu0 %v308
    %1253 = vmatpush.msra.mxu0 %v304
    %1254 = vmatpush.msra.mxu0 %v300
    %1255 = vmatpush.msra.mxu0 %v296
    %1256 = vmatpush.msra.mxu0 %v292
    %1257 = vmatpush.msra.mxu0 %v288
    %1258 = vmatpush.msra.mxu0 %v284
    %1259 = vmatpush.msra.mxu0 %v280
    %1260 = vmatpush.msra.mxu0 %v276
    %1261 = vmatpush.msra.mxu0 %v272
    %1262 = vmatpush.msra.mxu0 %v268
    %1263 = vmatpush.msra.mxu0 %v264
    %1264 = vmatpush.msra.mxu0 %v260
    %1265 = vmatpush.msra.mxu0 %v256
    %1266 = vmatmul.f32.gmra.mxu0 %v1188
    %v1267 = vpop.f32.mrf.mxu0
    %v1268 = vadd.f32 0.0, %v1267
    %1269 = vdwg.mxu0
    %v1274 = vrot.slane %v1208, 4
    %v1275 = vrot.slane %v1228, 4
    %v1276 = vrot.slane %v1248, 4
    %v1277 = vrot.slane %v1268, 4
    %v1282 = vadd.f32 %v182, %v1274
    %v1283 = vadd.f32 %v205, %v1275
    %v1284 = vadd.f32 %v228, %v1276
    %v1285 = vadd.f32 %v251, %v1277
    %v1286 = vxor.u32 %v1282, 2147483648
    %v1287 = vmul.f32 %v1286, 1.442695
    %v1288 = vpow.pop %v1287
    %v1289 = vadd.f32 %v1288, 1.0
    %v1290 = vrcp.pop %v1289
    %v1291 = vmul.f32 %v1289, %v1290
    %v1292 = vsub.f32 1.0, %v1291
    %v1293 = vmul.f32 %v1290, %v1292
    %v1294 = vadd.f32 %v1290, %v1293
    %vm1295 = vweird.f32 %v1289
    %vm1296 = vweird.f32 %v1290
    %vm1297 = vmor %vm1295, %vm1296
    %v1298 = vsel %vm1297, %v1290, %v1294
    %v1299 = vand.u32 2147483647, %v1289
    %vm1300 = vcmp.eq.f32.partialorder %v1299, 8.507059e+37
    %v1301 = vand.u32 %v1289, 2147483648
    %v1302 = vor.u32 1.1754944e-38, %v1301
    %v1303 = vsel %vm1300, %v1302, %v1298
    %v1304 = vmul.f32 1.0, %v1303
    %v1305 = vxor.u32 %v1283, 2147483648
    %v1306 = vmul.f32 %v1305, 1.442695
    %v1307 = vpow.pop %v1306
    %v1308 = vadd.f32 %v1307, 1.0
    %v1309 = vrcp.pop %v1308
    %v1310 = vmul.f32 %v1308, %v1309
    %v1311 = vsub.f32 1.0, %v1310
    %v1312 = vmul.f32 %v1309, %v1311
    %v1313 = vadd.f32 %v1309, %v1312
    %vm1314 = vweird.f32 %v1308
    %vm1315 = vweird.f32 %v1309
    %vm1316 = vmor %vm1314, %vm1315
    %v1317 = vsel %vm1316, %v1309, %v1313
    %v1318 = vand.u32 2147483647, %v1308
    %vm1319 = vcmp.eq.f32.partialorder %v1318, 8.507059e+37
    %v1320 = vand.u32 %v1308, 2147483648
    %v1321 = vor.u32 1.1754944e-38, %v1320
    %v1322 = vsel %vm1319, %v1321, %v1317
    %v1323 = vmul.f32 1.0, %v1322
    %v1324 = vtanh.pop %v1284
    %v1325 = vxor.u32 %v1285, 2147483648
    %v1326 = vmul.f32 %v1325, 1.442695
    %v1327 = vpow.pop %v1326
    %v1328 = vadd.f32 %v1327, 1.0
    %v1329 = vrcp.pop %v1328
    %v1330 = vmul.f32 %v1328, %v1329
    %v1331 = vsub.f32 1.0, %v1330
    %v1332 = vmul.f32 %v1329, %v1331
    %v1333 = vadd.f32 %v1329, %v1332
    %vm1334 = vweird.f32 %v1328
    %vm1335 = vweird.f32 %v1329
    %vm1336 = vmor %vm1334, %vm1335
    %v1337 = vsel %vm1336, %v1329, %v1333
    %v1338 = vand.u32 2147483647, %v1328
    %vm1339 = vcmp.eq.f32.partialorder %v1338, 8.507059e+37
    %v1340 = vand.u32 %v1328, 2147483648
    %v1341 = vor.u32 1.1754944e-38, %v1340
    %v1342 = vsel %vm1339, %v1341, %v1337
    %v1343 = vmul.f32 1.0, %v1342
    %v1345 = vrot.slane %v1184, 6
    %v1347 = vmul.f32 %v1323, %v1345
    %v1348 = vmul.f32 %v1304, %v1324
    %v1349 = vadd.f32 %v1347, %v1348
    %v1350 = vtanh.pop %v1349
    %v1351 = vmul.f32 %v1343, %v1350
    %v1353 = vrot.slane %v1351, 4
    %1355 = vmatpush.msra.mxu0 %v313
    %1356 = vmatpush.msra.mxu0 %v309
    %1357 = vmatpush.msra.mxu0 %v305
    %1358 = vmatpush.msra.mxu0 %v301
    %1359 = vmatpush.msra.mxu0 %v297
    %1360 = vmatpush.msra.mxu0 %v293
    %1361 = vmatpush.msra.mxu0 %v289
    %1362 = vmatpush.msra.mxu0 %v285
    %1363 = vmatpush.msra.mxu0 %v281
    %1364 = vmatpush.msra.mxu0 %v277
    %1365 = vmatpush.msra.mxu0 %v273
    %1366 = vmatpush.msra.mxu0 %v269
    %1367 = vmatpush.msra.mxu0 %v265
    %1368 = vmatpush.msra.mxu0 %v261
    %1369 = vmatpush.msra.mxu0 %v257
    %1370 = vmatpush.msra.mxu0 %v253
    %1371 = vmatmul.f32.gmra.mxu0 %v1353
    %v1372 = vpop.f32.mrf.mxu0
    %v1373 = vadd.f32 0.0, %v1372
    %1374 = vdwg.mxu0
    %1375 = vmatpush.msra.mxu0 %v314
    %1376 = vmatpush.msra.mxu0 %v310
    %1377 = vmatpush.msra.mxu0 %v306
    %1378 = vmatpush.msra.mxu0 %v302
    %1379 = vmatpush.msra.mxu0 %v298
    %1380 = vmatpush.msra.mxu0 %v294
    %1381 = vmatpush.msra.mxu0 %v290
    %1382 = vmatpush.msra.mxu0 %v286
    %1383 = vmatpush.msra.mxu0 %v282
    %1384 = vmatpush.msra.mxu0 %v278
    %1385 = vmatpush.msra.mxu0 %v274
    %1386 = vmatpush.msra.mxu0 %v270
    %1387 = vmatpush.msra.mxu0 %v266
    %1388 = vmatpush.msra.mxu0 %v262
    %1389 = vmatpush.msra.mxu0 %v258
    %1390 = vmatpush.msra.mxu0 %v254
    %1391 = vmatmul.f32.gmra.mxu0 %v1353
    %v1392 = vpop.f32.mrf.mxu0
    %v1393 = vadd.f32 0.0, %v1392
    %1394 = vdwg.mxu0
    %1395 = vmatpush.msra.mxu0 %v315
    %1396 = vmatpush.msra.mxu0 %v311
    %1397 = vmatpush.msra.mxu0 %v307
    %1398 = vmatpush.msra.mxu0 %v303
    %1399 = vmatpush.msra.mxu0 %v299
    %1400 = vmatpush.msra.mxu0 %v295
    %1401 = vmatpush.msra.mxu0 %v291
    %1402 = vmatpush.msra.mxu0 %v287
    %1403 = vmatpush.msra.mxu0 %v283
    %1404 = vmatpush.msra.mxu0 %v279
    %1405 = vmatpush.msra.mxu0 %v275
    %1406 = vmatpush.msra.mxu0 %v271
    %1407 = vmatpush.msra.mxu0 %v267
    %1408 = vmatpush.msra.mxu0 %v263
    %1409 = vmatpush.msra.mxu0 %v259
    %1410 = vmatpush.msra.mxu0 %v255
    %1411 = vmatmul.f32.gmra.mxu0 %v1353
    %v1412 = vpop.f32.mrf.mxu0
    %v1413 = vadd.f32 0.0, %v1412
    %1414 = vdwg.mxu0
    %1415 = vmatpush.msra.mxu0 %v316
    %1416 = vmatpush.msra.mxu0 %v312
    %1417 = vmatpush.msra.mxu0 %v308
    %1418 = vmatpush.msra.mxu0 %v304
    %1419 = vmatpush.msra.mxu0 %v300
    %1420 = vmatpush.msra.mxu0 %v296
    %1421 = vmatpush.msra.mxu0 %v292
    %1422 = vmatpush.msra.mxu0 %v288
    %1423 = vmatpush.msra.mxu0 %v284
    %1424 = vmatpush.msra.mxu0 %v280
    %1425 = vmatpush.msra.mxu0 %v276
    %1426 = vmatpush.msra.mxu0 %v272
    %1427 = vmatpush.msra.mxu0 %v268
    %1428 = vmatpush.msra.mxu0 %v264
    %1429 = vmatpush.msra.mxu0 %v260
    %1430 = vmatpush.msra.mxu0 %v256
    %1431 = vmatmul.f32.gmra.mxu0 %v1353
    %v1432 = vpop.f32.mrf.mxu0
    %v1433 = vadd.f32 0.0, %v1432
    %1434 = vdwg.mxu0
    %v1439 = vrot.slane %v1373, 2
    %v1440 = vrot.slane %v1393, 2
    %v1441 = vrot.slane %v1413, 2
    %v1442 = vrot.slane %v1433, 2
    %v1447 = vadd.f32 %v182, %v1439
    %v1448 = vadd.f32 %v205, %v1440
    %v1449 = vadd.f32 %v228, %v1441
    %v1450 = vadd.f32 %v251, %v1442
    %v1451 = vxor.u32 %v1447, 2147483648
    %v1452 = vmul.f32 %v1451, 1.442695
    %v1453 = vpow.pop %v1452
    %v1454 = vadd.f32 %v1453, 1.0
    %v1455 = vrcp.pop %v1454
    %v1456 = vmul.f32 %v1454, %v1455
    %v1457 = vsub.f32 1.0, %v1456
    %v1458 = vmul.f32 %v1455, %v1457
    %v1459 = vadd.f32 %v1455, %v1458
    %vm1460 = vweird.f32 %v1454
    %vm1461 = vweird.f32 %v1455
    %vm1462 = vmor %vm1460, %vm1461
    %v1463 = vsel %vm1462, %v1455, %v1459
    %v1464 = vand.u32 2147483647, %v1454
    %vm1465 = vcmp.eq.f32.partialorder %v1464, 8.507059e+37
    %v1466 = vand.u32 %v1454, 2147483648
    %v1467 = vor.u32 1.1754944e-38, %v1466
    %v1468 = vsel %vm1465, %v1467, %v1463
    %v1469 = vmul.f32 1.0, %v1468
    %v1470 = vxor.u32 %v1448, 2147483648
    %v1471 = vmul.f32 %v1470, 1.442695
    %v1472 = vpow.pop %v1471
    %v1473 = vadd.f32 %v1472, 1.0
    %v1474 = vrcp.pop %v1473
    %v1475 = vmul.f32 %v1473, %v1474
    %v1476 = vsub.f32 1.0, %v1475
    %v1477 = vmul.f32 %v1474, %v1476
    %v1478 = vadd.f32 %v1474, %v1477
    %vm1479 = vweird.f32 %v1473
    %vm1480 = vweird.f32 %v1474
    %vm1481 = vmor %vm1479, %vm1480
    %v1482 = vsel %vm1481, %v1474, %v1478
    %v1483 = vand.u32 2147483647, %v1473
    %vm1484 = vcmp.eq.f32.partialorder %v1483, 8.507059e+37
    %v1485 = vand.u32 %v1473, 2147483648
    %v1486 = vor.u32 1.1754944e-38, %v1485
    %v1487 = vsel %vm1484, %v1486, %v1482
    %v1488 = vmul.f32 1.0, %v1487
    %v1489 = vtanh.pop %v1449
    %v1490 = vxor.u32 %v1450, 2147483648
    %v1491 = vmul.f32 %v1490, 1.442695
    %v1492 = vpow.pop %v1491
    %v1493 = vadd.f32 %v1492, 1.0
    %v1494 = vrcp.pop %v1493
    %v1495 = vmul.f32 %v1493, %v1494
    %v1496 = vsub.f32 1.0, %v1495
    %v1497 = vmul.f32 %v1494, %v1496
    %v1498 = vadd.f32 %v1494, %v1497
    %vm1499 = vweird.f32 %v1493
    %vm1500 = vweird.f32 %v1494
    %vm1501 = vmor %vm1499, %vm1500
    %v1502 = vsel %vm1501, %v1494, %v1498
    %v1503 = vand.u32 2147483647, %v1493
    %vm1504 = vcmp.eq.f32.partialorder %v1503, 8.507059e+37
    %v1505 = vand.u32 %v1493, 2147483648
    %v1506 = vor.u32 1.1754944e-38, %v1505
    %v1507 = vsel %vm1504, %v1506, %v1502
    %v1508 = vmul.f32 1.0, %v1507
    %v1510 = vrot.slane %v1349, 6
    %v1512 = vmul.f32 %v1488, %v1510
    %v1513 = vmul.f32 %v1469, %v1489
    %v1514 = vadd.f32 %v1512, %v1513
    %v1515 = vtanh.pop %v1514
    %v1516 = vmul.f32 %v1508, %v1515
    %v1518 = vrot.slane %v1516, 6
    %vm1520 = vcmask 523264
    %v1521 = vsel %vm1520, %v379, %v1518
    %v1522 = vrot.slane %v1351, 2
    %v1524 = vsel %vm1520, %v541, %v1522
    %v1525 = vrot.slane %v1186, 6
    %v1527 = vsel %vm1520, %v706, %v1525
    %v1529 = vrot.slane %v1024, 2
    %v1531 = vsel %vm1520, %v871, %v1529
    %v1532 = vsel %vm1520, %v1024, %v873
    %v1533 = vrot.slane %v706, 2
    %v1535 = vsel %vm1520, %v1186, %v1533
    %v1536 = vrot.slane %v541, 6
    %v1538 = vsel %vm1520, %v1351, %v1536
    %v1540 = vrot.slane %v379, 2
    %v1542 = vsel %vm1520, %v1516, %v1540
    %vm1543 = vcmask 1041408
    %v1544 = vsel %vm1543, %v1521, %v1524
    %vm1545 = vcmask 1043456
    %v1546 = vsel %vm1545, %v1544, %v1527
    %vm1547 = vcmask 1045504
    %v1548 = vsel %vm1547, %v1546, %v1531
    %v1549 = vsel %vm1543, %v1532, %v1535
    %v1550 = vsel %vm1545, %v1549, %v1538
    %v1551 = vsel %vm1547, %v1550, %v1542
    %v1552 = vld [vmem:[#allocation8] sm:$0xff]
    %v1553 = vld [vmem:[#allocation8 + $0x8] sm:$0xff]
    %v1554 = vld [vmem:[#allocation8 + $0x10] sm:$0xff]
    %v1555 = vld [vmem:[#allocation8 + $0x18] sm:$0xff]
    %v1556 = vld [vmem:[#allocation8 + $0x20] sm:$0xff]
    %v1557 = vld [vmem:[#allocation8 + $0x28] sm:$0xff]
    %v1558 = vld [vmem:[#allocation8 + $0x30] sm:$0xff]
    %v1559 = vld [vmem:[#allocation8 + $0x38] sm:$0xff]
    %v1560 = vld [vmem:[#allocation8 + $0x40] sm:$0xff]
    %v1561 = vld [vmem:[#allocation8 + $0x48] sm:$0xff]
    %v1562 = vld [vmem:[#allocation8 + $0x50] sm:$0xff]
    %v1563 = vld [vmem:[#allocation8 + $0x58] sm:$0xff]
    %v1564 = vld [vmem:[#allocation8 + $0x60] sm:$0xff]
    %v1565 = vld [vmem:[#allocation8 + $0x68] sm:$0xff]
    %v1566 = vld [vmem:[#allocation8 + $0x70] sm:$0xff]
    %v1567 = vld [vmem:[#allocation8 + $0x78] sm:$0xff]
    %v1568 = vld [vmem:[#allocation8 + $0x80] sm:$0xff]
    %v1569 = vld [vmem:[#allocation8 + $0x88] sm:$0xff]
    %v1570 = vld [vmem:[#allocation8 + $0x90] sm:$0xff]
    %v1571 = vld [vmem:[#allocation8 + $0x98] sm:$0xff]
    %v1572 = vld [vmem:[#allocation8 + $0xa0] sm:$0xff]
    %v1573 = vld [vmem:[#allocation8 + $0xa8] sm:$0xff]
    %v1574 = vld [vmem:[#allocation8 + $0xb0] sm:$0xff]
    %v1575 = vld [vmem:[#allocation8 + $0xb8] sm:$0xff]
    %v1576 = vld [vmem:[#allocation8 + $0xc0] sm:$0xff]
    %v1577 = vld [vmem:[#allocation8 + $0xc8] sm:$0xff]
    %v1578 = vld [vmem:[#allocation8 + $0xd0] sm:$0xff]
    %v1579 = vld [vmem:[#allocation8 + $0xd8] sm:$0xff]
    %v1580 = vld [vmem:[#allocation8 + $0xe0] sm:$0xff]
    %v1581 = vld [vmem:[#allocation8 + $0xe8] sm:$0xff]
    %v1582 = vld [vmem:[#allocation8 + $0xf0] sm:$0xff]
    %v1583 = vld [vmem:[#allocation8 + $0xf8] sm:$0xff]
    %v1584 = vld [vmem:[%s6] sm:$0x3]
    %v1586 = vperm.slane %v1584, 0
    %v1587 = vperm.slane %v1584, 1
    %1590 = vmatpush.msra.mxu0 %v1582
    %1591 = vmatpush.msra.mxu0 %v1580
    %1592 = vmatpush.msra.mxu0 %v1578
    %1593 = vmatpush.msra.mxu0 %v1576
    %1594 = vmatpush.msra.mxu0 %v1574
    %1595 = vmatpush.msra.mxu0 %v1572
    %1596 = vmatpush.msra.mxu0 %v1570
    %1597 = vmatpush.msra.mxu0 %v1568
    %1598 = vmatpush.msra.mxu0 %v1566
    %1599 = vmatpush.msra.mxu0 %v1564
    %1600 = vmatpush.msra.mxu0 %v1562
    %1601 = vmatpush.msra.mxu0 %v1560
    %1602 = vmatpush.msra.mxu0 %v1558
    %1603 = vmatpush.msra.mxu0 %v1556
    %1604 = vmatpush.msra.mxu0 %v1554
    %1605 = vmatpush.msra.mxu0 %v1552
    %1606 = vmatmul.f32.gmra.mxu0 %v1548
    %v1607 = vpop.f32.mrf.mxu0
    %v1608 = vadd.f32 %v1586, %v1607
    %1609 = vmatmul.f32.gmra.mxu0 %v1551
    %v1610 = vpop.f32.mrf.mxu0
    %v1611 = vadd.f32 %v1586, %v1610
    %1612 = vdwg.mxu0
    %1613 = vmatpush.msra.mxu0 %v1583
    %1614 = vmatpush.msra.mxu0 %v1581
    %1615 = vmatpush.msra.mxu0 %v1579
    %1616 = vmatpush.msra.mxu0 %v1577
    %1617 = vmatpush.msra.mxu0 %v1575
    %1618 = vmatpush.msra.mxu0 %v1573
    %1619 = vmatpush.msra.mxu0 %v1571
    %1620 = vmatpush.msra.mxu0 %v1569
    %1621 = vmatpush.msra.mxu0 %v1567
    %1622 = vmatpush.msra.mxu0 %v1565
    %1623 = vmatpush.msra.mxu0 %v1563
    %1624 = vmatpush.msra.mxu0 %v1561
    %1625 = vmatpush.msra.mxu0 %v1559
    %1626 = vmatpush.msra.mxu0 %v1557
    %1627 = vmatpush.msra.mxu0 %v1555
    %1628 = vmatpush.msra.mxu0 %v1553
    %1629 = vmatmul.f32.gmra.mxu0 %v1548
    %v1630 = vpop.f32.mrf.mxu0
    %v1631 = vadd.f32 %v1587, %v1630
    %1632 = vmatmul.f32.gmra.mxu0 %v1551
    %v1633 = vpop.f32.mrf.mxu0
    %v1634 = vadd.f32 %v1587, %v1633
    %1635 = vdwg.mxu0
    %v1636 = vld [vmem:[#allocation10] sm:$0xff]
    %v1637 = vld [vmem:[#allocation10 + $0x8] sm:$0xff]
    %v1638 = vld [vmem:[#allocation10 + $0x10] sm:$0xff]
    %v1639 = vld [vmem:[#allocation10 + $0x18] sm:$0xff]
    %v1640 = vld [vmem:[#allocation10 + $0x20] sm:$0xff]
    %v1641 = vld [vmem:[#allocation10 + $0x28] sm:$0xff]
    %v1642 = vld [vmem:[#allocation10 + $0x30] sm:$0xff]
    %v1643 = vld [vmem:[#allocation10 + $0x38] sm:$0xff]
    %v1644 = vld [vmem:[#allocation10 + $0x40] sm:$0xff]
    %v1645 = vld [vmem:[#allocation10 + $0x48] sm:$0xff]
    %v1646 = vld [vmem:[#allocation10 + $0x50] sm:$0xff]
    %v1647 = vld [vmem:[#allocation10 + $0x58] sm:$0xff]
    %v1648 = vld [vmem:[#allocation10 + $0x60] sm:$0xff]
    %v1649 = vld [vmem:[#allocation10 + $0x68] sm:$0xff]
    %v1650 = vld [vmem:[#allocation10 + $0x70] sm:$0xff]
    %v1651 = vld [vmem:[#allocation10 + $0x78] sm:$0xff]
    %v1652 = vxor.u32 %v1608, 2147483648
    %v1653 = vmul.f32 %v1652, 1.442695
    %v1654 = vpow.pop %v1653
    %v1655 = vadd.f32 %v1654, 1.0
    %v1656 = vrcp.pop %v1655
    %v1657 = vmul.f32 %v1655, %v1656
    %v1658 = vsub.f32 1.0, %v1657
    %v1659 = vmul.f32 %v1656, %v1658
    %v1660 = vadd.f32 %v1656, %v1659
    %vm1661 = vweird.f32 %v1655
    %vm1662 = vweird.f32 %v1656
    %vm1663 = vmor %vm1661, %vm1662
    %v1664 = vsel %vm1663, %v1656, %v1660
    %v1665 = vand.u32 2147483647, %v1655
    %vm1666 = vcmp.eq.f32.partialorder %v1665, 8.507059e+37
    %v1667 = vand.u32 %v1655, 2147483648
    %v1668 = vor.u32 1.1754944e-38, %v1667
    %v1669 = vsel %vm1666, %v1668, %v1664
    %v1670 = vmul.f32 1.0, %v1669
    %v1671 = vtanh.pop %v1631
    %v1672 = vxor.u32 %v1631, 2147483648
    %v1673 = vmul.f32 %v1672, 1.442695
    %v1674 = vpow.pop %v1673
    %v1675 = vadd.f32 %v1674, 1.0
    %v1676 = vrcp.pop %v1675
    %v1677 = vmul.f32 %v1675, %v1676
    %v1678 = vsub.f32 1.0, %v1677
    %v1679 = vmul.f32 %v1676, %v1678
    %v1680 = vadd.f32 %v1676, %v1679
    %vm1681 = vweird.f32 %v1675
    %vm1682 = vweird.f32 %v1676
    %vm1683 = vmor %vm1681, %vm1682
    %v1684 = vsel %vm1683, %v1676, %v1680
    %v1685 = vand.u32 2147483647, %v1675
    %vm1686 = vcmp.eq.f32.partialorder %v1685, 8.507059e+37
    %v1687 = vand.u32 %v1675, 2147483648
    %v1688 = vor.u32 1.1754944e-38, %v1687
    %v1689 = vsel %vm1686, %v1688, %v1684
    %v1690 = vmul.f32 1.0, %v1689
    %v1691 = vmul.f32 %v1670, 0.0
    %v1692 = vmul.f32 %v1670, %v1671
    %1694 = vrot.lane.b32.xlu0 %v1692, 64
    %v1695 = vpop.permute.xlu0 %1694
    %v1697 = vadd.f32 %v1691, %v1695
    %v1698 = vtanh.pop %v1697
    %v1699 = vmul.f32 %v1690, %v1698
    %1701 = vrot.lane.b32.xlu0 %v1699, 64
    %v1702 = vpop.permute.xlu0 %1701
    %v1703 = vsel %vm1520, %v1702, 0
    %1705 = vmatpush.msra.mxu0 0.0
    %1706 = vmatpush.msra.mxu0 0.0
    %1707 = vmatpush.msra.mxu0 0.0
    %1708 = vmatpush.msra.mxu0 0.0
    %1709 = vmatpush.msra.mxu0 0.0
    %1710 = vmatpush.msra.mxu0 0.0
    %1711 = vmatpush.msra.mxu0 0.0
    %1712 = vmatpush.msra.mxu0 0.0
    %1713 = vmatpush.msra.mxu0 %v1650
    %1714 = vmatpush.msra.mxu0 %v1648
    %1715 = vmatpush.msra.mxu0 %v1646
    %1716 = vmatpush.msra.mxu0 %v1644
    %1717 = vmatpush.msra.mxu0 %v1642
    %1718 = vmatpush.msra.mxu0 %v1640
    %1719 = vmatpush.msra.mxu0 %v1638
    %1720 = vmatpush.msra.mxu0 %v1636
    %1721 = vmatmul.f32.gmra.mxu0 %v1703
    %v1722 = vpop.f32.mrf.mxu0
    %v1723 = vadd.f32 0.0, %v1722
    %1724 = vdwg.mxu0
    %1725 = vmatpush.msra.mxu0 0.0
    %1726 = vmatpush.msra.mxu0 0.0
    %1727 = vmatpush.msra.mxu0 0.0
    %1728 = vmatpush.msra.mxu0 0.0
    %1729 = vmatpush.msra.mxu0 0.0
    %1730 = vmatpush.msra.mxu0 0.0
    %1731 = vmatpush.msra.mxu0 0.0
    %1732 = vmatpush.msra.mxu0 0.0
    %1733 = vmatpush.msra.mxu0 %v1651
    %1734 = vmatpush.msra.mxu0 %v1649
    %1735 = vmatpush.msra.mxu0 %v1647
    %1736 = vmatpush.msra.mxu0 %v1645
    %1737 = vmatpush.msra.mxu0 %v1643
    %1738 = vmatpush.msra.mxu0 %v1641
    %1739 = vmatpush.msra.mxu0 %v1639
    %1740 = vmatpush.msra.mxu0 %v1637
    %1741 = vmatmul.f32.gmra.mxu0 %v1703
    %v1742 = vpop.f32.mrf.mxu0
    %v1743 = vadd.f32 0.0, %v1742
    %1744 = vdwg.mxu0
    %v1747 = vrot.slane %v1723, 6
    %v1748 = vrot.slane %v1743, 6
    %v1751 = vadd.f32 %v1608, %v1747
    %v1752 = vadd.f32 %v1631, %v1748
    %v1753 = vxor.u32 %v1751, 2147483648
    %v1754 = vmul.f32 %v1753, 1.442695
    %v1755 = vpow.pop %v1754
    %v1756 = vadd.f32 %v1755, 1.0
    %v1757 = vrcp.pop %v1756
    %v1758 = vmul.f32 %v1756, %v1757
    %v1759 = vsub.f32 1.0, %v1758
    %v1760 = vmul.f32 %v1757, %v1759
    %v1761 = vadd.f32 %v1757, %v1760
    %vm1762 = vweird.f32 %v1756
    %vm1763 = vweird.f32 %v1757
    %vm1764 = vmor %vm1762, %vm1763
    %v1765 = vsel %vm1764, %v1757, %v1761
    %v1766 = vand.u32 2147483647, %v1756
    %vm1767 = vcmp.eq.f32.partialorder %v1766, 8.507059e+37
    %v1768 = vand.u32 %v1756, 2147483648
    %v1769 = vor.u32 1.1754944e-38, %v1768
    %v1770 = vsel %vm1767, %v1769, %v1765
    %v1771 = vmul.f32 1.0, %v1770
    %v1772 = vtanh.pop %v1752
    %v1773 = vxor.u32 %v1752, 2147483648
    %v1774 = vmul.f32 %v1773, 1.442695
    %v1775 = vpow.pop %v1774
    %v1776 = vadd.f32 %v1775, 1.0
    %v1777 = vrcp.pop %v1776
    %v1778 = vmul.f32 %v1776, %v1777
    %v1779 = vsub.f32 1.0, %v1778
    %v1780 = vmul.f32 %v1777, %v1779
    %v1781 = vadd.f32 %v1777, %v1780
    %vm1782 = vweird.f32 %v1776
    %vm1783 = vweird.f32 %v1777
    %vm1784 = vmor %vm1782, %vm1783
    %v1785 = vsel %vm1784, %v1777, %v1781
    %v1786 = vand.u32 2147483647, %v1776
    %vm1787 = vcmp.eq.f32.partialorder %v1786, 8.507059e+37
    %v1788 = vand.u32 %v1776, 2147483648
    %v1789 = vor.u32 1.1754944e-38, %v1788
    %v1790 = vsel %vm1787, %v1789, %v1785
    %v1791 = vmul.f32 1.0, %v1790
    %v1793 = vrot.slane %v1697, 6
    %v1795 = vmul.f32 %v1771, %v1793
    %v1796 = vmul.f32 %v1771, %v1772
    %1798 = vrot.lane.b32.xlu0 %v1796, 64
    %v1799 = vpop.permute.xlu0 %1798
    %v1801 = vadd.f32 %v1795, %v1799
    %v1802 = vtanh.pop %v1801
    %v1803 = vmul.f32 %v1791, %v1802
    %v1805 = vrot.slane %v1803, 2
    %1806 = vrot.lane.b32.xlu0 %v1805, 64
    %v1807 = vpop.permute.xlu0 %1806
    %v1808 = vsel %vm1520, %v1807, 0
    %1810 = vmatpush.msra.mxu0 0.0
    %1811 = vmatpush.msra.mxu0 0.0
    %1812 = vmatpush.msra.mxu0 0.0
    %1813 = vmatpush.msra.mxu0 0.0
    %1814 = vmatpush.msra.mxu0 0.0
    %1815 = vmatpush.msra.mxu0 0.0
    %1816 = vmatpush.msra.mxu0 0.0
    %1817 = vmatpush.msra.mxu0 0.0
    %1818 = vmatpush.msra.mxu0 %v1650
    %1819 = vmatpush.msra.mxu0 %v1648
    %1820 = vmatpush.msra.mxu0 %v1646
    %1821 = vmatpush.msra.mxu0 %v1644
    %1822 = vmatpush.msra.mxu0 %v1642
    %1823 = vmatpush.msra.mxu0 %v1640
    %1824 = vmatpush.msra.mxu0 %v1638
    %1825 = vmatpush.msra.mxu0 %v1636
    %1826 = vmatmul.f32.gmra.mxu0 %v1808
    %v1827 = vpop.f32.mrf.mxu0
    %v1828 = vadd.f32 0.0, %v1827
    %1829 = vdwg.mxu0
    %1830 = vmatpush.msra.mxu0 0.0
    %1831 = vmatpush.msra.mxu0 0.0
    %1832 = vmatpush.msra.mxu0 0.0
    %1833 = vmatpush.msra.mxu0 0.0
    %1834 = vmatpush.msra.mxu0 0.0
    %1835 = vmatpush.msra.mxu0 0.0
    %1836 = vmatpush.msra.mxu0 0.0
    %1837 = vmatpush.msra.mxu0 0.0
    %1838 = vmatpush.msra.mxu0 %v1651
    %1839 = vmatpush.msra.mxu0 %v1649
    %1840 = vmatpush.msra.mxu0 %v1647
    %1841 = vmatpush.msra.mxu0 %v1645
    %1842 = vmatpush.msra.mxu0 %v1643
    %1843 = vmatpush.msra.mxu0 %v1641
    %1844 = vmatpush.msra.mxu0 %v1639
    %1845 = vmatpush.msra.mxu0 %v1637
    %1846 = vmatmul.f32.gmra.mxu0 %v1808
    %v1847 = vpop.f32.mrf.mxu0
    %v1848 = vadd.f32 0.0, %v1847
    %1849 = vdwg.mxu0
    %v1852 = vrot.slane %v1828, 4
    %v1853 = vrot.slane %v1848, 4
    %v1856 = vadd.f32 %v1608, %v1852
    %v1857 = vadd.f32 %v1631, %v1853
    %v1858 = vxor.u32 %v1856, 2147483648
    %v1859 = vmul.f32 %v1858, 1.442695
    %v1860 = vpow.pop %v1859
    %v1861 = vadd.f32 %v1860, 1.0
    %v1862 = vrcp.pop %v1861
    %v1863 = vmul.f32 %v1861, %v1862
    %v1864 = vsub.f32 1.0, %v1863
    %v1865 = vmul.f32 %v1862, %v1864
    %v1866 = vadd.f32 %v1862, %v1865
    %vm1867 = vweird.f32 %v1861
    %vm1868 = vweird.f32 %v1862
    %vm1869 = vmor %vm1867, %vm1868
    %v1870 = vsel %vm1869, %v1862, %v1866
    %v1871 = vand.u32 2147483647, %v1861
    %vm1872 = vcmp.eq.f32.partialorder %v1871, 8.507059e+37
    %v1873 = vand.u32 %v1861, 2147483648
    %v1874 = vor.u32 1.1754944e-38, %v1873
    %v1875 = vsel %vm1872, %v1874, %v1870
    %v1876 = vmul.f32 1.0, %v1875
    %v1877 = vtanh.pop %v1857
    %v1878 = vxor.u32 %v1857, 2147483648
    %v1879 = vmul.f32 %v1878, 1.442695
    %v1880 = vpow.pop %v1879
    %v1881 = vadd.f32 %v1880, 1.0
    %v1882 = vrcp.pop %v1881
    %v1883 = vmul.f32 %v1881, %v1882
    %v1884 = vsub.f32 1.0, %v1883
    %v1885 = vmul.f32 %v1882, %v1884
    %v1886 = vadd.f32 %v1882, %v1885
    %vm1887 = vweird.f32 %v1881
    %vm1888 = vweird.f32 %v1882
    %vm1889 = vmor %vm1887, %vm1888
    %v1890 = vsel %vm1889, %v1882, %v1886
    %v1891 = vand.u32 2147483647, %v1881
    %vm1892 = vcmp.eq.f32.partialorder %v1891, 8.507059e+37
    %v1893 = vand.u32 %v1881, 2147483648
    %v1894 = vor.u32 1.1754944e-38, %v1893
    %v1895 = vsel %vm1892, %v1894, %v1890
    %v1896 = vmul.f32 1.0, %v1895
    %v1898 = vrot.slane %v1801, 6
    %v1900 = vmul.f32 %v1876, %v1898
    %v1901 = vmul.f32 %v1876, %v1877
    %1903 = vrot.lane.b32.xlu0 %v1901, 64
    %v1904 = vpop.permute.xlu0 %1903
    %v1906 = vadd.f32 %v1900, %v1904
    %v1907 = vtanh.pop %v1906
    %v1908 = vmul.f32 %v1896, %v1907
    %v1910 = vrot.slane %v1908, 4
    %1911 = vrot.lane.b32.xlu0 %v1910, 64
    %v1912 = vpop.permute.xlu0 %1911
    %v1913 = vsel %vm1520, %v1912, 0
    %1915 = vmatpush.msra.mxu0 0.0
    %1916 = vmatpush.msra.mxu0 0.0
    %1917 = vmatpush.msra.mxu0 0.0
    %1918 = vmatpush.msra.mxu0 0.0
    %1919 = vmatpush.msra.mxu0 0.0
    %1920 = vmatpush.msra.mxu0 0.0
    %1921 = vmatpush.msra.mxu0 0.0
    %1922 = vmatpush.msra.mxu0 0.0
    %1923 = vmatpush.msra.mxu0 %v1650
    %1924 = vmatpush.msra.mxu0 %v1648
    %1925 = vmatpush.msra.mxu0 %v1646
    %1926 = vmatpush.msra.mxu0 %v1644
    %1927 = vmatpush.msra.mxu0 %v1642
    %1928 = vmatpush.msra.mxu0 %v1640
    %1929 = vmatpush.msra.mxu0 %v1638
    %1930 = vmatpush.msra.mxu0 %v1636
    %1931 = vmatmul.f32.gmra.mxu0 %v1913
    %v1932 = vpop.f32.mrf.mxu0
    %v1933 = vadd.f32 0.0, %v1932
    %1934 = vdwg.mxu0
    %1935 = vmatpush.msra.mxu0 0.0
    %1936 = vmatpush.msra.mxu0 0.0
    %1937 = vmatpush.msra.mxu0 0.0
    %1938 = vmatpush.msra.mxu0 0.0
    %1939 = vmatpush.msra.mxu0 0.0
    %1940 = vmatpush.msra.mxu0 0.0
    %1941 = vmatpush.msra.mxu0 0.0
    %1942 = vmatpush.msra.mxu0 0.0
    %1943 = vmatpush.msra.mxu0 %v1651
    %1944 = vmatpush.msra.mxu0 %v1649
    %1945 = vmatpush.msra.mxu0 %v1647
    %1946 = vmatpush.msra.mxu0 %v1645
    %1947 = vmatpush.msra.mxu0 %v1643
    %1948 = vmatpush.msra.mxu0 %v1641
    %1949 = vmatpush.msra.mxu0 %v1639
    %1950 = vmatpush.msra.mxu0 %v1637
    %1951 = vmatmul.f32.gmra.mxu0 %v1913
    %v1952 = vpop.f32.mrf.mxu0
    %v1953 = vadd.f32 0.0, %v1952
    %1954 = vdwg.mxu0
    %v1957 = vrot.slane %v1933, 2
    %v1958 = vrot.slane %v1953, 2
    %v1961 = vadd.f32 %v1608, %v1957
    %v1962 = vadd.f32 %v1631, %v1958
    %v1963 = vxor.u32 %v1961, 2147483648
    %v1964 = vmul.f32 %v1963, 1.442695
    %v1965 = vpow.pop %v1964
    %v1966 = vadd.f32 %v1965, 1.0
    %v1967 = vrcp.pop %v1966
    %v1968 = vmul.f32 %v1966, %v1967
    %v1969 = vsub.f32 1.0, %v1968
    %v1970 = vmul.f32 %v1967, %v1969
    %v1971 = vadd.f32 %v1967, %v1970
    %vm1972 = vweird.f32 %v1966
    %vm1973 = vweird.f32 %v1967
    %vm1974 = vmor %vm1972, %vm1973
    %v1975 = vsel %vm1974, %v1967, %v1971
    %v1976 = vand.u32 2147483647, %v1966
    %vm1977 = vcmp.eq.f32.partialorder %v1976, 8.507059e+37
    %v1978 = vand.u32 %v1966, 2147483648
    %v1979 = vor.u32 1.1754944e-38, %v1978
    %v1980 = vsel %vm1977, %v1979, %v1975
    %v1981 = vmul.f32 1.0, %v1980
    %v1982 = vtanh.pop %v1962
    %v1983 = vxor.u32 %v1962, 2147483648
    %v1984 = vmul.f32 %v1983, 1.442695
    %v1985 = vpow.pop %v1984
    %v1986 = vadd.f32 %v1985, 1.0
    %v1987 = vrcp.pop %v1986
    %v1988 = vmul.f32 %v1986, %v1987
    %v1989 = vsub.f32 1.0, %v1988
    %v1990 = vmul.f32 %v1987, %v1989
    %v1991 = vadd.f32 %v1987, %v1990
    %vm1992 = vweird.f32 %v1986
    %vm1993 = vweird.f32 %v1987
    %vm1994 = vmor %vm1992, %vm1993
    %v1995 = vsel %vm1994, %v1987, %v1991
    %v1996 = vand.u32 2147483647, %v1986
    %vm1997 = vcmp.eq.f32.partialorder %v1996, 8.507059e+37
    %v1998 = vand.u32 %v1986, 2147483648
    %v1999 = vor.u32 1.1754944e-38, %v1998
    %v2000 = vsel %vm1997, %v1999, %v1995
    %v2001 = vmul.f32 1.0, %v2000
    %v2003 = vrot.slane %v1906, 6
    %v2005 = vmul.f32 %v1981, %v2003
    %v2006 = vmul.f32 %v1981, %v1982
    %2008 = vrot.lane.b32.xlu0 %v2006, 64
    %v2009 = vpop.permute.xlu0 %2008
    %v2011 = vadd.f32 %v2005, %v2009
    %v2012 = vtanh.pop %v2011
    %v2013 = vmul.f32 %v2001, %v2012
    %v2015 = vrot.slane %v2013, 6
    %2016 = vrot.lane.b32.xlu0 %v2015, 64
    %v2017 = vpop.permute.xlu0 %2016
    %v2018 = vsel %vm1520, %v2017, 0
    %2020 = vmatpush.msra.mxu0 0.0
    %2021 = vmatpush.msra.mxu0 0.0
    %2022 = vmatpush.msra.mxu0 0.0
    %2023 = vmatpush.msra.mxu0 0.0
    %2024 = vmatpush.msra.mxu0 0.0
    %2025 = vmatpush.msra.mxu0 0.0
    %2026 = vmatpush.msra.mxu0 0.0
    %2027 = vmatpush.msra.mxu0 0.0
    %2028 = vmatpush.msra.mxu0 %v1650
    %2029 = vmatpush.msra.mxu0 %v1648
    %2030 = vmatpush.msra.mxu0 %v1646
    %2031 = vmatpush.msra.mxu0 %v1644
    %2032 = vmatpush.msra.mxu0 %v1642
    %2033 = vmatpush.msra.mxu0 %v1640
    %2034 = vmatpush.msra.mxu0 %v1638
    %2035 = vmatpush.msra.mxu0 %v1636
    %2036 = vmatmul.f32.gmra.mxu0 %v2018
    %v2037 = vpop.f32.mrf.mxu0
    %v2038 = vadd.f32 0.0, %v2037
    %2039 = vdwg.mxu0
    %2040 = vmatpush.msra.mxu0 0.0
    %2041 = vmatpush.msra.mxu0 0.0
    %2042 = vmatpush.msra.mxu0 0.0
    %2043 = vmatpush.msra.mxu0 0.0
    %2044 = vmatpush.msra.mxu0 0.0
    %2045 = vmatpush.msra.mxu0 0.0
    %2046 = vmatpush.msra.mxu0 0.0
    %2047 = vmatpush.msra.mxu0 0.0
    %2048 = vmatpush.msra.mxu0 %v1651
    %2049 = vmatpush.msra.mxu0 %v1649
    %2050 = vmatpush.msra.mxu0 %v1647
    %2051 = vmatpush.msra.mxu0 %v1645
    %2052 = vmatpush.msra.mxu0 %v1643
    %2053 = vmatpush.msra.mxu0 %v1641
    %2054 = vmatpush.msra.mxu0 %v1639
    %2055 = vmatpush.msra.mxu0 %v1637
    %2056 = vmatmul.f32.gmra.mxu0 %v2018
    %v2057 = vpop.f32.mrf.mxu0
    %v2058 = vadd.f32 0.0, %v2057
    %2059 = vdwg.mxu0
    %v2060 = vadd.f32 %v1611, %v2038
    %v2061 = vadd.f32 %v1634, %v2058
    %v2062 = vxor.u32 %v2060, 2147483648
    %v2063 = vmul.f32 %v2062, 1.442695
    %v2064 = vpow.pop %v2063
    %v2065 = vadd.f32 %v2064, 1.0
    %v2066 = vrcp.pop %v2065
    %v2067 = vmul.f32 %v2065, %v2066
    %v2068 = vsub.f32 1.0, %v2067
    %v2069 = vmul.f32 %v2066, %v2068
    %v2070 = vadd.f32 %v2066, %v2069
    %vm2071 = vweird.f32 %v2065
    %vm2072 = vweird.f32 %v2066
    %vm2073 = vmor %vm2071, %vm2072
    %v2074 = vsel %vm2073, %v2066, %v2070
    %v2075 = vand.u32 2147483647, %v2065
    %vm2076 = vcmp.eq.f32.partialorder %v2075, 8.507059e+37
    %v2077 = vand.u32 %v2065, 2147483648
    %v2078 = vor.u32 1.1754944e-38, %v2077
    %v2079 = vsel %vm2076, %v2078, %v2074
    %v2080 = vmul.f32 1.0, %v2079
    %v2081 = vtanh.pop %v2061
    %v2082 = vxor.u32 %v2061, 2147483648
    %v2083 = vmul.f32 %v2082, 1.442695
    %v2084 = vpow.pop %v2083
    %v2085 = vadd.f32 %v2084, 1.0
    %v2086 = vrcp.pop %v2085
    %v2087 = vmul.f32 %v2085, %v2086
    %v2088 = vsub.f32 1.0, %v2087
    %v2089 = vmul.f32 %v2086, %v2088
    %v2090 = vadd.f32 %v2086, %v2089
    %vm2091 = vweird.f32 %v2085
    %vm2092 = vweird.f32 %v2086
    %vm2093 = vmor %vm2091, %vm2092
    %v2094 = vsel %vm2093, %v2086, %v2090
    %v2095 = vand.u32 2147483647, %v2085
    %vm2096 = vcmp.eq.f32.partialorder %v2095, 8.507059e+37
    %v2097 = vand.u32 %v2085, 2147483648
    %v2098 = vor.u32 1.1754944e-38, %v2097
    %v2099 = vsel %vm2096, %v2098, %v2094
    %v2100 = vmul.f32 1.0, %v2099
    %v2102 = vrot.slane %v2011, 6
    %v2104 = vmul.f32 %v2080, %v2102
    %v2105 = vmul.f32 %v2080, %v2081
    %2107 = vrot.lane.b32.xlu0 %v2105, 64
    %v2108 = vpop.permute.xlu0 %2107
    %v2110 = vadd.f32 %v2104, %v2108
    %v2111 = vtanh.pop %v2110
    %v2112 = vmul.f32 %v2100, %v2111
    %2114 = vrot.lane.b32.xlu0 %v2112, 64
    %v2115 = vpop.permute.xlu0 %2114
    %v2116 = vsel %vm1520, %v2115, 0
    %2118 = vmatpush.msra.mxu0 0.0
    %2119 = vmatpush.msra.mxu0 0.0
    %2120 = vmatpush.msra.mxu0 0.0
    %2121 = vmatpush.msra.mxu0 0.0
    %2122 = vmatpush.msra.mxu0 0.0
    %2123 = vmatpush.msra.mxu0 0.0
    %2124 = vmatpush.msra.mxu0 0.0
    %2125 = vmatpush.msra.mxu0 0.0
    %2126 = vmatpush.msra.mxu0 %v1650
    %2127 = vmatpush.msra.mxu0 %v1648
    %2128 = vmatpush.msra.mxu0 %v1646
    %2129 = vmatpush.msra.mxu0 %v1644
    %2130 = vmatpush.msra.mxu0 %v1642
    %2131 = vmatpush.msra.mxu0 %v1640
    %2132 = vmatpush.msra.mxu0 %v1638
    %2133 = vmatpush.msra.mxu0 %v1636
    %2134 = vmatmul.f32.gmra.mxu0 %v2116
    %v2135 = vpop.f32.mrf.mxu0
    %v2136 = vadd.f32 0.0, %v2135
    %2137 = vdwg.mxu0
    %2138 = vmatpush.msra.mxu0 0.0
    %2139 = vmatpush.msra.mxu0 0.0
    %2140 = vmatpush.msra.mxu0 0.0
    %2141 = vmatpush.msra.mxu0 0.0
    %2142 = vmatpush.msra.mxu0 0.0
    %2143 = vmatpush.msra.mxu0 0.0
    %2144 = vmatpush.msra.mxu0 0.0
    %2145 = vmatpush.msra.mxu0 0.0
    %2146 = vmatpush.msra.mxu0 %v1651
    %2147 = vmatpush.msra.mxu0 %v1649
    %2148 = vmatpush.msra.mxu0 %v1647
    %2149 = vmatpush.msra.mxu0 %v1645
    %2150 = vmatpush.msra.mxu0 %v1643
    %2151 = vmatpush.msra.mxu0 %v1641
    %2152 = vmatpush.msra.mxu0 %v1639
    %2153 = vmatpush.msra.mxu0 %v1637
    %2154 = vmatmul.f32.gmra.mxu0 %v2116
    %v2155 = vpop.f32.mrf.mxu0
    %v2156 = vadd.f32 0.0, %v2155
    %2157 = vdwg.mxu0
    %v2160 = vrot.slane %v2136, 6
    %v2161 = vrot.slane %v2156, 6
    %v2164 = vadd.f32 %v1611, %v2160
    %v2165 = vadd.f32 %v1634, %v2161
    %v2166 = vxor.u32 %v2164, 2147483648
    %v2167 = vmul.f32 %v2166, 1.442695
    %v2168 = vpow.pop %v2167
    %v2169 = vadd.f32 %v2168, 1.0
    %v2170 = vrcp.pop %v2169
    %v2171 = vmul.f32 %v2169, %v2170
    %v2172 = vsub.f32 1.0, %v2171
    %v2173 = vmul.f32 %v2170, %v2172
    %v2174 = vadd.f32 %v2170, %v2173
    %vm2175 = vweird.f32 %v2169
    %vm2176 = vweird.f32 %v2170
    %vm2177 = vmor %vm2175, %vm2176
    %v2178 = vsel %vm2177, %v2170, %v2174
    %v2179 = vand.u32 2147483647, %v2169
    %vm2180 = vcmp.eq.f32.partialorder %v2179, 8.507059e+37
    %v2181 = vand.u32 %v2169, 2147483648
    %v2182 = vor.u32 1.1754944e-38, %v2181
    %v2183 = vsel %vm2180, %v2182, %v2178
    %v2184 = vmul.f32 1.0, %v2183
    %v2185 = vtanh.pop %v2165
    %v2186 = vxor.u32 %v2165, 2147483648
    %v2187 = vmul.f32 %v2186, 1.442695
    %v2188 = vpow.pop %v2187
    %v2189 = vadd.f32 %v2188, 1.0
    %v2190 = vrcp.pop %v2189
    %v2191 = vmul.f32 %v2189, %v2190
    %v2192 = vsub.f32 1.0, %v2191
    %v2193 = vmul.f32 %v2190, %v2192
    %v2194 = vadd.f32 %v2190, %v2193
    %vm2195 = vweird.f32 %v2189
    %vm2196 = vweird.f32 %v2190
    %vm2197 = vmor %vm2195, %vm2196
    %v2198 = vsel %vm2197, %v2190, %v2194
    %v2199 = vand.u32 2147483647, %v2189
    %vm2200 = vcmp.eq.f32.partialorder %v2199, 8.507059e+37
    %v2201 = vand.u32 %v2189, 2147483648
    %v2202 = vor.u32 1.1754944e-38, %v2201
    %v2203 = vsel %vm2200, %v2202, %v2198
    %v2204 = vmul.f32 1.0, %v2203
    %v2206 = vrot.slane %v2110, 6
    %v2208 = vmul.f32 %v2184, %v2206
    %v2209 = vmul.f32 %v2184, %v2185
    %2211 = vrot.lane.b32.xlu0 %v2209, 64
    %v2212 = vpop.permute.xlu0 %2211
    %v2214 = vadd.f32 %v2208, %v2212
    %v2215 = vtanh.pop %v2214
    %v2216 = vmul.f32 %v2204, %v2215
    %v2218 = vrot.slane %v2216, 2
    %2219 = vrot.lane.b32.xlu0 %v2218, 64
    %v2220 = vpop.permute.xlu0 %2219
    %v2221 = vsel %vm1520, %v2220, 0
    %2223 = vmatpush.msra.mxu0 0.0
    %2224 = vmatpush.msra.mxu0 0.0
    %2225 = vmatpush.msra.mxu0 0.0
    %2226 = vmatpush.msra.mxu0 0.0
    %2227 = vmatpush.msra.mxu0 0.0
    %2228 = vmatpush.msra.mxu0 0.0
    %2229 = vmatpush.msra.mxu0 0.0
    %2230 = vmatpush.msra.mxu0 0.0
    %2231 = vmatpush.msra.mxu0 %v1650
    %2232 = vmatpush.msra.mxu0 %v1648
    %2233 = vmatpush.msra.mxu0 %v1646
    %2234 = vmatpush.msra.mxu0 %v1644
    %2235 = vmatpush.msra.mxu0 %v1642
    %2236 = vmatpush.msra.mxu0 %v1640
    %2237 = vmatpush.msra.mxu0 %v1638
    %2238 = vmatpush.msra.mxu0 %v1636
    %2239 = vmatmul.f32.gmra.mxu0 %v2221
    %v2240 = vpop.f32.mrf.mxu0
    %v2241 = vadd.f32 0.0, %v2240
    %2242 = vdwg.mxu0
    %2243 = vmatpush.msra.mxu0 0.0
    %2244 = vmatpush.msra.mxu0 0.0
    %2245 = vmatpush.msra.mxu0 0.0
    %2246 = vmatpush.msra.mxu0 0.0
    %2247 = vmatpush.msra.mxu0 0.0
    %2248 = vmatpush.msra.mxu0 0.0
    %2249 = vmatpush.msra.mxu0 0.0
    %2250 = vmatpush.msra.mxu0 0.0
    %2251 = vmatpush.msra.mxu0 %v1651
    %2252 = vmatpush.msra.mxu0 %v1649
    %2253 = vmatpush.msra.mxu0 %v1647
    %2254 = vmatpush.msra.mxu0 %v1645
    %2255 = vmatpush.msra.mxu0 %v1643
    %2256 = vmatpush.msra.mxu0 %v1641
    %2257 = vmatpush.msra.mxu0 %v1639
    %2258 = vmatpush.msra.mxu0 %v1637
    %2259 = vmatmul.f32.gmra.mxu0 %v2221
    %v2260 = vpop.f32.mrf.mxu0
    %v2261 = vadd.f32 0.0, %v2260
    %2262 = vdwg.mxu0
    %v2265 = vrot.slane %v2241, 4
    %v2266 = vrot.slane %v2261, 4
    %v2269 = vadd.f32 %v1611, %v2265
    %v2270 = vadd.f32 %v1634, %v2266
    %v2271 = vxor.u32 %v2269, 2147483648
    %v2272 = vmul.f32 %v2271, 1.442695
    %v2273 = vpow.pop %v2272
    %v2274 = vadd.f32 %v2273, 1.0
    %v2275 = vrcp.pop %v2274
    %v2276 = vmul.f32 %v2274, %v2275
    %v2277 = vsub.f32 1.0, %v2276
    %v2278 = vmul.f32 %v2275, %v2277
    %v2279 = vadd.f32 %v2275, %v2278
    %vm2280 = vweird.f32 %v2274
    %vm2281 = vweird.f32 %v2275
    %vm2282 = vmor %vm2280, %vm2281
    %v2283 = vsel %vm2282, %v2275, %v2279
    %v2284 = vand.u32 2147483647, %v2274
    %vm2285 = vcmp.eq.f32.partialorder %v2284, 8.507059e+37
    %v2286 = vand.u32 %v2274, 2147483648
    %v2287 = vor.u32 1.1754944e-38, %v2286
    %v2288 = vsel %vm2285, %v2287, %v2283
    %v2289 = vmul.f32 1.0, %v2288
    %v2290 = vtanh.pop %v2270
    %v2291 = vxor.u32 %v2270, 2147483648
    %v2292 = vmul.f32 %v2291, 1.442695
    %v2293 = vpow.pop %v2292
    %v2294 = vadd.f32 %v2293, 1.0
    %v2295 = vrcp.pop %v2294
    %v2296 = vmul.f32 %v2294, %v2295
    %v2297 = vsub.f32 1.0, %v2296
    %v2298 = vmul.f32 %v2295, %v2297
    %v2299 = vadd.f32 %v2295, %v2298
    %vm2300 = vweird.f32 %v2294
    %vm2301 = vweird.f32 %v2295
    %vm2302 = vmor %vm2300, %vm2301
    %v2303 = vsel %vm2302, %v2295, %v2299
    %v2304 = vand.u32 2147483647, %v2294
    %vm2305 = vcmp.eq.f32.partialorder %v2304, 8.507059e+37
    %v2306 = vand.u32 %v2294, 2147483648
    %v2307 = vor.u32 1.1754944e-38, %v2306
    %v2308 = vsel %vm2305, %v2307, %v2303
    %v2309 = vmul.f32 1.0, %v2308
    %v2311 = vrot.slane %v2214, 6
    %v2313 = vmul.f32 %v2289, %v2311
    %v2314 = vmul.f32 %v2289, %v2290
    %2316 = vrot.lane.b32.xlu0 %v2314, 64
    %v2317 = vpop.permute.xlu0 %2316
    %v2319 = vadd.f32 %v2313, %v2317
    %v2320 = vtanh.pop %v2319
    %v2321 = vmul.f32 %v2309, %v2320
    %v2323 = vrot.slane %v2321, 4
    %2324 = vrot.lane.b32.xlu0 %v2323, 64
    %v2325 = vpop.permute.xlu0 %2324
    %v2326 = vsel %vm1520, %v2325, 0
    %2328 = vmatpush.msra.mxu0 0.0
    %2329 = vmatpush.msra.mxu0 0.0
    %2330 = vmatpush.msra.mxu0 0.0
    %2331 = vmatpush.msra.mxu0 0.0
    %2332 = vmatpush.msra.mxu0 0.0
    %2333 = vmatpush.msra.mxu0 0.0
    %2334 = vmatpush.msra.mxu0 0.0
    %2335 = vmatpush.msra.mxu0 0.0
    %2336 = vmatpush.msra.mxu0 %v1650
    %2337 = vmatpush.msra.mxu0 %v1648
    %2338 = vmatpush.msra.mxu0 %v1646
    %2339 = vmatpush.msra.mxu0 %v1644
    %2340 = vmatpush.msra.mxu0 %v1642
    %2341 = vmatpush.msra.mxu0 %v1640
    %2342 = vmatpush.msra.mxu0 %v1638
    %2343 = vmatpush.msra.mxu0 %v1636
    %2344 = vmatmul.f32.gmra.mxu0 %v2326
    %v2345 = vpop.f32.mrf.mxu0
    %v2346 = vadd.f32 0.0, %v2345
    %2347 = vdwg.mxu0
    %2348 = vmatpush.msra.mxu0 0.0
    %2349 = vmatpush.msra.mxu0 0.0
    %2350 = vmatpush.msra.mxu0 0.0
    %2351 = vmatpush.msra.mxu0 0.0
    %2352 = vmatpush.msra.mxu0 0.0
    %2353 = vmatpush.msra.mxu0 0.0
    %2354 = vmatpush.msra.mxu0 0.0
    %2355 = vmatpush.msra.mxu0 0.0
    %2356 = vmatpush.msra.mxu0 %v1651
    %2357 = vmatpush.msra.mxu0 %v1649
    %2358 = vmatpush.msra.mxu0 %v1647
    %2359 = vmatpush.msra.mxu0 %v1645
    %2360 = vmatpush.msra.mxu0 %v1643
    %2361 = vmatpush.msra.mxu0 %v1641
    %2362 = vmatpush.msra.mxu0 %v1639
    %2363 = vmatpush.msra.mxu0 %v1637
    %2364 = vmatmul.f32.gmra.mxu0 %v2326
    %v2365 = vpop.f32.mrf.mxu0
    %v2366 = vadd.f32 0.0, %v2365
    %2367 = vdwg.mxu0
    %v2370 = vrot.slane %v2346, 2
    %v2371 = vrot.slane %v2366, 2
    %v2374 = vadd.f32 %v1611, %v2370
    %v2375 = vadd.f32 %v1634, %v2371
    %v2376 = vxor.u32 %v2374, 2147483648
    %v2377 = vmul.f32 %v2376, 1.442695
    %v2378 = vpow.pop %v2377
    %v2379 = vadd.f32 %v2378, 1.0
    %v2380 = vrcp.pop %v2379
    %v2381 = vmul.f32 %v2379, %v2380
    %v2382 = vsub.f32 1.0, %v2381
    %v2383 = vmul.f32 %v2380, %v2382
    %v2384 = vadd.f32 %v2380, %v2383
    %vm2385 = vweird.f32 %v2379
    %vm2386 = vweird.f32 %v2380
    %vm2387 = vmor %vm2385, %vm2386
    %v2388 = vsel %vm2387, %v2380, %v2384
    %v2389 = vand.u32 2147483647, %v2379
    %vm2390 = vcmp.eq.f32.partialorder %v2389, 8.507059e+37
    %v2391 = vand.u32 %v2379, 2147483648
    %v2392 = vor.u32 1.1754944e-38, %v2391
    %v2393 = vsel %vm2390, %v2392, %v2388
    %v2394 = vmul.f32 1.0, %v2393
    %v2395 = vtanh.pop %v2375
    %v2396 = vxor.u32 %v2375, 2147483648
    %v2397 = vmul.f32 %v2396, 1.442695
    %v2398 = vpow.pop %v2397
    %v2399 = vadd.f32 %v2398, 1.0
    %v2400 = vrcp.pop %v2399
    %v2401 = vmul.f32 %v2399, %v2400
    %v2402 = vsub.f32 1.0, %v2401
    %v2403 = vmul.f32 %v2400, %v2402
    %v2404 = vadd.f32 %v2400, %v2403
    %vm2405 = vweird.f32 %v2399
    %vm2406 = vweird.f32 %v2400
    %vm2407 = vmor %vm2405, %vm2406
    %v2408 = vsel %vm2407, %v2400, %v2404
    %v2409 = vand.u32 2147483647, %v2399
    %vm2410 = vcmp.eq.f32.partialorder %v2409, 8.507059e+37
    %v2411 = vand.u32 %v2399, 2147483648
    %v2412 = vor.u32 1.1754944e-38, %v2411
    %v2413 = vsel %vm2410, %v2412, %v2408
    %v2414 = vmul.f32 1.0, %v2413
    %v2416 = vrot.slane %v2319, 6
    %v2418 = vmul.f32 %v2394, %v2416
    %v2419 = vmul.f32 %v2394, %v2395
    %2421 = vrot.lane.b32.xlu0 %v2419, 64
    %v2422 = vpop.permute.xlu0 %2421
    %v2424 = vadd.f32 %v2418, %v2422
    %v2425 = vtanh.pop %v2424
    %v2426 = vmul.f32 %v2414, %v2425
    %v2427 = vld [vmem:[#allocation11] sm:$0xff]
    %v2428 = vld [vmem:[#allocation11 + $0x8] sm:$0xff]
    %v2429 = vld [vmem:[#allocation11 + $0x10] sm:$0xff]
    %v2430 = vld [vmem:[#allocation11 + $0x18] sm:$0xff]
    %v2431 = vld [vmem:[#allocation11 + $0x20] sm:$0xff]
    %v2432 = vld [vmem:[#allocation11 + $0x28] sm:$0xff]
    %v2433 = vld [vmem:[#allocation11 + $0x30] sm:$0xff]
    %v2434 = vld [vmem:[#allocation11 + $0x38] sm:$0xff]
    %v2435 = vld [vmem:[#allocation11 + $0x40] sm:$0xff]
    %v2436 = vld [vmem:[#allocation11 + $0x48] sm:$0xff]
    %v2437 = vld [vmem:[#allocation11 + $0x50] sm:$0xff]
    %v2438 = vld [vmem:[#allocation11 + $0x58] sm:$0xff]
    %v2439 = vld [vmem:[#allocation11 + $0x60] sm:$0xff]
    %v2440 = vld [vmem:[#allocation11 + $0x68] sm:$0xff]
    %v2441 = vld [vmem:[#allocation11 + $0x70] sm:$0xff]
    %v2442 = vld [vmem:[#allocation11 + $0x78] sm:$0xff]
    %v2443 = vld [vmem:[#allocation11 + $0x80] sm:$0xff]
    %v2444 = vld [vmem:[#allocation11 + $0x88] sm:$0xff]
    %v2445 = vld [vmem:[#allocation11 + $0x90] sm:$0xff]
    %v2446 = vld [vmem:[#allocation11 + $0x98] sm:$0xff]
    %v2447 = vld [vmem:[#allocation11 + $0xa0] sm:$0xff]
    %v2448 = vld [vmem:[#allocation11 + $0xa8] sm:$0xff]
    %v2449 = vld [vmem:[#allocation11 + $0xb0] sm:$0xff]
    %v2450 = vld [vmem:[#allocation11 + $0xb8] sm:$0xff]
    %v2451 = vld [vmem:[#allocation11 + $0xc0] sm:$0xff]
    %v2452 = vld [vmem:[#allocation11 + $0xc8] sm:$0xff]
    %v2453 = vld [vmem:[#allocation11 + $0xd0] sm:$0xff]
    %v2454 = vld [vmem:[#allocation11 + $0xd8] sm:$0xff]
    %v2455 = vld [vmem:[#allocation11 + $0xe0] sm:$0xff]
    %v2456 = vld [vmem:[#allocation11 + $0xe8] sm:$0xff]
    %v2457 = vld [vmem:[#allocation11 + $0xf0] sm:$0xff]
    %v2458 = vld [vmem:[#allocation11 + $0xf8] sm:$0xff]
    %v2459 = vld [vmem:[%s8] sm:$0x3]
    %v2461 = vperm.slane %v2459, 0
    %v2462 = vperm.slane %v2459, 1
    %v2466 = vrot.slane %v1542, 6
    %2468 = vmatpush.msra.mxu0 %v2457
    %2469 = vmatpush.msra.mxu0 %v2455
    %2470 = vmatpush.msra.mxu0 %v2453
    %2471 = vmatpush.msra.mxu0 %v2451
    %2472 = vmatpush.msra.mxu0 %v2449
    %2473 = vmatpush.msra.mxu0 %v2447
    %2474 = vmatpush.msra.mxu0 %v2445
    %2475 = vmatpush.msra.mxu0 %v2443
    %2476 = vmatpush.msra.mxu0 %v2441
    %2477 = vmatpush.msra.mxu0 %v2439
    %2478 = vmatpush.msra.mxu0 %v2437
    %2479 = vmatpush.msra.mxu0 %v2435
    %2480 = vmatpush.msra.mxu0 %v2433
    %2481 = vmatpush.msra.mxu0 %v2431
    %2482 = vmatpush.msra.mxu0 %v2429
    %2483 = vmatpush.msra.mxu0 %v2427
    %2484 = vmatmul.f32.gmra.mxu0 %v2466
    %v2485 = vpop.f32.mrf.mxu0
    %v2486 = vadd.f32 %v2461, %v2485
    %2487 = vdwg.mxu0
    %2488 = vmatpush.msra.mxu0 %v2458
    %2489 = vmatpush.msra.mxu0 %v2456
    %2490 = vmatpush.msra.mxu0 %v2454
    %2491 = vmatpush.msra.mxu0 %v2452
    %2492 = vmatpush.msra.mxu0 %v2450
    %2493 = vmatpush.msra.mxu0 %v2448
    %2494 = vmatpush.msra.mxu0 %v2446
    %2495 = vmatpush.msra.mxu0 %v2444
    %2496 = vmatpush.msra.mxu0 %v2442
    %2497 = vmatpush.msra.mxu0 %v2440
    %2498 = vmatpush.msra.mxu0 %v2438
    %2499 = vmatpush.msra.mxu0 %v2436
    %2500 = vmatpush.msra.mxu0 %v2434
    %2501 = vmatpush.msra.mxu0 %v2432
    %2502 = vmatpush.msra.mxu0 %v2430
    %2503 = vmatpush.msra.mxu0 %v2428
    %2504 = vmatmul.f32.gmra.mxu0 %v2466
    %v2505 = vpop.f32.mrf.mxu0
    %v2506 = vadd.f32 %v2462, %v2505
    %2507 = vdwg.mxu0
    %v2508 = vxor.u32 %v2486, 2147483648
    %v2509 = vmul.f32 %v2508, 1.442695
    %v2510 = vpow.pop %v2509
    %v2511 = vadd.f32 %v2510, 1.0
    %v2512 = vrcp.pop %v2511
    %v2513 = vmul.f32 %v2511, %v2512
    %v2514 = vsub.f32 1.0, %v2513
    %v2515 = vmul.f32 %v2512, %v2514
    %v2516 = vadd.f32 %v2512, %v2515
    %vm2517 = vweird.f32 %v2511
    %vm2518 = vweird.f32 %v2512
    %vm2519 = vmor %vm2517, %vm2518
    %v2520 = vsel %vm2519, %v2512, %v2516
    %v2521 = vand.u32 2147483647, %v2511
    %vm2522 = vcmp.eq.f32.partialorder %v2521, 8.507059e+37
    %v2523 = vand.u32 %v2511, 2147483648
    %v2524 = vor.u32 1.1754944e-38, %v2523
    %v2525 = vsel %vm2522, %v2524, %v2520
    %v2526 = vmul.f32 1.0, %v2525
    %v2527 = vtanh.pop %v2506
    %v2528 = vxor.u32 %v2506, 2147483648
    %v2529 = vmul.f32 %v2528, 1.442695
    %v2530 = vpow.pop %v2529
    %v2531 = vadd.f32 %v2530, 1.0
    %v2532 = vrcp.pop %v2531
    %v2533 = vmul.f32 %v2531, %v2532
    %v2534 = vsub.f32 1.0, %v2533
    %v2535 = vmul.f32 %v2532, %v2534
    %v2536 = vadd.f32 %v2532, %v2535
    %vm2537 = vweird.f32 %v2531
    %vm2538 = vweird.f32 %v2532
    %vm2539 = vmor %vm2537, %vm2538
    %v2540 = vsel %vm2539, %v2532, %v2536
    %v2541 = vand.u32 2147483647, %v2531
    %vm2542 = vcmp.eq.f32.partialorder %v2541, 8.507059e+37
    %v2543 = vand.u32 %v2531, 2147483648
    %v2544 = vor.u32 1.1754944e-38, %v2543
    %v2545 = vsel %vm2542, %v2544, %v2540
    %v2546 = vmul.f32 1.0, %v2545
    %v2547 = vmul.f32 %v2526, 0.0
    %v2548 = vmul.f32 %v2526, %v2527
    %2550 = vrot.lane.b32.xlu0 %v2548, 64
    %v2551 = vpop.permute.xlu0 %2550
    %v2553 = vadd.f32 %v2547, %v2551
    %v2554 = vtanh.pop %v2553
    %v2555 = vmul.f32 %v2546, %v2554
    %2557 = vrot.lane.b32.xlu0 %v2426, 64
    %v2558 = vpop.permute.xlu0 %2557
    %v2561 = vrot.slane %v2555, 2
    %v2563 = vsel %vm1520, %v2558, %v2561
    %v2564 = vmax.f32 %v2563, 0.0
    %s2565 = smul.u32 8, 16
    %s2566 = smul.u32 %s2565, 8
    %s2567 = sshll.u32 %s2566, 4
    %2568 = dma.done [#allocation4], %s2567
    %v2569 = vld [vmem:[#allocation2] sm:$0xff]
    %v2570 = vld [vmem:[#allocation2 + $0x8] sm:$0xff]
    %v2571 = vld [vmem:[#allocation2 + $0x10] sm:$0xff]
    %v2572 = vld [vmem:[#allocation2 + $0x18] sm:$0xff]
    %v2573 = vld [vmem:[#allocation2 + $0x20] sm:$0xff]
    %v2574 = vld [vmem:[#allocation2 + $0x28] sm:$0xff]
    %v2575 = vld [vmem:[#allocation2 + $0x30] sm:$0xff]
    %v2576 = vld [vmem:[#allocation2 + $0x38] sm:$0xff]
    %v2577 = vld [vmem:[#allocation2 + $0x40] sm:$0xff]
    %v2578 = vld [vmem:[#allocation2 + $0x48] sm:$0xff]
    %v2579 = vld [vmem:[#allocation2 + $0x50] sm:$0xff]
    %v2580 = vld [vmem:[#allocation2 + $0x58] sm:$0xff]
    %v2581 = vld [vmem:[#allocation2 + $0x60] sm:$0xff]
    %v2582 = vld [vmem:[#allocation2 + $0x68] sm:$0xff]
    %v2583 = vld [vmem:[#allocation2 + $0x70] sm:$0xff]
    %v2584 = vld [vmem:[#allocation2 + $0x78] sm:$0xff]
    %v2585 = vld [vmem:[#allocation2 + $0x80] sm:$0xff]
    %v2586 = vld [vmem:[#allocation2 + $0x88] sm:$0xff]
    %v2587 = vld [vmem:[#allocation2 + $0x90] sm:$0xff]
    %v2588 = vld [vmem:[#allocation2 + $0x98] sm:$0xff]
    %v2589 = vld [vmem:[#allocation2 + $0xa0] sm:$0xff]
    %v2590 = vld [vmem:[#allocation2 + $0xa8] sm:$0xff]
    %v2591 = vld [vmem:[#allocation2 + $0xb0] sm:$0xff]
    %v2592 = vld [vmem:[#allocation2 + $0xb8] sm:$0xff]
    %v2593 = vld [vmem:[#allocation2 + $0xc0] sm:$0xff]
    %v2594 = vld [vmem:[#allocation2 + $0xc8] sm:$0xff]
    %v2595 = vld [vmem:[#allocation2 + $0xd0] sm:$0xff]
    %v2596 = vld [vmem:[#allocation2 + $0xd8] sm:$0xff]
    %v2597 = vld [vmem:[#allocation2 + $0xe0] sm:$0xff]
    %v2598 = vld [vmem:[#allocation2 + $0xe8] sm:$0xff]
    %v2599 = vld [vmem:[#allocation2 + $0xf0] sm:$0xff]
    %v2600 = vld [vmem:[#allocation2 + $0xf8] sm:$0xff]
    %v2601 = vld [vmem:[#allocation2 + $0x100] sm:$0xff]
    %v2602 = vld [vmem:[#allocation2 + $0x108] sm:$0xff]
    %v2603 = vld [vmem:[#allocation2 + $0x110] sm:$0xff]
    %v2604 = vld [vmem:[#allocation2 + $0x118] sm:$0xff]
    %v2605 = vld [vmem:[#allocation2 + $0x120] sm:$0xff]
    %v2606 = vld [vmem:[#allocation2 + $0x128] sm:$0xff]
    %v2607 = vld [vmem:[#allocation2 + $0x130] sm:$0xff]
    %v2608 = vld [vmem:[#allocation2 + $0x138] sm:$0xff]
    %v2609 = vld [vmem:[#allocation2 + $0x140] sm:$0xff]
    %v2610 = vld [vmem:[#allocation2 + $0x148] sm:$0xff]
    %v2611 = vld [vmem:[#allocation2 + $0x150] sm:$0xff]
    %v2612 = vld [vmem:[#allocation2 + $0x158] sm:$0xff]
    %v2613 = vld [vmem:[#allocation2 + $0x160] sm:$0xff]
    %v2614 = vld [vmem:[#allocation2 + $0x168] sm:$0xff]
    %v2615 = vld [vmem:[#allocation2 + $0x170] sm:$0xff]
    %v2616 = vld [vmem:[#allocation2 + $0x178] sm:$0xff]
    %v2617 = vld [vmem:[#allocation2 + $0x180] sm:$0xff]
    %v2618 = vld [vmem:[#allocation2 + $0x188] sm:$0xff]
    %v2619 = vld [vmem:[#allocation2 + $0x190] sm:$0xff]
    %v2620 = vld [vmem:[#allocation2 + $0x198] sm:$0xff]
    %v2621 = vld [vmem:[#allocation2 + $0x1a0] sm:$0xff]
    %v2622 = vld [vmem:[#allocation2 + $0x1a8] sm:$0xff]
    %v2623 = vld [vmem:[#allocation2 + $0x1b0] sm:$0xff]
    %v2624 = vld [vmem:[#allocation2 + $0x1b8] sm:$0xff]
    %v2625 = vld [vmem:[#allocation2 + $0x1c0] sm:$0xff]
    %v2626 = vld [vmem:[#allocation2 + $0x1c8] sm:$0xff]
    %v2627 = vld [vmem:[#allocation2 + $0x1d0] sm:$0xff]
    %v2628 = vld [vmem:[#allocation2 + $0x1d8] sm:$0xff]
    %v2629 = vld [vmem:[#allocation2 + $0x1e0] sm:$0xff]
    %v2630 = vld [vmem:[#allocation2 + $0x1e8] sm:$0xff]
    %v2631 = vld [vmem:[#allocation2 + $0x1f0] sm:$0xff]
    %v2632 = vld [vmem:[#allocation2 + $0x1f8] sm:$0xff]
    %v2633 = vld [vmem:[#allocation2 + $0x200] sm:$0xff]
    %v2634 = vld [vmem:[#allocation2 + $0x208] sm:$0xff]
    %v2635 = vld [vmem:[#allocation2 + $0x210] sm:$0xff]
    %v2636 = vld [vmem:[#allocation2 + $0x218] sm:$0xff]
    %v2637 = vld [vmem:[#allocation2 + $0x220] sm:$0xff]
    %v2638 = vld [vmem:[#allocation2 + $0x228] sm:$0xff]
    %v2639 = vld [vmem:[#allocation2 + $0x230] sm:$0xff]
    %v2640 = vld [vmem:[#allocation2 + $0x238] sm:$0xff]
    %v2641 = vld [vmem:[#allocation2 + $0x240] sm:$0xff]
    %v2642 = vld [vmem:[#allocation2 + $0x248] sm:$0xff]
    %v2643 = vld [vmem:[#allocation2 + $0x250] sm:$0xff]
    %v2644 = vld [vmem:[#allocation2 + $0x258] sm:$0xff]
    %v2645 = vld [vmem:[#allocation2 + $0x260] sm:$0xff]
    %v2646 = vld [vmem:[#allocation2 + $0x268] sm:$0xff]
    %v2647 = vld [vmem:[#allocation2 + $0x270] sm:$0xff]
    %v2648 = vld [vmem:[#allocation2 + $0x278] sm:$0xff]
    %v2649 = vld [vmem:[#allocation2 + $0x280] sm:$0xff]
    %v2650 = vld [vmem:[#allocation2 + $0x288] sm:$0xff]
    %v2651 = vld [vmem:[#allocation2 + $0x290] sm:$0xff]
    %v2652 = vld [vmem:[#allocation2 + $0x298] sm:$0xff]
    %v2653 = vld [vmem:[#allocation2 + $0x2a0] sm:$0xff]
    %v2654 = vld [vmem:[#allocation2 + $0x2a8] sm:$0xff]
    %v2655 = vld [vmem:[#allocation2 + $0x2b0] sm:$0xff]
    %v2656 = vld [vmem:[#allocation2 + $0x2b8] sm:$0xff]
    %v2657 = vld [vmem:[#allocation2 + $0x2c0] sm:$0xff]
    %v2658 = vld [vmem:[#allocation2 + $0x2c8] sm:$0xff]
    %v2659 = vld [vmem:[#allocation2 + $0x2d0] sm:$0xff]
    %v2660 = vld [vmem:[#allocation2 + $0x2d8] sm:$0xff]
    %v2661 = vld [vmem:[#allocation2 + $0x2e0] sm:$0xff]
    %v2662 = vld [vmem:[#allocation2 + $0x2e8] sm:$0xff]
    %v2663 = vld [vmem:[#allocation2 + $0x2f0] sm:$0xff]
    %v2664 = vld [vmem:[#allocation2 + $0x2f8] sm:$0xff]
    %v2665 = vld [vmem:[#allocation2 + $0x300] sm:$0xff]
    %v2666 = vld [vmem:[#allocation2 + $0x308] sm:$0xff]
    %v2667 = vld [vmem:[#allocation2 + $0x310] sm:$0xff]
    %v2668 = vld [vmem:[#allocation2 + $0x318] sm:$0xff]
    %v2669 = vld [vmem:[#allocation2 + $0x320] sm:$0xff]
    %v2670 = vld [vmem:[#allocation2 + $0x328] sm:$0xff]
    %v2671 = vld [vmem:[#allocation2 + $0x330] sm:$0xff]
    %v2672 = vld [vmem:[#allocation2 + $0x338] sm:$0xff]
    %v2673 = vld [vmem:[#allocation2 + $0x340] sm:$0xff]
    %v2674 = vld [vmem:[#allocation2 + $0x348] sm:$0xff]
    %v2675 = vld [vmem:[#allocation2 + $0x350] sm:$0xff]
    %v2676 = vld [vmem:[#allocation2 + $0x358] sm:$0xff]
    %v2677 = vld [vmem:[#allocation2 + $0x360] sm:$0xff]
    %v2678 = vld [vmem:[#allocation2 + $0x368] sm:$0xff]
    %v2679 = vld [vmem:[#allocation2 + $0x370] sm:$0xff]
    %v2680 = vld [vmem:[#allocation2 + $0x378] sm:$0xff]
    %v2681 = vld [vmem:[#allocation2 + $0x380] sm:$0xff]
    %v2682 = vld [vmem:[#allocation2 + $0x388] sm:$0xff]
    %v2683 = vld [vmem:[#allocation2 + $0x390] sm:$0xff]
    %v2684 = vld [vmem:[#allocation2 + $0x398] sm:$0xff]
    %v2685 = vld [vmem:[#allocation2 + $0x3a0] sm:$0xff]
    %v2686 = vld [vmem:[#allocation2 + $0x3a8] sm:$0xff]
    %v2687 = vld [vmem:[#allocation2 + $0x3b0] sm:$0xff]
    %v2688 = vld [vmem:[#allocation2 + $0x3b8] sm:$0xff]
    %v2689 = vld [vmem:[#allocation2 + $0x3c0] sm:$0xff]
    %v2690 = vld [vmem:[#allocation2 + $0x3c8] sm:$0xff]
    %v2691 = vld [vmem:[#allocation2 + $0x3d0] sm:$0xff]
    %v2692 = vld [vmem:[#allocation2 + $0x3d8] sm:$0xff]
    %v2693 = vld [vmem:[#allocation2 + $0x3e0] sm:$0xff]
    %v2694 = vld [vmem:[#allocation2 + $0x3e8] sm:$0xff]
    %v2695 = vld [vmem:[#allocation2 + $0x3f0] sm:$0xff]
    %v2696 = vld [vmem:[#allocation2 + $0x3f8] sm:$0xff]
    %v2697 = vld [vmem:[%s10] sm:$0xff]
    %v2699 = vperm.slane %v2697, 0
    %v2700 = vperm.slane %v2697, 1
    %v2701 = vperm.slane %v2697, 2
    %v2702 = vperm.slane %v2697, 3
    %v2703 = vperm.slane %v2697, 4
    %v2704 = vperm.slane %v2697, 5
    %v2705 = vperm.slane %v2697, 6
    %v2706 = vperm.slane %v2697, 7
    %v2716 = vrot.slane %v2564, 6
    %2718 = vmatpush.msra.mxu0 %v2689
    %2719 = vmatpush.msra.mxu0 %v2681
    %2720 = vmatpush.msra.mxu0 %v2673
    %2721 = vmatpush.msra.mxu0 %v2665
    %2722 = vmatpush.msra.mxu0 %v2657
    %2723 = vmatpush.msra.mxu0 %v2649
    %2724 = vmatpush.msra.mxu0 %v2641
    %2725 = vmatpush.msra.mxu0 %v2633
    %2726 = vmatpush.msra.mxu0 %v2625
    %2727 = vmatpush.msra.mxu0 %v2617
    %2728 = vmatpush.msra.mxu0 %v2609
    %2729 = vmatpush.msra.mxu0 %v2601
    %2730 = vmatpush.msra.mxu0 %v2593
    %2731 = vmatpush.msra.mxu0 %v2585
    %2732 = vmatpush.msra.mxu0 %v2577
    %2733 = vmatpush.msra.mxu0 %v2569
    %2734 = vmatmul.f32.gmra.mxu0 %v2716
    %v2735 = vpop.f32.mrf.mxu0
    %v2736 = vadd.f32 %v2699, %v2735
    %2737 = vdwg.mxu0
    %2738 = vmatpush.msra.mxu0 %v2690
    %2739 = vmatpush.msra.mxu0 %v2682
    %2740 = vmatpush.msra.mxu0 %v2674
    %2741 = vmatpush.msra.mxu0 %v2666
    %2742 = vmatpush.msra.mxu0 %v2658
    %2743 = vmatpush.msra.mxu0 %v2650
    %2744 = vmatpush.msra.mxu0 %v2642
    %2745 = vmatpush.msra.mxu0 %v2634
    %2746 = vmatpush.msra.mxu0 %v2626
    %2747 = vmatpush.msra.mxu0 %v2618
    %2748 = vmatpush.msra.mxu0 %v2610
    %2749 = vmatpush.msra.mxu0 %v2602
    %2750 = vmatpush.msra.mxu0 %v2594
    %2751 = vmatpush.msra.mxu0 %v2586
    %2752 = vmatpush.msra.mxu0 %v2578
    %2753 = vmatpush.msra.mxu0 %v2570
    %2754 = vmatmul.f32.gmra.mxu0 %v2716
    %v2755 = vpop.f32.mrf.mxu0
    %v2756 = vadd.f32 %v2700, %v2755
    %2757 = vdwg.mxu0
    %2758 = vmatpush.msra.mxu0 %v2691
    %2759 = vmatpush.msra.mxu0 %v2683
    %2760 = vmatpush.msra.mxu0 %v2675
    %2761 = vmatpush.msra.mxu0 %v2667
    %2762 = vmatpush.msra.mxu0 %v2659
    %2763 = vmatpush.msra.mxu0 %v2651
    %2764 = vmatpush.msra.mxu0 %v2643
    %2765 = vmatpush.msra.mxu0 %v2635
    %2766 = vmatpush.msra.mxu0 %v2627
    %2767 = vmatpush.msra.mxu0 %v2619
    %2768 = vmatpush.msra.mxu0 %v2611
    %2769 = vmatpush.msra.mxu0 %v2603
    %2770 = vmatpush.msra.mxu0 %v2595
    %2771 = vmatpush.msra.mxu0 %v2587
    %2772 = vmatpush.msra.mxu0 %v2579
    %2773 = vmatpush.msra.mxu0 %v2571
    %2774 = vmatmul.f32.gmra.mxu0 %v2716
    %v2775 = vpop.f32.mrf.mxu0
    %v2776 = vadd.f32 %v2701, %v2775
    %2777 = vdwg.mxu0
    %2778 = vmatpush.msra.mxu0 %v2692
    %2779 = vmatpush.msra.mxu0 %v2684
    %2780 = vmatpush.msra.mxu0 %v2676
    %2781 = vmatpush.msra.mxu0 %v2668
    %2782 = vmatpush.msra.mxu0 %v2660
    %2783 = vmatpush.msra.mxu0 %v2652
    %2784 = vmatpush.msra.mxu0 %v2644
    %2785 = vmatpush.msra.mxu0 %v2636
    %2786 = vmatpush.msra.mxu0 %v2628
    %2787 = vmatpush.msra.mxu0 %v2620
    %2788 = vmatpush.msra.mxu0 %v2612
    %2789 = vmatpush.msra.mxu0 %v2604
    %2790 = vmatpush.msra.mxu0 %v2596
    %2791 = vmatpush.msra.mxu0 %v2588
    %2792 = vmatpush.msra.mxu0 %v2580
    %2793 = vmatpush.msra.mxu0 %v2572
    %2794 = vmatmul.f32.gmra.mxu0 %v2716
    %v2795 = vpop.f32.mrf.mxu0
    %v2796 = vadd.f32 %v2702, %v2795
    %2797 = vdwg.mxu0
    %2798 = vmatpush.msra.mxu0 %v2693
    %2799 = vmatpush.msra.mxu0 %v2685
    %2800 = vmatpush.msra.mxu0 %v2677
    %2801 = vmatpush.msra.mxu0 %v2669
    %2802 = vmatpush.msra.mxu0 %v2661
    %2803 = vmatpush.msra.mxu0 %v2653
    %2804 = vmatpush.msra.mxu0 %v2645
    %2805 = vmatpush.msra.mxu0 %v2637
    %2806 = vmatpush.msra.mxu0 %v2629
    %2807 = vmatpush.msra.mxu0 %v2621
    %2808 = vmatpush.msra.mxu0 %v2613
    %2809 = vmatpush.msra.mxu0 %v2605
    %2810 = vmatpush.msra.mxu0 %v2597
    %2811 = vmatpush.msra.mxu0 %v2589
    %2812 = vmatpush.msra.mxu0 %v2581
    %2813 = vmatpush.msra.mxu0 %v2573
    %2814 = vmatmul.f32.gmra.mxu0 %v2716
    %v2815 = vpop.f32.mrf.mxu0
    %v2816 = vadd.f32 %v2703, %v2815
    %2817 = vdwg.mxu0
    %2818 = vmatpush.msra.mxu0 %v2694
    %2819 = vmatpush.msra.mxu0 %v2686
    %2820 = vmatpush.msra.mxu0 %v2678
    %2821 = vmatpush.msra.mxu0 %v2670
    %2822 = vmatpush.msra.mxu0 %v2662
    %2823 = vmatpush.msra.mxu0 %v2654
    %2824 = vmatpush.msra.mxu0 %v2646
    %2825 = vmatpush.msra.mxu0 %v2638
    %2826 = vmatpush.msra.mxu0 %v2630
    %2827 = vmatpush.msra.mxu0 %v2622
    %2828 = vmatpush.msra.mxu0 %v2614
    %2829 = vmatpush.msra.mxu0 %v2606
    %2830 = vmatpush.msra.mxu0 %v2598
    %2831 = vmatpush.msra.mxu0 %v2590
    %2832 = vmatpush.msra.mxu0 %v2582
    %2833 = vmatpush.msra.mxu0 %v2574
    %2834 = vmatmul.f32.gmra.mxu0 %v2716
    %v2835 = vpop.f32.mrf.mxu0
    %v2836 = vadd.f32 %v2704, %v2835
    %2837 = vdwg.mxu0
    %2838 = vmatpush.msra.mxu0 %v2695
    %2839 = vmatpush.msra.mxu0 %v2687
    %2840 = vmatpush.msra.mxu0 %v2679
    %2841 = vmatpush.msra.mxu0 %v2671
    %2842 = vmatpush.msra.mxu0 %v2663
    %2843 = vmatpush.msra.mxu0 %v2655
    %2844 = vmatpush.msra.mxu0 %v2647
    %2845 = vmatpush.msra.mxu0 %v2639
    %2846 = vmatpush.msra.mxu0 %v2631
    %2847 = vmatpush.msra.mxu0 %v2623
    %2848 = vmatpush.msra.mxu0 %v2615
    %2849 = vmatpush.msra.mxu0 %v2607
    %2850 = vmatpush.msra.mxu0 %v2599
    %2851 = vmatpush.msra.mxu0 %v2591
    %2852 = vmatpush.msra.mxu0 %v2583
    %2853 = vmatpush.msra.mxu0 %v2575
    %2854 = vmatmul.f32.gmra.mxu0 %v2716
    %v2855 = vpop.f32.mrf.mxu0
    %v2856 = vadd.f32 %v2705, %v2855
    %2857 = vdwg.mxu0
    %2858 = vmatpush.msra.mxu0 %v2696
    %2859 = vmatpush.msra.mxu0 %v2688
    %2860 = vmatpush.msra.mxu0 %v2680
    %2861 = vmatpush.msra.mxu0 %v2672
    %2862 = vmatpush.msra.mxu0 %v2664
    %2863 = vmatpush.msra.mxu0 %v2656
    %2864 = vmatpush.msra.mxu0 %v2648
    %2865 = vmatpush.msra.mxu0 %v2640
    %2866 = vmatpush.msra.mxu0 %v2632
    %2867 = vmatpush.msra.mxu0 %v2624
    %2868 = vmatpush.msra.mxu0 %v2616
    %2869 = vmatpush.msra.mxu0 %v2608
    %2870 = vmatpush.msra.mxu0 %v2600
    %2871 = vmatpush.msra.mxu0 %v2592
    %2872 = vmatpush.msra.mxu0 %v2584
    %2873 = vmatpush.msra.mxu0 %v2576
    %2874 = vmatmul.f32.gmra.mxu0 %v2716
    %v2875 = vpop.f32.mrf.mxu0
    %v2876 = vadd.f32 %v2706, %v2875
    %2877 = vdwg.mxu0
    %v2878 = vmax.f32 %v2736, 0.0
    %v2879 = vmax.f32 %v2756, 0.0
    %v2880 = vmax.f32 %v2776, 0.0
    %v2881 = vmax.f32 %v2796, 0.0
    %v2882 = vmax.f32 %v2816, 0.0
    %v2883 = vmax.f32 %v2836, 0.0
    %v2884 = vmax.f32 %v2856, 0.0
    %v2885 = vmax.f32 %v2876, 0.0
    %s2886 = smul.u32 8, 128
    %s2887 = smul.u32 %s2886, 2
    %s2888 = sshll.u32 %s2887, 4
    %2889 = dma.done %s124, %s2888
    %v2890 = vld [vmem:[#allocation3] sm:$0xff]
    %v2891 = vld [vmem:[#allocation3 + $0x8] sm:$0xff]
    %v2892 = vld [vmem:[#allocation3 + $0x10] sm:$0xff]
    %v2893 = vld [vmem:[#allocation3 + $0x18] sm:$0xff]
    %v2894 = vld [vmem:[#allocation3 + $0x20] sm:$0xff]
    %v2895 = vld [vmem:[#allocation3 + $0x28] sm:$0xff]
    %v2896 = vld [vmem:[#allocation3 + $0x30] sm:$0xff]
    %v2897 = vld [vmem:[#allocation3 + $0x38] sm:$0xff]
    %v2898 = vld [vmem:[#allocation3 + $0x40] sm:$0xff]
    %v2899 = vld [vmem:[#allocation3 + $0x48] sm:$0xff]
    %v2900 = vld [vmem:[#allocation3 + $0x50] sm:$0xff]
    %v2901 = vld [vmem:[#allocation3 + $0x58] sm:$0xff]
    %v2902 = vld [vmem:[#allocation3 + $0x60] sm:$0xff]
    %v2903 = vld [vmem:[#allocation3 + $0x68] sm:$0xff]
    %v2904 = vld [vmem:[#allocation3 + $0x70] sm:$0xff]
    %v2905 = vld [vmem:[#allocation3 + $0x78] sm:$0xff]
    %v2906 = vld [vmem:[#allocation3 + $0x80] sm:$0xff]
    %v2907 = vld [vmem:[#allocation3 + $0x88] sm:$0xff]
    %v2908 = vld [vmem:[#allocation3 + $0x90] sm:$0xff]
    %v2909 = vld [vmem:[#allocation3 + $0x98] sm:$0xff]
    %v2910 = vld [vmem:[#allocation3 + $0xa0] sm:$0xff]
    %v2911 = vld [vmem:[#allocation3 + $0xa8] sm:$0xff]
    %v2912 = vld [vmem:[#allocation3 + $0xb0] sm:$0xff]
    %v2913 = vld [vmem:[#allocation3 + $0xb8] sm:$0xff]
    %v2914 = vld [vmem:[#allocation3 + $0xc0] sm:$0xff]
    %v2915 = vld [vmem:[#allocation3 + $0xc8] sm:$0xff]
    %v2916 = vld [vmem:[#allocation3 + $0xd0] sm:$0xff]
    %v2917 = vld [vmem:[#allocation3 + $0xd8] sm:$0xff]
    %v2918 = vld [vmem:[#allocation3 + $0xe0] sm:$0xff]
    %v2919 = vld [vmem:[#allocation3 + $0xe8] sm:$0xff]
    %v2920 = vld [vmem:[#allocation3 + $0xf0] sm:$0xff]
    %v2921 = vld [vmem:[#allocation3 + $0xf8] sm:$0xff]
    %v2922 = vld [vmem:[#allocation3 + $0x100] sm:$0xff]
    %v2923 = vld [vmem:[#allocation3 + $0x108] sm:$0xff]
    %v2924 = vld [vmem:[#allocation3 + $0x110] sm:$0xff]
    %v2925 = vld [vmem:[#allocation3 + $0x118] sm:$0xff]
    %v2926 = vld [vmem:[#allocation3 + $0x120] sm:$0xff]
    %v2927 = vld [vmem:[#allocation3 + $0x128] sm:$0xff]
    %v2928 = vld [vmem:[#allocation3 + $0x130] sm:$0xff]
    %v2929 = vld [vmem:[#allocation3 + $0x138] sm:$0xff]
    %v2930 = vld [vmem:[#allocation3 + $0x140] sm:$0xff]
    %v2931 = vld [vmem:[#allocation3 + $0x148] sm:$0xff]
    %v2932 = vld [vmem:[#allocation3 + $0x150] sm:$0xff]
    %v2933 = vld [vmem:[#allocation3 + $0x158] sm:$0xff]
    %v2934 = vld [vmem:[#allocation3 + $0x160] sm:$0xff]
    %v2935 = vld [vmem:[#allocation3 + $0x168] sm:$0xff]
    %v2936 = vld [vmem:[#allocation3 + $0x170] sm:$0xff]
    %v2937 = vld [vmem:[#allocation3 + $0x178] sm:$0xff]
    %v2938 = vld [vmem:[#allocation3 + $0x180] sm:$0xff]
    %v2939 = vld [vmem:[#allocation3 + $0x188] sm:$0xff]
    %v2940 = vld [vmem:[#allocation3 + $0x190] sm:$0xff]
    %v2941 = vld [vmem:[#allocation3 + $0x198] sm:$0xff]
    %v2942 = vld [vmem:[#allocation3 + $0x1a0] sm:$0xff]
    %v2943 = vld [vmem:[#allocation3 + $0x1a8] sm:$0xff]
    %v2944 = vld [vmem:[#allocation3 + $0x1b0] sm:$0xff]
    %v2945 = vld [vmem:[#allocation3 + $0x1b8] sm:$0xff]
    %v2946 = vld [vmem:[#allocation3 + $0x1c0] sm:$0xff]
    %v2947 = vld [vmem:[#allocation3 + $0x1c8] sm:$0xff]
    %v2948 = vld [vmem:[#allocation3 + $0x1d0] sm:$0xff]
    %v2949 = vld [vmem:[#allocation3 + $0x1d8] sm:$0xff]
    %v2950 = vld [vmem:[#allocation3 + $0x1e0] sm:$0xff]
    %v2951 = vld [vmem:[#allocation3 + $0x1e8] sm:$0xff]
    %v2952 = vld [vmem:[#allocation3 + $0x1f0] sm:$0xff]
    %v2953 = vld [vmem:[#allocation3 + $0x1f8] sm:$0xff]
    %v2954 = vld [vmem:[#allocation3 + $0x200] sm:$0xff]
    %v2955 = vld [vmem:[#allocation3 + $0x208] sm:$0xff]
    %v2956 = vld [vmem:[#allocation3 + $0x210] sm:$0xff]
    %v2957 = vld [vmem:[#allocation3 + $0x218] sm:$0xff]
    %v2958 = vld [vmem:[#allocation3 + $0x220] sm:$0xff]
    %v2959 = vld [vmem:[#allocation3 + $0x228] sm:$0xff]
    %v2960 = vld [vmem:[#allocation3 + $0x230] sm:$0xff]
    %v2961 = vld [vmem:[#allocation3 + $0x238] sm:$0xff]
    %v2962 = vld [vmem:[#allocation3 + $0x240] sm:$0xff]
    %v2963 = vld [vmem:[#allocation3 + $0x248] sm:$0xff]
    %v2964 = vld [vmem:[#allocation3 + $0x250] sm:$0xff]
    %v2965 = vld [vmem:[#allocation3 + $0x258] sm:$0xff]
    %v2966 = vld [vmem:[#allocation3 + $0x260] sm:$0xff]
    %v2967 = vld [vmem:[#allocation3 + $0x268] sm:$0xff]
    %v2968 = vld [vmem:[#allocation3 + $0x270] sm:$0xff]
    %v2969 = vld [vmem:[#allocation3 + $0x278] sm:$0xff]
    %v2970 = vld [vmem:[#allocation3 + $0x280] sm:$0xff]
    %v2971 = vld [vmem:[#allocation3 + $0x288] sm:$0xff]
    %v2972 = vld [vmem:[#allocation3 + $0x290] sm:$0xff]
    %v2973 = vld [vmem:[#allocation3 + $0x298] sm:$0xff]
    %v2974 = vld [vmem:[#allocation3 + $0x2a0] sm:$0xff]
    %v2975 = vld [vmem:[#allocation3 + $0x2a8] sm:$0xff]
    %v2976 = vld [vmem:[#allocation3 + $0x2b0] sm:$0xff]
    %v2977 = vld [vmem:[#allocation3 + $0x2b8] sm:$0xff]
    %v2978 = vld [vmem:[#allocation3 + $0x2c0] sm:$0xff]
    %v2979 = vld [vmem:[#allocation3 + $0x2c8] sm:$0xff]
    %v2980 = vld [vmem:[#allocation3 + $0x2d0] sm:$0xff]
    %v2981 = vld [vmem:[#allocation3 + $0x2d8] sm:$0xff]
    %v2982 = vld [vmem:[#allocation3 + $0x2e0] sm:$0xff]
    %v2983 = vld [vmem:[#allocation3 + $0x2e8] sm:$0xff]
    %v2984 = vld [vmem:[#allocation3 + $0x2f0] sm:$0xff]
    %v2985 = vld [vmem:[#allocation3 + $0x2f8] sm:$0xff]
    %v2986 = vld [vmem:[#allocation3 + $0x300] sm:$0xff]
    %v2987 = vld [vmem:[#allocation3 + $0x308] sm:$0xff]
    %v2988 = vld [vmem:[#allocation3 + $0x310] sm:$0xff]
    %v2989 = vld [vmem:[#allocation3 + $0x318] sm:$0xff]
    %v2990 = vld [vmem:[#allocation3 + $0x320] sm:$0xff]
    %v2991 = vld [vmem:[#allocation3 + $0x328] sm:$0xff]
    %v2992 = vld [vmem:[#allocation3 + $0x330] sm:$0xff]
    %v2993 = vld [vmem:[#allocation3 + $0x338] sm:$0xff]
    %v2994 = vld [vmem:[#allocation3 + $0x340] sm:$0xff]
    %v2995 = vld [vmem:[#allocation3 + $0x348] sm:$0xff]
    %v2996 = vld [vmem:[#allocation3 + $0x350] sm:$0xff]
    %v2997 = vld [vmem:[#allocation3 + $0x358] sm:$0xff]
    %v2998 = vld [vmem:[#allocation3 + $0x360] sm:$0xff]
    %v2999 = vld [vmem:[#allocation3 + $0x368] sm:$0xff]
    %v3000 = vld [vmem:[#allocation3 + $0x370] sm:$0xff]
    %v3001 = vld [vmem:[#allocation3 + $0x378] sm:$0xff]
    %v3002 = vld [vmem:[#allocation3 + $0x380] sm:$0xff]
    %v3003 = vld [vmem:[#allocation3 + $0x388] sm:$0xff]
    %v3004 = vld [vmem:[#allocation3 + $0x390] sm:$0xff]
    %v3005 = vld [vmem:[#allocation3 + $0x398] sm:$0xff]
    %v3006 = vld [vmem:[#allocation3 + $0x3a0] sm:$0xff]
    %v3007 = vld [vmem:[#allocation3 + $0x3a8] sm:$0xff]
    %v3008 = vld [vmem:[#allocation3 + $0x3b0] sm:$0xff]
    %v3009 = vld [vmem:[#allocation3 + $0x3b8] sm:$0xff]
    %v3010 = vld [vmem:[#allocation3 + $0x3c0] sm:$0xff]
    %v3011 = vld [vmem:[#allocation3 + $0x3c8] sm:$0xff]
    %v3012 = vld [vmem:[#allocation3 + $0x3d0] sm:$0xff]
    %v3013 = vld [vmem:[#allocation3 + $0x3d8] sm:$0xff]
    %v3014 = vld [vmem:[#allocation3 + $0x3e0] sm:$0xff]
    %v3015 = vld [vmem:[#allocation3 + $0x3e8] sm:$0xff]
    %v3016 = vld [vmem:[#allocation3 + $0x3f0] sm:$0xff]
    %v3017 = vld [vmem:[#allocation3 + $0x3f8] sm:$0xff]
    %v3018 = vld [vmem:[#allocation3 + $0x400] sm:$0xff]
    %v3019 = vld [vmem:[#allocation3 + $0x408] sm:$0xff]
    %v3020 = vld [vmem:[#allocation3 + $0x410] sm:$0xff]
    %v3021 = vld [vmem:[#allocation3 + $0x418] sm:$0xff]
    %v3022 = vld [vmem:[#allocation3 + $0x420] sm:$0xff]
    %v3023 = vld [vmem:[#allocation3 + $0x428] sm:$0xff]
    %v3024 = vld [vmem:[#allocation3 + $0x430] sm:$0xff]
    %v3025 = vld [vmem:[#allocation3 + $0x438] sm:$0xff]
    %v3026 = vld [vmem:[#allocation3 + $0x440] sm:$0xff]
    %v3027 = vld [vmem:[#allocation3 + $0x448] sm:$0xff]
    %v3028 = vld [vmem:[#allocation3 + $0x450] sm:$0xff]
    %v3029 = vld [vmem:[#allocation3 + $0x458] sm:$0xff]
    %v3030 = vld [vmem:[#allocation3 + $0x460] sm:$0xff]
    %v3031 = vld [vmem:[#allocation3 + $0x468] sm:$0xff]
    %v3032 = vld [vmem:[#allocation3 + $0x470] sm:$0xff]
    %v3033 = vld [vmem:[#allocation3 + $0x478] sm:$0xff]
    %v3034 = vld [vmem:[#allocation3 + $0x480] sm:$0xff]
    %v3035 = vld [vmem:[#allocation3 + $0x488] sm:$0xff]
    %v3036 = vld [vmem:[#allocation3 + $0x490] sm:$0xff]
    %v3037 = vld [vmem:[#allocation3 + $0x498] sm:$0xff]
    %v3038 = vld [vmem:[#allocation3 + $0x4a0] sm:$0xff]
    %v3039 = vld [vmem:[#allocation3 + $0x4a8] sm:$0xff]
    %v3040 = vld [vmem:[#allocation3 + $0x4b0] sm:$0xff]
    %v3041 = vld [vmem:[#allocation3 + $0x4b8] sm:$0xff]
    %v3042 = vld [vmem:[#allocation3 + $0x4c0] sm:$0xff]
    %v3043 = vld [vmem:[#allocation3 + $0x4c8] sm:$0xff]
    %v3044 = vld [vmem:[#allocation3 + $0x4d0] sm:$0xff]
    %v3045 = vld [vmem:[#allocation3 + $0x4d8] sm:$0xff]
    %v3046 = vld [vmem:[#allocation3 + $0x4e0] sm:$0xff]
    %v3047 = vld [vmem:[#allocation3 + $0x4e8] sm:$0xff]
    %v3048 = vld [vmem:[#allocation3 + $0x4f0] sm:$0xff]
    %v3049 = vld [vmem:[#allocation3 + $0x4f8] sm:$0xff]
    %v3050 = vld [vmem:[#allocation3 + $0x500] sm:$0xff]
    %v3051 = vld [vmem:[#allocation3 + $0x508] sm:$0xff]
    %v3052 = vld [vmem:[#allocation3 + $0x510] sm:$0xff]
    %v3053 = vld [vmem:[#allocation3 + $0x518] sm:$0xff]
    %v3054 = vld [vmem:[#allocation3 + $0x520] sm:$0xff]
    %v3055 = vld [vmem:[#allocation3 + $0x528] sm:$0xff]
    %v3056 = vld [vmem:[#allocation3 + $0x530] sm:$0xff]
    %v3057 = vld [vmem:[#allocation3 + $0x538] sm:$0xff]
    %v3058 = vld [vmem:[#allocation3 + $0x540] sm:$0xff]
    %v3059 = vld [vmem:[#allocation3 + $0x548] sm:$0xff]
    %v3060 = vld [vmem:[#allocation3 + $0x550] sm:$0xff]
    %v3061 = vld [vmem:[#allocation3 + $0x558] sm:$0xff]
    %v3062 = vld [vmem:[#allocation3 + $0x560] sm:$0xff]
    %v3063 = vld [vmem:[#allocation3 + $0x568] sm:$0xff]
    %v3064 = vld [vmem:[#allocation3 + $0x570] sm:$0xff]
    %v3065 = vld [vmem:[#allocation3 + $0x578] sm:$0xff]
    %v3066 = vld [vmem:[#allocation3 + $0x580] sm:$0xff]
    %v3067 = vld [vmem:[#allocation3 + $0x588] sm:$0xff]
    %v3068 = vld [vmem:[#allocation3 + $0x590] sm:$0xff]
    %v3069 = vld [vmem:[#allocation3 + $0x598] sm:$0xff]
    %v3070 = vld [vmem:[#allocation3 + $0x5a0] sm:$0xff]
    %v3071 = vld [vmem:[#allocation3 + $0x5a8] sm:$0xff]
    %v3072 = vld [vmem:[#allocation3 + $0x5b0] sm:$0xff]
    %v3073 = vld [vmem:[#allocation3 + $0x5b8] sm:$0xff]
    %v3074 = vld [vmem:[#allocation3 + $0x5c0] sm:$0xff]
    %v3075 = vld [vmem:[#allocation3 + $0x5c8] sm:$0xff]
    %v3076 = vld [vmem:[#allocation3 + $0x5d0] sm:$0xff]
    %v3077 = vld [vmem:[#allocation3 + $0x5d8] sm:$0xff]
    %v3078 = vld [vmem:[#allocation3 + $0x5e0] sm:$0xff]
    %v3079 = vld [vmem:[#allocation3 + $0x5e8] sm:$0xff]
    %v3080 = vld [vmem:[#allocation3 + $0x5f0] sm:$0xff]
    %v3081 = vld [vmem:[#allocation3 + $0x5f8] sm:$0xff]
    %v3082 = vld [vmem:[#allocation3 + $0x600] sm:$0xff]
    %v3083 = vld [vmem:[#allocation3 + $0x608] sm:$0xff]
    %v3084 = vld [vmem:[#allocation3 + $0x610] sm:$0xff]
    %v3085 = vld [vmem:[#allocation3 + $0x618] sm:$0xff]
    %v3086 = vld [vmem:[#allocation3 + $0x620] sm:$0xff]
    %v3087 = vld [vmem:[#allocation3 + $0x628] sm:$0xff]
    %v3088 = vld [vmem:[#allocation3 + $0x630] sm:$0xff]
    %v3089 = vld [vmem:[#allocation3 + $0x638] sm:$0xff]
    %v3090 = vld [vmem:[#allocation3 + $0x640] sm:$0xff]
    %v3091 = vld [vmem:[#allocation3 + $0x648] sm:$0xff]
    %v3092 = vld [vmem:[#allocation3 + $0x650] sm:$0xff]
    %v3093 = vld [vmem:[#allocation3 + $0x658] sm:$0xff]
    %v3094 = vld [vmem:[#allocation3 + $0x660] sm:$0xff]
    %v3095 = vld [vmem:[#allocation3 + $0x668] sm:$0xff]
    %v3096 = vld [vmem:[#allocation3 + $0x670] sm:$0xff]
    %v3097 = vld [vmem:[#allocation3 + $0x678] sm:$0xff]
    %v3098 = vld [vmem:[#allocation3 + $0x680] sm:$0xff]
    %v3099 = vld [vmem:[#allocation3 + $0x688] sm:$0xff]
    %v3100 = vld [vmem:[#allocation3 + $0x690] sm:$0xff]
    %v3101 = vld [vmem:[#allocation3 + $0x698] sm:$0xff]
    %v3102 = vld [vmem:[#allocation3 + $0x6a0] sm:$0xff]
    %v3103 = vld [vmem:[#allocation3 + $0x6a8] sm:$0xff]
    %v3104 = vld [vmem:[#allocation3 + $0x6b0] sm:$0xff]
    %v3105 = vld [vmem:[#allocation3 + $0x6b8] sm:$0xff]
    %v3106 = vld [vmem:[#allocation3 + $0x6c0] sm:$0xff]
    %v3107 = vld [vmem:[#allocation3 + $0x6c8] sm:$0xff]
    %v3108 = vld [vmem:[#allocation3 + $0x6d0] sm:$0xff]
    %v3109 = vld [vmem:[#allocation3 + $0x6d8] sm:$0xff]
    %v3110 = vld [vmem:[#allocation3 + $0x6e0] sm:$0xff]
    %v3111 = vld [vmem:[#allocation3 + $0x6e8] sm:$0xff]
    %v3112 = vld [vmem:[#allocation3 + $0x6f0] sm:$0xff]
    %v3113 = vld [vmem:[#allocation3 + $0x6f8] sm:$0xff]
    %v3114 = vld [vmem:[#allocation3 + $0x700] sm:$0xff]
    %v3115 = vld [vmem:[#allocation3 + $0x708] sm:$0xff]
    %v3116 = vld [vmem:[#allocation3 + $0x710] sm:$0xff]
    %v3117 = vld [vmem:[#allocation3 + $0x718] sm:$0xff]
    %v3118 = vld [vmem:[#allocation3 + $0x720] sm:$0xff]
    %v3119 = vld [vmem:[#allocation3 + $0x728] sm:$0xff]
    %v3120 = vld [vmem:[#allocation3 + $0x730] sm:$0xff]
    %v3121 = vld [vmem:[#allocation3 + $0x738] sm:$0xff]
    %v3122 = vld [vmem:[#allocation3 + $0x740] sm:$0xff]
    %v3123 = vld [vmem:[#allocation3 + $0x748] sm:$0xff]
    %v3124 = vld [vmem:[#allocation3 + $0x750] sm:$0xff]
    %v3125 = vld [vmem:[#allocation3 + $0x758] sm:$0xff]
    %v3126 = vld [vmem:[#allocation3 + $0x760] sm:$0xff]
    %v3127 = vld [vmem:[#allocation3 + $0x768] sm:$0xff]
    %v3128 = vld [vmem:[#allocation3 + $0x770] sm:$0xff]
    %v3129 = vld [vmem:[#allocation3 + $0x778] sm:$0xff]
    %v3130 = vld [vmem:[#allocation3 + $0x780] sm:$0xff]
    %v3131 = vld [vmem:[#allocation3 + $0x788] sm:$0xff]
    %v3132 = vld [vmem:[#allocation3 + $0x790] sm:$0xff]
    %v3133 = vld [vmem:[#allocation3 + $0x798] sm:$0xff]
    %v3134 = vld [vmem:[#allocation3 + $0x7a0] sm:$0xff]
    %v3135 = vld [vmem:[#allocation3 + $0x7a8] sm:$0xff]
    %v3136 = vld [vmem:[#allocation3 + $0x7b0] sm:$0xff]
    %v3137 = vld [vmem:[#allocation3 + $0x7b8] sm:$0xff]
    %v3138 = vld [vmem:[#allocation3 + $0x7c0] sm:$0xff]
    %v3139 = vld [vmem:[#allocation3 + $0x7c8] sm:$0xff]
    %v3140 = vld [vmem:[#allocation3 + $0x7d0] sm:$0xff]
    %v3141 = vld [vmem:[#allocation3 + $0x7d8] sm:$0xff]
    %v3142 = vld [vmem:[#allocation3 + $0x7e0] sm:$0xff]
    %v3143 = vld [vmem:[#allocation3 + $0x7e8] sm:$0xff]
    %v3144 = vld [vmem:[#allocation3 + $0x7f0] sm:$0xff]
    %v3145 = vld [vmem:[#allocation3 + $0x7f8] sm:$0xff]
    %v3146 = vld [vmem:[%s12] sm:$0x3]
    %v3148 = vperm.slane %v3146, 0
    %v3149 = vperm.slane %v3146, 1
    %3152 = vmatpush.msra.mxu0 %v2920
    %3153 = vmatpush.msra.mxu0 %v2918
    %3154 = vmatpush.msra.mxu0 %v2916
    %3155 = vmatpush.msra.mxu0 %v2914
    %3156 = vmatpush.msra.mxu0 %v2912
    %3157 = vmatpush.msra.mxu0 %v2910
    %3158 = vmatpush.msra.mxu0 %v2908
    %3159 = vmatpush.msra.mxu0 %v2906
    %3160 = vmatpush.msra.mxu0 %v2904
    %3161 = vmatpush.msra.mxu0 %v2902
    %3162 = vmatpush.msra.mxu0 %v2900
    %3163 = vmatpush.msra.mxu0 %v2898
    %3164 = vmatpush.msra.mxu0 %v2896
    %3165 = vmatpush.msra.mxu0 %v2894
    %3166 = vmatpush.msra.mxu0 %v2892
    %3167 = vmatpush.msra.mxu0 %v2890
    %3168 = vmatmul.f32.gmra.mxu0 %v2878
    %v3169 = vpop.f32.mrf.mxu0
    %v3170 = vadd.f32 %v3148, %v3169
    %3171 = vdwg.mxu0
    %3172 = vmatpush.msra.mxu0 %v2952
    %3173 = vmatpush.msra.mxu0 %v2950
    %3174 = vmatpush.msra.mxu0 %v2948
    %3175 = vmatpush.msra.mxu0 %v2946
    %3176 = vmatpush.msra.mxu0 %v2944
    %3177 = vmatpush.msra.mxu0 %v2942
    %3178 = vmatpush.msra.mxu0 %v2940
    %3179 = vmatpush.msra.mxu0 %v2938
    %3180 = vmatpush.msra.mxu0 %v2936
    %3181 = vmatpush.msra.mxu0 %v2934
    %3182 = vmatpush.msra.mxu0 %v2932
    %3183 = vmatpush.msra.mxu0 %v2930
    %3184 = vmatpush.msra.mxu0 %v2928
    %3185 = vmatpush.msra.mxu0 %v2926
    %3186 = vmatpush.msra.mxu0 %v2924
    %3187 = vmatpush.msra.mxu0 %v2922
    %3188 = vmatmul.f32.gmra.mxu0 %v2879
    %v3189 = vpop.f32.mrf.mxu0
    %v3190 = vadd.f32 %v3170, %v3189
    %3191 = vdwg.mxu0
    %3192 = vmatpush.msra.mxu0 %v2984
    %3193 = vmatpush.msra.mxu0 %v2982
    %3194 = vmatpush.msra.mxu0 %v2980
    %3195 = vmatpush.msra.mxu0 %v2978
    %3196 = vmatpush.msra.mxu0 %v2976
    %3197 = vmatpush.msra.mxu0 %v2974
    %3198 = vmatpush.msra.mxu0 %v2972
    %3199 = vmatpush.msra.mxu0 %v2970
    %3200 = vmatpush.msra.mxu0 %v2968
    %3201 = vmatpush.msra.mxu0 %v2966
    %3202 = vmatpush.msra.mxu0 %v2964
    %3203 = vmatpush.msra.mxu0 %v2962
    %3204 = vmatpush.msra.mxu0 %v2960
    %3205 = vmatpush.msra.mxu0 %v2958
    %3206 = vmatpush.msra.mxu0 %v2956
    %3207 = vmatpush.msra.mxu0 %v2954
    %3208 = vmatmul.f32.gmra.mxu0 %v2880
    %v3209 = vpop.f32.mrf.mxu0
    %v3210 = vadd.f32 %v3190, %v3209
    %3211 = vdwg.mxu0
    %3212 = vmatpush.msra.mxu0 %v3016
    %3213 = vmatpush.msra.mxu0 %v3014
    %3214 = vmatpush.msra.mxu0 %v3012
    %3215 = vmatpush.msra.mxu0 %v3010
    %3216 = vmatpush.msra.mxu0 %v3008
    %3217 = vmatpush.msra.mxu0 %v3006
    %3218 = vmatpush.msra.mxu0 %v3004
    %3219 = vmatpush.msra.mxu0 %v3002
    %3220 = vmatpush.msra.mxu0 %v3000
    %3221 = vmatpush.msra.mxu0 %v2998
    %3222 = vmatpush.msra.mxu0 %v2996
    %3223 = vmatpush.msra.mxu0 %v2994
    %3224 = vmatpush.msra.mxu0 %v2992
    %3225 = vmatpush.msra.mxu0 %v2990
    %3226 = vmatpush.msra.mxu0 %v2988
    %3227 = vmatpush.msra.mxu0 %v2986
    %3228 = vmatmul.f32.gmra.mxu0 %v2881
    %v3229 = vpop.f32.mrf.mxu0
    %v3230 = vadd.f32 %v3210, %v3229
    %3231 = vdwg.mxu0
    %3232 = vmatpush.msra.mxu0 %v3048
    %3233 = vmatpush.msra.mxu0 %v3046
    %3234 = vmatpush.msra.mxu0 %v3044
    %3235 = vmatpush.msra.mxu0 %v3042
    %3236 = vmatpush.msra.mxu0 %v3040
    %3237 = vmatpush.msra.mxu0 %v3038
    %3238 = vmatpush.msra.mxu0 %v3036
    %3239 = vmatpush.msra.mxu0 %v3034
    %3240 = vmatpush.msra.mxu0 %v3032
    %3241 = vmatpush.msra.mxu0 %v3030
    %3242 = vmatpush.msra.mxu0 %v3028
    %3243 = vmatpush.msra.mxu0 %v3026
    %3244 = vmatpush.msra.mxu0 %v3024
    %3245 = vmatpush.msra.mxu0 %v3022
    %3246 = vmatpush.msra.mxu0 %v3020
    %3247 = vmatpush.msra.mxu0 %v3018
    %3248 = vmatmul.f32.gmra.mxu0 %v2882
    %v3249 = vpop.f32.mrf.mxu0
    %v3250 = vadd.f32 %v3230, %v3249
    %3251 = vdwg.mxu0
    %3252 = vmatpush.msra.mxu0 %v3080
    %3253 = vmatpush.msra.mxu0 %v3078
    %3254 = vmatpush.msra.mxu0 %v3076
    %3255 = vmatpush.msra.mxu0 %v3074
    %3256 = vmatpush.msra.mxu0 %v3072
    %3257 = vmatpush.msra.mxu0 %v3070
    %3258 = vmatpush.msra.mxu0 %v3068
    %3259 = vmatpush.msra.mxu0 %v3066
    %3260 = vmatpush.msra.mxu0 %v3064
    %3261 = vmatpush.msra.mxu0 %v3062
    %3262 = vmatpush.msra.mxu0 %v3060
    %3263 = vmatpush.msra.mxu0 %v3058
    %3264 = vmatpush.msra.mxu0 %v3056
    %3265 = vmatpush.msra.mxu0 %v3054
    %3266 = vmatpush.msra.mxu0 %v3052
    %3267 = vmatpush.msra.mxu0 %v3050
    %3268 = vmatmul.f32.gmra.mxu0 %v2883
    %v3269 = vpop.f32.mrf.mxu0
    %v3270 = vadd.f32 %v3250, %v3269
    %3271 = vdwg.mxu0
    %3272 = vmatpush.msra.mxu0 %v3112
    %3273 = vmatpush.msra.mxu0 %v3110
    %3274 = vmatpush.msra.mxu0 %v3108
    %3275 = vmatpush.msra.mxu0 %v3106
    %3276 = vmatpush.msra.mxu0 %v3104
    %3277 = vmatpush.msra.mxu0 %v3102
    %3278 = vmatpush.msra.mxu0 %v3100
    %3279 = vmatpush.msra.mxu0 %v3098
    %3280 = vmatpush.msra.mxu0 %v3096
    %3281 = vmatpush.msra.mxu0 %v3094
    %3282 = vmatpush.msra.mxu0 %v3092
    %3283 = vmatpush.msra.mxu0 %v3090
    %3284 = vmatpush.msra.mxu0 %v3088
    %3285 = vmatpush.msra.mxu0 %v3086
    %3286 = vmatpush.msra.mxu0 %v3084
    %3287 = vmatpush.msra.mxu0 %v3082
    %3288 = vmatmul.f32.gmra.mxu0 %v2884
    %v3289 = vpop.f32.mrf.mxu0
    %v3290 = vadd.f32 %v3270, %v3289
    %3291 = vdwg.mxu0
    %3292 = vmatpush.msra.mxu0 %v3144
    %3293 = vmatpush.msra.mxu0 %v3142
    %3294 = vmatpush.msra.mxu0 %v3140
    %3295 = vmatpush.msra.mxu0 %v3138
    %3296 = vmatpush.msra.mxu0 %v3136
    %3297 = vmatpush.msra.mxu0 %v3134
    %3298 = vmatpush.msra.mxu0 %v3132
    %3299 = vmatpush.msra.mxu0 %v3130
    %3300 = vmatpush.msra.mxu0 %v3128
    %3301 = vmatpush.msra.mxu0 %v3126
    %3302 = vmatpush.msra.mxu0 %v3124
    %3303 = vmatpush.msra.mxu0 %v3122
    %3304 = vmatpush.msra.mxu0 %v3120
    %3305 = vmatpush.msra.mxu0 %v3118
    %3306 = vmatpush.msra.mxu0 %v3116
    %3307 = vmatpush.msra.mxu0 %v3114
    %3308 = vmatmul.f32.gmra.mxu0 %v2885
    %v3309 = vpop.f32.mrf.mxu0
    %v3310 = vadd.f32 %v3290, %v3309
    %3311 = vdwg.mxu0
    %3312 = vmatpush.msra.mxu0 %v2921
    %3313 = vmatpush.msra.mxu0 %v2919
    %3314 = vmatpush.msra.mxu0 %v2917
    %3315 = vmatpush.msra.mxu0 %v2915
    %3316 = vmatpush.msra.mxu0 %v2913
    %3317 = vmatpush.msra.mxu0 %v2911
    %3318 = vmatpush.msra.mxu0 %v2909
    %3319 = vmatpush.msra.mxu0 %v2907
    %3320 = vmatpush.msra.mxu0 %v2905
    %3321 = vmatpush.msra.mxu0 %v2903
    %3322 = vmatpush.msra.mxu0 %v2901
    %3323 = vmatpush.msra.mxu0 %v2899
    %3324 = vmatpush.msra.mxu0 %v2897
    %3325 = vmatpush.msra.mxu0 %v2895
    %3326 = vmatpush.msra.mxu0 %v2893
    %3327 = vmatpush.msra.mxu0 %v2891
    %3328 = vmatmul.f32.gmra.mxu0 %v2878
    %v3329 = vpop.f32.mrf.mxu0
    %v3330 = vadd.f32 %v3149, %v3329
    %3331 = vdwg.mxu0
    %3332 = vmatpush.msra.mxu0 %v2953
    %3333 = vmatpush.msra.mxu0 %v2951
    %3334 = vmatpush.msra.mxu0 %v2949
    %3335 = vmatpush.msra.mxu0 %v2947
    %3336 = vmatpush.msra.mxu0 %v2945
    %3337 = vmatpush.msra.mxu0 %v2943
    %3338 = vmatpush.msra.mxu0 %v2941
    %3339 = vmatpush.msra.mxu0 %v2939
    %3340 = vmatpush.msra.mxu0 %v2937
    %3341 = vmatpush.msra.mxu0 %v2935
    %3342 = vmatpush.msra.mxu0 %v2933
    %3343 = vmatpush.msra.mxu0 %v2931
    %3344 = vmatpush.msra.mxu0 %v2929
    %3345 = vmatpush.msra.mxu0 %v2927
    %3346 = vmatpush.msra.mxu0 %v2925
    %3347 = vmatpush.msra.mxu0 %v2923
    %3348 = vmatmul.f32.gmra.mxu0 %v2879
    %v3349 = vpop.f32.mrf.mxu0
    %v3350 = vadd.f32 %v3330, %v3349
    %3351 = vdwg.mxu0
    %3352 = vmatpush.msra.mxu0 %v2985
    %3353 = vmatpush.msra.mxu0 %v2983
    %3354 = vmatpush.msra.mxu0 %v2981
    %3355 = vmatpush.msra.mxu0 %v2979
    %3356 = vmatpush.msra.mxu0 %v2977
    %3357 = vmatpush.msra.mxu0 %v2975
    %3358 = vmatpush.msra.mxu0 %v2973
    %3359 = vmatpush.msra.mxu0 %v2971
    %3360 = vmatpush.msra.mxu0 %v2969
    %3361 = vmatpush.msra.mxu0 %v2967
    %3362 = vmatpush.msra.mxu0 %v2965
    %3363 = vmatpush.msra.mxu0 %v2963
    %3364 = vmatpush.msra.mxu0 %v2961
    %3365 = vmatpush.msra.mxu0 %v2959
    %3366 = vmatpush.msra.mxu0 %v2957
    %3367 = vmatpush.msra.mxu0 %v2955
    %3368 = vmatmul.f32.gmra.mxu0 %v2880
    %v3369 = vpop.f32.mrf.mxu0
    %v3370 = vadd.f32 %v3350, %v3369
    %3371 = vdwg.mxu0
    %3372 = vmatpush.msra.mxu0 %v3017
    %3373 = vmatpush.msra.mxu0 %v3015
    %3374 = vmatpush.msra.mxu0 %v3013
    %3375 = vmatpush.msra.mxu0 %v3011
    %3376 = vmatpush.msra.mxu0 %v3009
    %3377 = vmatpush.msra.mxu0 %v3007
    %3378 = vmatpush.msra.mxu0 %v3005
    %3379 = vmatpush.msra.mxu0 %v3003
    %3380 = vmatpush.msra.mxu0 %v3001
    %3381 = vmatpush.msra.mxu0 %v2999
    %3382 = vmatpush.msra.mxu0 %v2997
    %3383 = vmatpush.msra.mxu0 %v2995
    %3384 = vmatpush.msra.mxu0 %v2993
    %3385 = vmatpush.msra.mxu0 %v2991
    %3386 = vmatpush.msra.mxu0 %v2989
    %3387 = vmatpush.msra.mxu0 %v2987
    %3388 = vmatmul.f32.gmra.mxu0 %v2881
    %v3389 = vpop.f32.mrf.mxu0
    %v3390 = vadd.f32 %v3370, %v3389
    %3391 = vdwg.mxu0
    %3392 = vmatpush.msra.mxu0 %v3049
    %3393 = vmatpush.msra.mxu0 %v3047
    %3394 = vmatpush.msra.mxu0 %v3045
    %3395 = vmatpush.msra.mxu0 %v3043
    %3396 = vmatpush.msra.mxu0 %v3041
    %3397 = vmatpush.msra.mxu0 %v3039
    %3398 = vmatpush.msra.mxu0 %v3037
    %3399 = vmatpush.msra.mxu0 %v3035
    %3400 = vmatpush.msra.mxu0 %v3033
    %3401 = vmatpush.msra.mxu0 %v3031
    %3402 = vmatpush.msra.mxu0 %v3029
    %3403 = vmatpush.msra.mxu0 %v3027
    %3404 = vmatpush.msra.mxu0 %v3025
    %3405 = vmatpush.msra.mxu0 %v3023
    %3406 = vmatpush.msra.mxu0 %v3021
    %3407 = vmatpush.msra.mxu0 %v3019
    %3408 = vmatmul.f32.gmra.mxu0 %v2882
    %v3409 = vpop.f32.mrf.mxu0
    %v3410 = vadd.f32 %v3390, %v3409
    %3411 = vdwg.mxu0
    %3412 = vmatpush.msra.mxu0 %v3081
    %3413 = vmatpush.msra.mxu0 %v3079
    %3414 = vmatpush.msra.mxu0 %v3077
    %3415 = vmatpush.msra.mxu0 %v3075
    %3416 = vmatpush.msra.mxu0 %v3073
    %3417 = vmatpush.msra.mxu0 %v3071
    %3418 = vmatpush.msra.mxu0 %v3069
    %3419 = vmatpush.msra.mxu0 %v3067
    %3420 = vmatpush.msra.mxu0 %v3065
    %3421 = vmatpush.msra.mxu0 %v3063
    %3422 = vmatpush.msra.mxu0 %v3061
    %3423 = vmatpush.msra.mxu0 %v3059
    %3424 = vmatpush.msra.mxu0 %v3057
    %3425 = vmatpush.msra.mxu0 %v3055
    %3426 = vmatpush.msra.mxu0 %v3053
    %3427 = vmatpush.msra.mxu0 %v3051
    %3428 = vmatmul.f32.gmra.mxu0 %v2883
    %v3429 = vpop.f32.mrf.mxu0
    %v3430 = vadd.f32 %v3410, %v3429
    %3431 = vdwg.mxu0
    %3432 = vmatpush.msra.mxu0 %v3113
    %3433 = vmatpush.msra.mxu0 %v3111
    %3434 = vmatpush.msra.mxu0 %v3109
    %3435 = vmatpush.msra.mxu0 %v3107
    %3436 = vmatpush.msra.mxu0 %v3105
    %3437 = vmatpush.msra.mxu0 %v3103
    %3438 = vmatpush.msra.mxu0 %v3101
    %3439 = vmatpush.msra.mxu0 %v3099
    %3440 = vmatpush.msra.mxu0 %v3097
    %3441 = vmatpush.msra.mxu0 %v3095
    %3442 = vmatpush.msra.mxu0 %v3093
    %3443 = vmatpush.msra.mxu0 %v3091
    %3444 = vmatpush.msra.mxu0 %v3089
    %3445 = vmatpush.msra.mxu0 %v3087
    %3446 = vmatpush.msra.mxu0 %v3085
    %3447 = vmatpush.msra.mxu0 %v3083
    %3448 = vmatmul.f32.gmra.mxu0 %v2884
    %v3449 = vpop.f32.mrf.mxu0
    %v3450 = vadd.f32 %v3430, %v3449
    %3451 = vdwg.mxu0
    %3452 = vmatpush.msra.mxu0 %v3145
    %3453 = vmatpush.msra.mxu0 %v3143
    %3454 = vmatpush.msra.mxu0 %v3141
    %3455 = vmatpush.msra.mxu0 %v3139
    %3456 = vmatpush.msra.mxu0 %v3137
    %3457 = vmatpush.msra.mxu0 %v3135
    %3458 = vmatpush.msra.mxu0 %v3133
    %3459 = vmatpush.msra.mxu0 %v3131
    %3460 = vmatpush.msra.mxu0 %v3129
    %3461 = vmatpush.msra.mxu0 %v3127
    %3462 = vmatpush.msra.mxu0 %v3125
    %3463 = vmatpush.msra.mxu0 %v3123
    %3464 = vmatpush.msra.mxu0 %v3121
    %3465 = vmatpush.msra.mxu0 %v3119
    %3466 = vmatpush.msra.mxu0 %v3117
    %3467 = vmatpush.msra.mxu0 %v3115
    %3468 = vmatmul.f32.gmra.mxu0 %v2885
    %v3469 = vpop.f32.mrf.mxu0
    %v3470 = vadd.f32 %v3450, %v3469
    %3471 = vdwg.mxu0
    %v3472 = vmax.f32 %v3310, 0.0
    %v3473 = vmax.f32 %v3470, 0.0
    %v3474 = vld [vmem:[%s13] sm:$0x3]
    %v3476 = vperm.slane %v3474, 0
    %v3477 = vperm.slane %v3474, 1
    %v3480 = vmul.f32 %v3472, %v3476
    %v3481 = vmul.f32 %v3473, %v3477
    %v3482 = vsel %vm1543, %v3480, 0.0
    %v3483 = vsel %vm1543, %v3481, 0.0
    %v3484 = vadd.f32 %v3482, %v3483
    %3485 = vadd.xlane.f32.xlu0 %v3484
    %v3486 = vpop.xlane.xlu0 %3485
    %v3487 = vld [vmem:[#allocation5] sm:$0x1]
    %v3489 = vperm.slane %v3487, 0
    %v3491 = vadd.f32 %v3486, %v3489
    %vm3492 = vcmask 1024
    %3493 = vst.msk [vmem:[%s15] sm:$0x3] %vm3492, %v3491
    // Predicated region
    $region78: #{bilstm_forward.1} parent=1 // pred_check
      _
    $region79: #{bilstm_forward.1} parent=1 // pred_check_branch
      %3495 = sbr.rel (0) target = $region81
    $region80: #{bilstm_forward.1} parent=1 // pred_region
      _
    $region81: #{bilstm_forward.1} parent=1 // pred_fallthru
      _
    // Predicated region
    $region82: #{bilstm_forward.1} parent=1 // pred_check
      _
    $region83: #{bilstm_forward.1} parent=1 // pred_check_branch
      %3497 = sbr.rel (0) target = $region85
    $region84: #{bilstm_forward.1} parent=1 // pred_region
      _
    $region85: #{bilstm_forward.1} parent=1 // pred_fallthru
      _
    %3498 = vsyncpa [#allocation7], 1
    %3499 = vsyncpa [#allocation9], 1
    %3500 = vsyncpa [#allocation12], 1
  %3501 = vsyncmov [#allocation4]
  %s3502 = vpop.sfrf %3501
  %p3503 = scmp.eq.s32.totalorder %s3502, 0
  %p3504 = pneg %p3503
  %3506 = shalt.err (%p3504)
  %s3507 = scalar_lea.sflag [#allocation4], 1
  %3508 = vsyncmov %s3507
  %s3509 = vpop.sfrf %3508
  %p3510 = scmp.eq.s32.totalorder %s3509, 0
  %p3511 = pneg %p3510
  %3513 = shalt.err (%p3511)

</llo_original>
